<compile_context>
chip_gen: v7x
topology: tpu7x:2x2x1
jax: 0.10.0
libtpu: 0.0.40
codegen_flags: <defaults>
</compile_context>

<pallas_src>
import functools

import jax
import jax.numpy as jnp
from jax.experimental import pallas as pl
from jax.experimental.pallas import tpu as pltpu


def _round_up(x, m):
    return (x + m - 1) // m * m


def _pick_tile_n(n, requested=128):
    """Batch tile: multiple of 16 (bf16 sublane packing); big enough to amortize the
    ~0.35us fixed per-grid-step cost; small enough that the grid keeps >= 2 steps when
    possible so dimension_semantics=("parallel",) can split across v7x's two TCs."""
    n16 = _round_up(max(n, 16), 16)
    t = min(_round_up(requested, 16), n16)
    if n16 // t < 2 and t > 16:
        t = min(t, max(16, _round_up(n16 // 2, 16)))
    return t


def _pick_vmem_limit_bytes():
    """~70% of physical VMEM: headroom for double-buffered DMA slots + compiler scratch.
    (v5e/v6e: 128 MiB physical -> ~90 MiB; v7x: 64 MiB physical -> ~45 MiB.)"""
    cap = None
    try:
        cap = getattr(pltpu.get_tpu_info(), "vmem_capacity_bytes", None)
    except Exception:
        cap = None
    if not cap:
        cap = 128 * 1024 * 1024
    return int(cap * 0.7)


def _var_discrete_action_kernel(stim_ref, args_ref, wk_ref, wv_ref,
                                bk_ref, bv_ref, lens_ref, gum_ref,
                                logits_ref, idx_ref, *, l_chunk):
    tile_n, l_pad, h = args_ref.shape

    # --- key branch: relu(stim @ Wk + bk), tiny (tile_n, h), MXU + f32 epilogue ---
    k = jnp.maximum(
        jnp.dot(stim_ref[...], wk_ref[...], preferred_element_type=jnp.float32)
        + bk_ref[...], 0.0)
    k3 = k.astype(jnp.bfloat16).reshape(tile_n, 1, h)

    # --- value branch + contraction, chunked over L to bound VMEM intermediates ---
    num_chunks = l_pad // l_chunk

    def chunk_body(c, carry):
        off = pl.multiple_of(c * l_chunk, l_chunk)
        a = args_ref[:, pl.ds(off, l_chunk), :]                      # (tile_n, l_chunk, h) bf16
        v = jnp.maximum(
            jnp.dot(a.reshape(tile_n * l_chunk, h), wv_ref[...],
                    preferred_element_type=jnp.float32)
            + bv_ref[...], 0.0)                                      # (tile_n*l_chunk, h) f32
        v = v.astype(jnp.bfloat16).reshape(tile_n, l_chunk, h)
        # Batched contraction on the MXU (flash-attention einsum pattern, q == 1):
        #   s[n, 0, c] = sum_h k[n, h] * v[n, c, h]
        s = jnp.einsum('nqh,nch->nqc', k3, v,
                       preferred_element_type=jnp.float32)           # (tile_n, 1, l_chunk)
        logits_ref[:, pl.ds(off, l_chunk)] = s.reshape(tile_n, l_chunk)
        return carry

    jax.lax.fori_loop(0, num_chunks, chunk_body, 0, unroll=(num_chunks <= 4))

    # --- variable-length mask + Gumbel-max categorical sample (f32 epilogue) ---
    scores = logits_ref[...]                                         # raw scores, already in VMEM
    lane = jax.lax.broadcasted_iota(jnp.int32, (tile_n, l_pad), 1)
    mask = lane < lens_ref[...]                                      # lens: (tile_n, 1) int32
    z = jnp.where(mask, scores, jnp.float32(-1e30)) + gum_ref[...]
    zmax = jnp.max(z, axis=-1, keepdims=True)
    idx = jnp.min(jnp.where(z == zmax, lane, jnp.int32(l_pad)),
                  axis=-1, keepdims=True)                            # first argmax
    idx_ref[...] = jnp.broadcast_to(idx, idx_ref.shape)              # lane-dense idx slab


def init_params(h, key):
    """Deterministic synthetic init matching nn.Linear(h, h) shapes (f32 master copy)."""
    k1, k2, k3, k4 = jax.random.split(key, 4)
    bound = 1.0 / (h ** 0.5)
    return {
        "wk": jax.random.uniform(k1, (h, h), jnp.float32, -bound, bound),
        "bk": jax.random.uniform(k2, (h,), jnp.float32, -bound, bound),
        "wv": jax.random.uniform(k3, (h, h), jnp.float32, -bound, bound),
        "bv": jax.random.uniform(k4, (h,), jnp.float32, -bound, bound),
    }


def prepare_params(params):
    """One-time (outside the hot path): cast weights to bf16 for the MXU, biases to f32
    row vectors.  No H padding: the last block dim equals the full array dim."""
    h = params["wk"].shape[0]
    return {
        "wk": params["wk"].astype(jnp.bfloat16),
        "wv": params["wv"].astype(jnp.bfloat16),
        "bk": params["bk"].reshape(1, h).astype(jnp.float32),
        "bv": params["bv"].reshape(1, h).astype(jnp.float32),
    }


def prepare_inputs(stim, args, lens, tile_n):
    """One-time (outside the hot path, like the weights): cast to bf16, pad N to the batch
    tile and L to a lane-dense multiple of 128.  Keeping this out of the per-call path
    avoids re-reading/re-writing the dominant args stream in HBM on every call."""
    N, L, H = args.shape
    l_pad = _round_up(max(L, 128), 128)
    n_pad = _round_up(N, tile_n)
    stim_p = jnp.zeros((n_pad, H), jnp.bfloat16).at[:N].set(stim.astype(jnp.bfloat16))
    args_p = jnp.zeros((n_pad, l_pad, H), jnp.bfloat16).at[:N, :L].set(
        args.astype(jnp.bfloat16))
    lens_p = jnp.zeros((n_pad, 1), jnp.int32).at[:N, 0].set(jnp.asarray(lens, jnp.int32))
    return stim_p, args_p, lens_p


def variable_discrete_action(stim_p, args_p, lens_p, params_p, key, *,
                             n_valid, l_valid, tile_n, l_chunk=128):
    """Hot path.  Inputs must come from prepare_inputs() / prepare_params().

    Returns (scores (n_valid, l_valid) f32, sampled index (n_valid,) int32).
    l_chunk bounds the per-step VMEM intermediates (value slab); 128 fits both the
    128 MiB (v5e/v6e) and 64 MiB (v7x) VMEM budgets at tile_n=128.
    """
    n_pad, l_pad, h = args_p.shape
    assert n_pad % tile_n == 0
    l_chunk = min(l_chunk, l_pad)
    assert l_pad % l_chunk == 0

    gumbel = jax.random.gumbel(key, (n_pad, l_pad), jnp.float32)

    resident = lambda i: (0, 0)
    kernel = functools.partial(_var_discrete_action_kernel, l_chunk=l_chunk)

    logits, idx = pl.pallas_call(
        kernel,
        out_shape=(jax.ShapeDtypeStruct((n_pad, l_pad), jnp.float32),
                   jax.ShapeDtypeStruct((n_pad, 128), jnp.int32)),
        grid=(n_pad // tile_n,),
        in_specs=[
            pl.BlockSpec((tile_n, h), lambda i: (i, 0)),             # stim
            pl.BlockSpec((tile_n, l_pad, h), lambda i: (i, 0, 0)),   # args (dominant stream)
            pl.BlockSpec((h, h), resident),                          # wk (resident)
            pl.BlockSpec((h, h), resident),                          # wv (resident)
            pl.BlockSpec((1, h), resident),                          # bk
            pl.BlockSpec((1, h), resident),                          # bv
            pl.BlockSpec((tile_n, 1), lambda i: (i, 0)),             # lens
            pl.BlockSpec((tile_n, l_pad), lambda i: (i, 0)),         # gumbel noise
        ],
        out_specs=(pl.BlockSpec((tile_n, l_pad), lambda i: (i, 0)),  # raw scores (lane-dense)
                   pl.BlockSpec((tile_n, 128), lambda i: (i, 0))),   # idx slab (lane-dense)
        compiler_params=pltpu.CompilerParams(
            dimension_semantics=("parallel",),
            vmem_limit_bytes=_pick_vmem_limit_bytes()),
    )(stim_p, args_p, params_p["wk"], params_p["wv"],
      params_p["bk"], params_p["bv"], lens_p, gumbel)

    return logits[:n_valid, :l_valid], idx[:n_valid, 0]


if __name__ == "__main__":
    N, L, H = 2, 8, 32      # batch, max candidate actions, hidden

    key = jax.random.PRNGKey(0)
    kp, ks, ka, kg = jax.random.split(key, 4)
    params = init_params(H, kp)
    params_p = prepare_params(params)

    stim = jax.random.normal(ks, (N, H), jnp.float32)     # per-agent stimulus embedding
    args = jax.random.normal(ka, (N, L, H), jnp.float32)  # candidate-action embeddings
    lens = [5, 8]                                         # valid candidates per row

    tile_n = _pick_tile_n(N)
    stim_p, args_p, lens_p = prepare_inputs(stim, args, lens, tile_n)

    logits, idx = variable_discrete_action(
        stim_p, args_p, lens_p, params_p, kg,
        n_valid=N, l_valid=L, tile_n=tile_n)
    jax.block_until_ready((logits, idx))

    assert logits.shape == (N, L) and idx.shape == (N,)
    for n in range(N):
        assert 0 <= int(idx[n]) < lens[n]

    # Loose numerical check against a pure-JAX reference on the same bf16 inputs/weights.
    k_ref = jnp.maximum(stim_p[:N].astype(jnp.float32)
                        @ params_p["wk"].astype(jnp.float32) + params_p["bk"][0], 0.0)
    v_ref = jnp.maximum(args_p[:N, :L].astype(jnp.float32)
                        @ params_p["wv"].astype(jnp.float32) + params_p["bv"][0], 0.0)
    ref = jnp.einsum('nlh,nh->nl', v_ref, k_ref)
    assert jnp.allclose(logits, ref, rtol=1e-1, atol=1e-1)

    print("KERNEL_OK")
</pallas_src>

<mosaic_0001>
module attributes {stable_mosaic.version = 11 : i64} {
  func.func @_var_discrete_action_kernel(%arg0: i32, %arg1: memref<16x32xbf16, #tpu.memory_space<vmem>>, %arg2: memref<16x128x32xbf16, #tpu.memory_space<vmem>>, %arg3: memref<32x32xbf16, #tpu.memory_space<vmem>>, %arg4: memref<32x32xbf16, #tpu.memory_space<vmem>>, %arg5: memref<1x32xf32, #tpu.memory_space<vmem>>, %arg6: memref<1x32xf32, #tpu.memory_space<vmem>>, %arg7: memref<16x1xi32, #tpu.memory_space<vmem>>, %arg8: memref<16x128xf32, #tpu.memory_space<vmem>>, %arg9: memref<16x128xf32, #tpu.memory_space<vmem>>, %arg10: memref<16x128xi32, #tpu.memory_space<vmem>>) attributes {dimension_semantics = [#tpu.dimension_semantics<parallel>], iteration_bounds = array<i64: 1>, scalar_prefetch = 0 : i64, scratch_operands = 0 : i64, tpu.core_type = #tpu.core_type<tc>, window_params = [{transform_indices = @transform_0, window_bounds = array<i64: 16, 32>}, {transform_indices = @transform_1, window_bounds = array<i64: 16, 128, 32>}, {pipeline_mode = #tpu.pipeline_mode<synchronous>, transform_indices = @transform_2, window_bounds = array<i64: 32, 32>}, {pipeline_mode = #tpu.pipeline_mode<synchronous>, transform_indices = @transform_3, window_bounds = array<i64: 32, 32>}, {pipeline_mode = #tpu.pipeline_mode<synchronous>, transform_indices = @transform_4, window_bounds = array<i64: 1, 32>}, {pipeline_mode = #tpu.pipeline_mode<synchronous>, transform_indices = @transform_5, window_bounds = array<i64: 1, 32>}, {transform_indices = @transform_6, window_bounds = array<i64: 16, 1>}, {transform_indices = @transform_7, window_bounds = array<i64: 16, 128>}, {transform_indices = @transform_8, window_bounds = array<i64: 16, 128>}, {transform_indices = @transform_9, window_bounds = array<i64: 16, 128>}]} {
    %c0 = arith.constant 0 : index
    %c0_0 = arith.constant 0 : index
    %0 = vector.load %arg1[%c0, %c0_0] : memref<16x32xbf16, #tpu.memory_space<vmem>>, vector<16x32xbf16>
    %c0_1 = arith.constant 0 : index
    %c0_2 = arith.constant 0 : index
    %1 = vector.load %arg3[%c0_1, %c0_2] : memref<32x32xbf16, #tpu.memory_space<vmem>>, vector<32x32xbf16>
    %cst = arith.constant dense<0.000000e+00> : vector<16x32xf32>
    %2 = tpu.matmul %0, %1, %cst {dimension_numbers = #tpu.dot_dimension_numbers<[1], [0], [0], [1], [0, 0, 1, 1], [], []>} : vector<16x32xbf16>, vector<32x32xbf16>, vector<16x32xf32> -> vector<16x32xf32>
    %c0_3 = arith.constant 0 : index
    %c0_4 = arith.constant 0 : index
    %3 = vector.load %arg5[%c0_3, %c0_4] : memref<1x32xf32, #tpu.memory_space<vmem>>, vector<1x32xf32>
    %4 = vector.broadcast %3 : vector<1x32xf32> to vector<16x32xf32>
    %5 = arith.addf %2, %4 : vector<16x32xf32>
    %cst_5 = arith.constant 0.000000e+00 : f32
    %6 = vector.broadcast %cst_5 : f32 to vector<16x32xf32>
    %7 = arith.maximumf %5, %6 : vector<16x32xf32>
    %8 = arith.truncf %7 : vector<16x32xf32> to vector<16x32xbf16>
    %9 = vector.shape_cast %8 : vector<16x32xbf16> to vector<16x1x32xbf16>
    %c0_i32 = arith.constant 0 : i32
    %c128_i32 = arith.constant 128 : i32
    %10 = arith.muli %c0_i32, %c128_i32 : i32
    %11 = tpu.assume_multiple %10, 128 : i32
    %c0_6 = arith.constant 0 : index
    %12 = arith.index_cast %11 : i32 to index
    %c0_7 = arith.constant 0 : index
    %13 = vector.load %arg2[%c0_6, %12, %c0_7] : memref<16x128x32xbf16, #tpu.memory_space<vmem>>, vector<16x128x32xbf16>
    %14 = vector.shape_cast %13 : vector<16x128x32xbf16> to vector<2048x32xbf16>
    %c0_8 = arith.constant 0 : index
    %c0_9 = arith.constant 0 : index
    %15 = vector.load %arg4[%c0_8, %c0_9] : memref<32x32xbf16, #tpu.memory_space<vmem>>, vector<32x32xbf16>
    %cst_10 = arith.constant dense<0.000000e+00> : vector<2048x32xf32>
    %16 = tpu.matmul %14, %15, %cst_10 {dimension_numbers = #tpu.dot_dimension_numbers<[1], [0], [0], [1], [0, 0, 1, 1], [], []>} : vector<2048x32xbf16>, vector<32x32xbf16>, vector<2048x32xf32> -> vector<2048x32xf32>
    %c0_11 = arith.constant 0 : index
    %c0_12 = arith.constant 0 : index
    %17 = vector.load %arg6[%c0_11, %c0_12] : memref<1x32xf32, #tpu.memory_space<vmem>>, vector<1x32xf32>
    %18 = vector.broadcast %17 : vector<1x32xf32> to vector<2048x32xf32>
    %19 = arith.addf %16, %18 : vector<2048x32xf32>
    %cst_13 = arith.constant 0.000000e+00 : f32
    %20 = vector.broadcast %cst_13 : f32 to vector<2048x32xf32>
    %21 = arith.maximumf %19, %20 : vector<2048x32xf32>
    %22 = arith.truncf %21 : vector<2048x32xf32> to vector<2048x32xbf16>
    %23 = vector.shape_cast %22 : vector<2048x32xbf16> to vector<16x128x32xbf16>
    "tpu.trace_start"() <{level = 10 : i32, message = "nqh,nch->nqc"}> : () -> ()
    %cst_14 = arith.constant dense<0.000000e+00> : vector<16x1x128xf32>
    %24 = tpu.matmul %9, %23, %cst_14 {dimension_numbers = #tpu.dot_dimension_numbers<[2], [2], [1], [1], [0, 0, 0, 1, 1, 1], [0], [0]>} : vector<16x1x32xbf16>, vector<16x128x32xbf16>, vector<16x1x128xf32> -> vector<16x1x128xf32>
    "tpu.trace_stop"() : () -> ()
    %25 = vector.shape_cast %24 : vector<16x1x128xf32> to vector<16x128xf32>
    %c0_15 = arith.constant 0 : index
    %26 = arith.index_cast %11 : i32 to index
    %27 = vector.load %arg9[%c0_15, %26] : memref<16x128xf32, #tpu.memory_space<vmem>>, vector<16x128xf32>
    tpu.vector_store %arg9[%c0_15, %26], %25 {strides = array<i32>} : memref<16x128xf32, #tpu.memory_space<vmem>>, vector<16x128xf32>,
    %c1_i32 = arith.constant 1 : i32
    %c0_16 = arith.constant 0 : index
    %c0_17 = arith.constant 0 : index
    %28 = vector.load %arg9[%c0_16, %c0_17] : memref<16x128xf32, #tpu.memory_space<vmem>>, vector<16x128xf32>
    %29 = tpu.iota {dimensions = array<i32: 1>} : vector<16x128xi32>
    %c0_18 = arith.constant 0 : index
    %c0_19 = arith.constant 0 : index
    %30 = vector.load %arg7[%c0_18, %c0_19] : memref<16x1xi32, #tpu.memory_space<vmem>>, vector<16x1xi32>
    %31 = vector.broadcast %30 : vector<16x1xi32> to vector<16x128xi32>
    %32 = arith.cmpi slt, %29, %31 : vector<16x128xi32>
    %cst_20 = arith.constant -1.000000e+30 : f32
    %33 = vector.broadcast %cst_20 : f32 to vector<16x128xf32>
    %34 = arith.select %32, %28, %33 : vector<16x128xi1>, vector<16x128xf32>
    %c0_21 = arith.constant 0 : index
    %c0_22 = arith.constant 0 : index
    %35 = vector.load %arg8[%c0_21, %c0_22] : memref<16x128xf32, #tpu.memory_space<vmem>>, vector<16x128xf32>
    %36 = arith.addf %34, %35 : vector<16x128xf32>
    %cst_23 = arith.constant dense<0xFF800000> : vector<16xf32>
    %37 = vector.multi_reduction <maximumf>, %36, %cst_23 [1] : vector<16x128xf32> to vector<16xf32>
    %38 = vector.shape_cast %37 : vector<16xf32> to vector<16x1xf32>
    %39 = vector.broadcast %38 : vector<16x1xf32> to vector<16x128xf32>
    %40 = arith.cmpf oeq, %36, %39 : vector<16x128xf32>
    %c128_i32_24 = arith.constant 128 : i32
    %41 = vector.broadcast %c128_i32_24 : i32 to vector<16x128xi32>
    %42 = arith.select %40, %29, %41 : vector<16x128xi1>, vector<16x128xi32>
    %cst_25 = arith.constant dense<2147483647> : vector<16xi32>
    %43 = vector.multi_reduction <minsi>, %42, %cst_25 [1] : vector<16x128xi32> to vector<16xi32>
    %44 = vector.shape_cast %43 : vector<16xi32> to vector<16x1xi32>
    %45 = vector.shape_cast %44 : vector<16x1xi32> to vector<16x1xi32>
    %46 = vector.broadcast %45 : vector<16x1xi32> to vector<16x128xi32>
    %c0_26 = arith.constant 0 : index
    %c0_27 = arith.constant 0 : index
    %47 = vector.load %arg10[%c0_26, %c0_27] : memref<16x128xi32, #tpu.memory_space<vmem>>, vector<16x128xi32>
    tpu.vector_store %arg10[%c0_26, %c0_27], %46 {strides = array<i32>} : memref<16x128xi32, #tpu.memory_space<vmem>>, vector<16x128xi32>,
    return
  }
  func.func @transform_0(%arg0: i32) -> (i32, i32) {
    %c0_i32 = arith.constant 0 : i32
    %c0_i32_0 = arith.constant 0 : i32
    return %arg0, %c0_i32 : i32, i32
  }
  func.func @transform_1(%arg0: i32) -> (i32, i32, i32) {
    %c0_i32 = arith.constant 0 : i32
    %c0_i32_0 = arith.constant 0 : i32
    %c0_i32_1 = arith.constant 0 : i32
    return %arg0, %c0_i32, %c0_i32_0 : i32, i32, i32
  }
  func.func @transform_2(%arg0: i32) -> (i32, i32) {
    %c0_i32 = arith.constant 0 : i32
    %c0_i32_0 = arith.constant 0 : i32
    %c0_i32_1 = arith.constant 0 : i32
    return %c0_i32, %c0_i32_0 : i32, i32
  }
  func.func @transform_3(%arg0: i32) -> (i32, i32) {
    %c0_i32 = arith.constant 0 : i32
    %c0_i32_0 = arith.constant 0 : i32
    %c0_i32_1 = arith.constant 0 : i32
    return %c0_i32, %c0_i32_0 : i32, i32
  }
  func.func @transform_4(%arg0: i32) -> (i32, i32) {
    %c0_i32 = arith.constant 0 : i32
    %c0_i32_0 = arith.constant 0 : i32
    %c0_i32_1 = arith.constant 0 : i32
    return %c0_i32, %c0_i32_0 : i32, i32
  }
  func.func @transform_5(%arg0: i32) -> (i32, i32) {
    %c0_i32 = arith.constant 0 : i32
    %c0_i32_0 = arith.constant 0 : i32
    %c0_i32_1 = arith.constant 0 : i32
    return %c0_i32, %c0_i32_0 : i32, i32
  }
  func.func @transform_6(%arg0: i32) -> (i32, i32) {
    %c0_i32 = arith.constant 0 : i32
    %c0_i32_0 = arith.constant 0 : i32
    return %arg0, %c0_i32 : i32, i32
  }
  func.func @transform_7(%arg0: i32) -> (i32, i32) {
    %c0_i32 = arith.constant 0 : i32
    %c0_i32_0 = arith.constant 0 : i32
    return %arg0, %c0_i32 : i32, i32
  }
  func.func @transform_8(%arg0: i32) -> (i32, i32) {
    %c0_i32 = arith.constant 0 : i32
    %c0_i32_0 = arith.constant 0 : i32
    return %arg0, %c0_i32 : i32, i32
  }
  func.func @transform_9(%arg0: i32) -> (i32, i32) {
    %c0_i32 = arith.constant 0 : i32
    %c0_i32_0 = arith.constant 0 : i32
    return %arg0, %c0_i32 : i32, i32
  }
}

</mosaic_0001>

<llo_original>
// kernel: tpu_custom_call.1
$region0: #{tpu_custom_call.1}
  #allocation0 [shape = 'u32[]', space=smem, size = 0x4, offset = 0x4, fixed_abs, tag = 'smem constant byte address 0x4 - core index']
  #allocation1 [shape = 'u32[144,128]{1,0:T(1,128)}', space=vmem, size = 0x12000, scoped, tag = 'internal scratch']
  %s0 = inlined_call_operand.hbm [shape: bf16[16,32], index: 0, kind: input, shape index: {}]
  %s1 = inlined_call_operand.hbm [shape: bf16[16,128,32], index: 1, kind: input, shape index: {}]
  %s2 = inlined_call_operand.hbm [shape: bf16[32,32], index: 2, kind: input, shape index: {}]
  %s3 = inlined_call_operand.hbm [shape: bf16[32,32], index: 3, kind: input, shape index: {}]
  %s4 = inlined_call_operand.hbm [shape: f32[1,32], index: 4, kind: input, shape index: {}]
  %s5 = inlined_call_operand.hbm [shape: f32[1,32], index: 5, kind: input, shape index: {}]
  %s6 = inlined_call_operand.hbm [shape: s32[16,1], index: 6, kind: input, shape index: {}]
  %s7 = inlined_call_operand.hbm [shape: f32[16,128], index: 7, kind: input, shape index: {}]
  %s8 = inlined_call_operand.hbm [shape: f32[16,128], index: 8, kind: output, shape index: {0}]
  %s9 = inlined_call_operand.hbm [shape: s32[16,128], index: 9, kind: output, shape index: {1}]
  %10 = xla_tuple %s8, %s9
  %s11 = sld [smem:[#allocation0]]
  $region82: #{tpu_custom_call.1} parent=0
    _
  %s13 = ssub.s32 1, %s11
  %s14 = scalar_select 0, %s13, %s11
  $region1: #{tpu_custom_call.1} parent=0
    #allocation2 [shape = 'u8[4096]{0}', space=vmem, size = 0x1000, scoped, tag = 'input window, operand 0, single buffered']
    #allocation3 [shape = 's32[1]{0}', space=sflag, size = 0x4, scoped, tag = 'scoped memory for tpu_custom_call.1']
    #allocation4 [shape = 's32[1]{0}', space=sflag, size = 0x4, scoped, tag = 'scoped memory for tpu_custom_call.1']
    #allocation5 [shape = 'u8[524288]{0}', space=vmem, size = 0x80000, scoped, tag = 'input window, operand 1, single buffered']
    #allocation6 [shape = 's32[1]{0}', space=sflag, size = 0x4, scoped, tag = 'scoped memory for tpu_custom_call.1']
    #allocation7 [shape = 'u8[8192]{0}', space=vmem, size = 0x2000, scoped, tag = 'input window, operand 2, single buffered']
    #allocation8 [shape = 'u8[8192]{0}', space=vmem, size = 0x2000, scoped, tag = 'input window, operand 3, single buffered']
    #allocation9 [shape = 's32[1]{0}', space=sflag, size = 0x4, scoped, tag = 'scoped memory for tpu_custom_call.1']
    #allocation10 [shape = 'u8[512]{0}', space=vmem, size = 0x400, scoped, tag = 'input window, operand 4, single buffered']
    #allocation11 [shape = 'u8[512]{0}', space=vmem, size = 0x400, scoped, tag = 'input window, operand 5, single buffered']
    #allocation12 [shape = 's32[1]{0}', space=sflag, size = 0x4, scoped, tag = 'scoped memory for tpu_custom_call.1']
    #allocation13 [shape = 'u8[8192]{0}', space=vmem, size = 0x2000, scoped, tag = 'input window, operand 6, single buffered']
    #allocation14 [shape = 'u8[8192]{0}', space=vmem, size = 0x2000, scoped, tag = 'input window, operand 7, single buffered']
    #allocation15 [shape = 's32[1]{0}', space=sflag, size = 0x4, scoped, tag = 'scoped memory for tpu_custom_call.1']
    #allocation16 [shape = 'u8[8192]{0}', space=vmem, size = 0x2000, scoped, tag = 'output window, operand 0, single buffered']
    #allocation17 [shape = 'u8[8192]{0}', space=vmem, size = 0x2000, scoped, tag = 'output window, operand 1, single buffered']
    #allocation18 [shape = 's32[1]{0}', space=sflag, size = 0x4, scoped, tag = 'scoped memory for tpu_custom_call.1']
    %15 = vsyncpa [#allocation3], 0
    %16 = vsyncpa [#allocation6], 0
    %17 = vsyncpa [#allocation9], 0
    %18 = vsyncpa [#allocation12], 0
    %19 = vsyncpa [#allocation15], 0
    %20 = vsyncpa [#allocation4], 0
    %21 = vsyncpa [#allocation18], 0
    // Predicated region
    $region2: #{tpu_custom_call.1} parent=1 // pred_check
      _
    $region3: #{tpu_custom_call.1} parent=1 // pred_check_branch
      %23 = sbr.rel (0) target = $region5
    $region4: #{tpu_custom_call.1} parent=1 // pred_region
      %s25 = ssub.s32 128, 128
      %26 = vsyncadd [#allocation3], %s25
      %s27 = sshll.u32 [#allocation2], 4
      %s28 = int_to_ptr.vmem [resolvable:$true] %s27
      %33 = dma.hbm_to_vmem [thread:$0]  %s0, 128, %s28, [#allocation3], 64, 64, 4
    $region5: #{tpu_custom_call.1} parent=1 // pred_fallthru
      _
    // Predicated region
    $region6: #{tpu_custom_call.1} parent=1 // pred_check
      _
    $region7: #{tpu_custom_call.1} parent=1 // pred_check_branch
      %35 = sbr.rel (0) target = $region9
    $region8: #{tpu_custom_call.1} parent=1 // pred_region
      %s37 = ssub.s32 16384, 16384
      %38 = vsyncadd [#allocation6], %s37
      %s39 = sshll.u32 [#allocation5], 4
      %s40 = int_to_ptr.vmem [resolvable:$true] %s39
      %45 = dma.hbm_to_vmem [thread:$0]  %s1, 16384, %s40, [#allocation6], 64, 64, 4
    $region9: #{tpu_custom_call.1} parent=1 // pred_fallthru
      _
    // Predicated region
    $region10: #{tpu_custom_call.1} parent=1 // pred_check
      _
    $region11: #{tpu_custom_call.1} parent=1 // pred_check_branch
      %47 = sbr.rel (0) target = $region13
    $region12: #{tpu_custom_call.1} parent=1 // pred_region
      %s49 = ssub.s32 256, 256
      %50 = vsyncadd [#allocation6], %s49
      %s51 = sshll.u32 [#allocation7], 4
      %s52 = int_to_ptr.vmem [resolvable:$true] %s51
      %57 = dma.hbm_to_vmem [thread:$0]  %s2, 256, %s52, [#allocation6], 64, 64, 4
    $region13: #{tpu_custom_call.1} parent=1 // pred_fallthru
      _
    // Predicated region
    $region14: #{tpu_custom_call.1} parent=1 // pred_check
      _
    $region15: #{tpu_custom_call.1} parent=1 // pred_check_branch
      %59 = sbr.rel (0) target = $region17
    $region16: #{tpu_custom_call.1} parent=1 // pred_region
      %s61 = ssub.s32 256, 256
      %62 = vsyncadd [#allocation9], %s61
      %s63 = sshll.u32 [#allocation8], 4
      %s64 = int_to_ptr.vmem [resolvable:$true] %s63
      %69 = dma.hbm_to_vmem [thread:$0]  %s3, 256, %s64, [#allocation9], 64, 64, 4
    $region17: #{tpu_custom_call.1} parent=1 // pred_fallthru
      _
    // Predicated region
    $region18: #{tpu_custom_call.1} parent=1 // pred_check
      _
    $region19: #{tpu_custom_call.1} parent=1 // pred_check_branch
      %71 = sbr.rel (0) target = $region21
    $region20: #{tpu_custom_call.1} parent=1 // pred_region
      %s73 = ssub.s32 16, 16
      %74 = vsyncadd [#allocation9], %s73
      %s76 = sshll.u32 [#allocation10], 4
      %s77 = int_to_ptr.vmem [resolvable:$true] %s76
      %79 = dma.hbm_to_vmem [thread:$0]  %s4, 16, %s77, [#allocation9]
    $region21: #{tpu_custom_call.1} parent=1 // pred_fallthru
      _
    // Predicated region
    $region22: #{tpu_custom_call.1} parent=1 // pred_check
      _
    $region23: #{tpu_custom_call.1} parent=1 // pred_check_branch
      %81 = sbr.rel (0) target = $region25
    $region24: #{tpu_custom_call.1} parent=1 // pred_region
      %s83 = ssub.s32 16, 16
      %84 = vsyncadd [#allocation12], %s83
      %s86 = sshll.u32 [#allocation11], 4
      %s87 = int_to_ptr.vmem [resolvable:$true] %s86
      %89 = dma.hbm_to_vmem [thread:$0]  %s5, 16, %s87, [#allocation12]
    $region25: #{tpu_custom_call.1} parent=1 // pred_fallthru
      _
    // Predicated region
    $region26: #{tpu_custom_call.1} parent=1 // pred_check
      _
    $region27: #{tpu_custom_call.1} parent=1 // pred_check_branch
      %91 = sbr.rel (0) target = $region29
    $region28: #{tpu_custom_call.1} parent=1 // pred_region
      %s93 = ssub.s32 256, 256
      %94 = vsyncadd [#allocation12], %s93
      %s95 = sshll.u32 [#allocation13], 4
      %s96 = int_to_ptr.vmem [resolvable:$true] %s95
      %101 = dma.hbm_to_vmem [thread:$0]  %s6, 256, %s96, [#allocation12], 128, 128, 8
    $region29: #{tpu_custom_call.1} parent=1 // pred_fallthru
      _
    // Predicated region
    $region30: #{tpu_custom_call.1} parent=1 // pred_check
      _
    $region31: #{tpu_custom_call.1} parent=1 // pred_check_branch
      %103 = sbr.rel (0) target = $region33
    $region32: #{tpu_custom_call.1} parent=1 // pred_region
      %s105 = ssub.s32 256, 256
      %106 = vsyncadd [#allocation15], %s105
      %s107 = sshll.u32 [#allocation14], 4
      %s108 = int_to_ptr.vmem [resolvable:$true] %s107
      %113 = dma.hbm_to_vmem [thread:$0]  %s7, 256, %s108, [#allocation15], 128, 128, 8
    $region33: #{tpu_custom_call.1} parent=1 // pred_fallthru
      _
    // Predicated region
    $region34: #{tpu_custom_call.1} parent=1 // pred_check
      _
    $region35: #{tpu_custom_call.1} parent=1 // pred_check_branch
      %115 = sbr.rel (0) target = $region37
    $region36: #{tpu_custom_call.1} parent=1 // pred_region
      %116 = dma.done [#allocation3], 128
    $region37: #{tpu_custom_call.1} parent=1 // pred_fallthru
      _
    // Predicated region
    $region38: #{tpu_custom_call.1} parent=1 // pred_check
      _
    $region39: #{tpu_custom_call.1} parent=1 // pred_check_branch
      %118 = sbr.rel (0) target = $region41
    $region40: #{tpu_custom_call.1} parent=1 // pred_region
      %119 = dma.done [#allocation6], 16384
    $region41: #{tpu_custom_call.1} parent=1 // pred_fallthru
      _
    // Predicated region
    $region42: #{tpu_custom_call.1} parent=1 // pred_check
      _
    $region43: #{tpu_custom_call.1} parent=1 // pred_check_branch
      %121 = sbr.rel (0) target = $region45
    $region44: #{tpu_custom_call.1} parent=1 // pred_region
      %122 = dma.done [#allocation6], 256
    $region45: #{tpu_custom_call.1} parent=1 // pred_fallthru
      _
    // Predicated region
    $region46: #{tpu_custom_call.1} parent=1 // pred_check
      _
    $region47: #{tpu_custom_call.1} parent=1 // pred_check_branch
      %124 = sbr.rel (0) target = $region49
    $region48: #{tpu_custom_call.1} parent=1 // pred_region
      %125 = dma.done [#allocation9], 256
    $region49: #{tpu_custom_call.1} parent=1 // pred_fallthru
      _
    // Predicated region
    $region50: #{tpu_custom_call.1} parent=1 // pred_check
      _
    $region51: #{tpu_custom_call.1} parent=1 // pred_check_branch
      %127 = sbr.rel (0) target = $region53
    $region52: #{tpu_custom_call.1} parent=1 // pred_region
      %128 = dma.done [#allocation9], 16
    $region53: #{tpu_custom_call.1} parent=1 // pred_fallthru
      _
    // Predicated region
    $region54: #{tpu_custom_call.1} parent=1 // pred_check
      _
    $region55: #{tpu_custom_call.1} parent=1 // pred_check_branch
      %130 = sbr.rel (0) target = $region57
    $region56: #{tpu_custom_call.1} parent=1 // pred_region
      %131 = dma.done [#allocation12], 16
    $region57: #{tpu_custom_call.1} parent=1 // pred_fallthru
      _
    // Predicated region
    $region58: #{tpu_custom_call.1} parent=1 // pred_check
      _
    $region59: #{tpu_custom_call.1} parent=1 // pred_check_branch
      %133 = sbr.rel (0) target = $region61
    $region60: #{tpu_custom_call.1} parent=1 // pred_region
      %134 = dma.done [#allocation12], 256
    $region61: #{tpu_custom_call.1} parent=1 // pred_fallthru
      _
    // Predicated region
    $region62: #{tpu_custom_call.1} parent=1 // pred_check
      _
    $region63: #{tpu_custom_call.1} parent=1 // pred_check_branch
      %136 = sbr.rel (0) target = $region65
    $region64: #{tpu_custom_call.1} parent=1 // pred_region
      %137 = dma.done [#allocation15], 256
    $region65: #{tpu_custom_call.1} parent=1 // pred_fallthru
      _
    %v139 = vld [vmem:[#allocation2] sm:$0xf]
    %v140 = vld [vmem:[#allocation2 + $0x4] sm:$0xf]
    %v141 = vld [vmem:[#allocation7] sm:$0xf]
    %v142 = vld [vmem:[#allocation7 + $0x4] sm:$0xf]
    %v143 = vld [vmem:[#allocation7 + $0x8] sm:$0xf]
    %v144 = vld [vmem:[#allocation7 + $0xc] sm:$0xf]
    %v145 = vld [vmem:[#allocation10] sm:$0x1]
    %v147 = vlaneseq
    %v148 = vshrl.u32 %v147, 7
    %v149 = vsub.s32 0, %v148
    %v150 = vrot.slane %v145, %v149
    %v154 = vunpack.c.l.b16 %v139
    %v155 = vunpack.c.l.b16 %v140
    %v156 = vpack.c.b16 %v155, %v154
    %v161 = vunpack.c.l.b16 %v141
    %v162 = vunpack.c.l.b16 %v142
    %v163 = vunpack.c.l.b16 %v143
    %v164 = vunpack.c.l.b16 %v144
    %v165 = vpack.c.b16 %v162, %v161
    %v166 = vpack.c.b16 %v164, %v163
    %vm169 = vcmask 261120
    %v171 = vsel %vm169, %v156, 0
    %173 = vmatprep.subr.bf16.mxu0 0
    %174 = vmatpush1.bf16.msra.mxu0 %v165
    %175 = vmatprep.subr.bf16.mxu0 0
    %176 = vmatpush1.bf16.msra.mxu0 %v166
    %177 = vmatprep.subr.bf16.mxu0 0
    %178 = vmatpush1.bf16.msra.mxu0 0
    %179 = vmatprep.subr.bf16.mxu0 0
    %180 = vmatpush1.bf16.msra.mxu0 0
    %181 = vmatprep.subr.bf16.mxu0 0
    %182 = vmatpush1.bf16.msra.mxu0 0
    %183 = vmatprep.subr.bf16.mxu0 0
    %184 = vmatpush1.bf16.msra.mxu0 0
    %185 = vmatprep.subr.bf16.mxu0 0
    %186 = vmatpush1.bf16.msra.mxu0 0
    %187 = vmatprep.subr.bf16.mxu0 0
    %188 = vmatpush1.bf16.msra.mxu0 0
    %189 = vmatprep.subr.bf16.mxu0 0
    %190 = vmatpush1.bf16.msra.mxu0 0
    %191 = vmatprep.subr.bf16.mxu0 0
    %192 = vmatpush1.bf16.msra.mxu0 0
    %193 = vmatprep.subr.bf16.mxu0 0
    %194 = vmatpush1.bf16.msra.mxu0 0
    %195 = vmatprep.subr.bf16.mxu0 0
    %196 = vmatpush1.bf16.msra.mxu0 0
    %197 = vmatprep.subr.bf16.mxu0 0
    %198 = vmatpush1.bf16.msra.mxu0 0
    %199 = vmatprep.subr.bf16.mxu0 0
    %200 = vmatpush1.bf16.msra.mxu0 0
    %201 = vmatprep.subr.bf16.mxu0 0
    %202 = vmatpush1.bf16.msra.mxu0 0
    %203 = vmatprep.subr.bf16.mxu0 0
    %204 = vmatpush1.bf16.msra.mxu0 0
    %205 = vmatprep.mubr.bf16.mxu0 0
    %206 = vmatmul.mubr.bf16.gmra.mrb[0].mxu0 %v171
    %v207 = vpop.f32.mrb[0].mxu0
    %v208 = vadd.f32 %v150, %v207
    %v209 = vpop.f32.mrb[0].mxu0
    %v210 = vpop.f32.mrb[0].mxu0
    %v211 = vadd.f32 %v150, %v210
    %v212 = vpop.f32.mrb[0].mxu0
    %213 = vdwg.mxu0
    %v214 = vmax.f32 %v208, 0.0
    %v215 = vmax.f32 %v211, 0.0
    %v216 = vpack.c.bf16 %v215, %v214
    %v218 = vcombine.high %v216, %v216
    %v220 = vunpack.c.l.s4 1966171168
    %v221 = vunpack.c.0.s8 %v220
    %v222 = vlaneseq
    %v223 = vshrl.u32 %v222, 7
    %v224 = vsub.s32 %v221, %v223
    %v225 = vrot.slane %v216, %v224
    %v227 = vunpack.c.l.s4 1966171168
    %v228 = vunpack.c.0.s8 %v227
    %v229 = vlaneseq
    %v230 = vshrl.u32 %v229, 7
    %v231 = vsub.s32 %v228, %v230
    %v232 = vrot.slane %v218, %v231
    %v233 = vcombine.high %v225, %v225
    %v234 = vcombine.high %v232, %v232
    %v236 = vunpack.c.l.s4 1966171168
    %v237 = vunpack.c.0.s8 %v236
    %v238 = vlaneseq
    %v239 = vshrl.u32 %v238, 7
    %v240 = vsub.s32 %v237, %v239
    %v241 = vrot.slane %v225, %v240
    %v243 = vunpack.c.l.s4 1966171168
    %v244 = vunpack.c.0.s8 %v243
    %v245 = vlaneseq
    %v246 = vshrl.u32 %v245, 7
    %v247 = vsub.s32 %v244, %v246
    %v248 = vrot.slane %v232, %v247
    %v250 = vunpack.c.l.s4 1966171168
    %v251 = vunpack.c.0.s8 %v250
    %v252 = vlaneseq
    %v253 = vshrl.u32 %v252, 7
    %v254 = vsub.s32 %v251, %v253
    %v255 = vrot.slane %v233, %v254
    %v257 = vunpack.c.l.s4 1966171168
    %v258 = vunpack.c.0.s8 %v257
    %v259 = vlaneseq
    %v260 = vshrl.u32 %v259, 7
    %v261 = vsub.s32 %v258, %v260
    %v262 = vrot.slane %v234, %v261
    %v263 = vcombine.high %v241, %v241
    %v264 = vcombine.high %v248, %v248
    %v265 = vcombine.high %v255, %v255
    %v266 = vcombine.high %v262, %v262
    %v267 = vunpack.i.l.s16 %v241
    %v268 = vunpack.i.h.s16 %v241
    %v269 = vunpack.i.l.s16 %v255
    %v270 = vunpack.i.h.s16 %v255
    %v271 = vunpack.i.l.s16 %v263
    %v272 = vunpack.i.h.s16 %v263
    %v273 = vunpack.i.l.s16 %v265
    %v274 = vunpack.i.h.s16 %v265
    %v275 = vunpack.i.l.s16 %v248
    %v276 = vunpack.i.h.s16 %v248
    %v277 = vunpack.i.l.s16 %v262
    %v278 = vunpack.i.h.s16 %v262
    %v279 = vunpack.i.l.s16 %v264
    %v280 = vunpack.i.h.s16 %v264
    %v281 = vunpack.i.l.s16 %v266
    %v282 = vunpack.i.h.s16 %v266
    %v283 = vld [vmem:[#allocation5] sm:$0xf]
    %v284 = vld [vmem:[#allocation5 + $0x4] sm:$0xf]
    %v285 = vld [vmem:[#allocation5 + $0x8] sm:$0xf]
    %v286 = vld [vmem:[#allocation5 + $0xc] sm:$0xf]
    %v287 = vld [vmem:[#allocation5 + $0x10] sm:$0xf]
    %v288 = vld [vmem:[#allocation5 + $0x14] sm:$0xf]
    %v289 = vld [vmem:[#allocation5 + $0x18] sm:$0xf]
    %v290 = vld [vmem:[#allocation5 + $0x1c] sm:$0xf]
    %v291 = vld [vmem:[#allocation5 + $0x20] sm:$0xf]
    %v292 = vld [vmem:[#allocation5 + $0x24] sm:$0xf]
    %v293 = vld [vmem:[#allocation5 + $0x28] sm:$0xf]
    %v294 = vld [vmem:[#allocation5 + $0x2c] sm:$0xf]
    %v295 = vld [vmem:[#allocation5 + $0x30] sm:$0xf]
    %v296 = vld [vmem:[#allocation5 + $0x34] sm:$0xf]
    %v297 = vld [vmem:[#allocation5 + $0x38] sm:$0xf]
    %v298 = vld [vmem:[#allocation5 + $0x3c] sm:$0xf]
    %v299 = vld [vmem:[#allocation5 + $0x40] sm:$0xf]
    %v300 = vld [vmem:[#allocation5 + $0x44] sm:$0xf]
    %v301 = vld [vmem:[#allocation5 + $0x48] sm:$0xf]
    %v302 = vld [vmem:[#allocation5 + $0x4c] sm:$0xf]
    %v303 = vld [vmem:[#allocation5 + $0x50] sm:$0xf]
    %v304 = vld [vmem:[#allocation5 + $0x54] sm:$0xf]
    %v305 = vld [vmem:[#allocation5 + $0x58] sm:$0xf]
    %v306 = vld [vmem:[#allocation5 + $0x5c] sm:$0xf]
    %v307 = vld [vmem:[#allocation5 + $0x60] sm:$0xf]
    %v308 = vld [vmem:[#allocation5 + $0x64] sm:$0xf]
    %v309 = vld [vmem:[#allocation5 + $0x68] sm:$0xf]
    %v310 = vld [vmem:[#allocation5 + $0x6c] sm:$0xf]
    %v311 = vld [vmem:[#allocation5 + $0x70] sm:$0xf]
    %v312 = vld [vmem:[#allocation5 + $0x74] sm:$0xf]
    %v313 = vld [vmem:[#allocation5 + $0x78] sm:$0xf]
    %v314 = vld [vmem:[#allocation5 + $0x7c] sm:$0xf]
    %v315 = vld [vmem:[#allocation5 + $0x80] sm:$0xf]
    %v316 = vld [vmem:[#allocation5 + $0x84] sm:$0xf]
    %v317 = vld [vmem:[#allocation5 + $0x88] sm:$0xf]
    %v318 = vld [vmem:[#allocation5 + $0x8c] sm:$0xf]
    %v319 = vld [vmem:[#allocation5 + $0x90] sm:$0xf]
    %v320 = vld [vmem:[#allocation5 + $0x94] sm:$0xf]
    %v321 = vld [vmem:[#allocation5 + $0x98] sm:$0xf]
    %v322 = vld [vmem:[#allocation5 + $0x9c] sm:$0xf]
    %v323 = vld [vmem:[#allocation5 + $0xa0] sm:$0xf]
    %v324 = vld [vmem:[#allocation5 + $0xa4] sm:$0xf]
    %v325 = vld [vmem:[#allocation5 + $0xa8] sm:$0xf]
    %v326 = vld [vmem:[#allocation5 + $0xac] sm:$0xf]
    %v327 = vld [vmem:[#allocation5 + $0xb0] sm:$0xf]
    %v328 = vld [vmem:[#allocation5 + $0xb4] sm:$0xf]
    %v329 = vld [vmem:[#allocation5 + $0xb8] sm:$0xf]
    %v330 = vld [vmem:[#allocation5 + $0xbc] sm:$0xf]
    %v331 = vld [vmem:[#allocation5 + $0xc0] sm:$0xf]
    %v332 = vld [vmem:[#allocation5 + $0xc4] sm:$0xf]
    %v333 = vld [vmem:[#allocation5 + $0xc8] sm:$0xf]
    %v334 = vld [vmem:[#allocation5 + $0xcc] sm:$0xf]
    %v335 = vld [vmem:[#allocation5 + $0xd0] sm:$0xf]
    %v336 = vld [vmem:[#allocation5 + $0xd4] sm:$0xf]
    %v337 = vld [vmem:[#allocation5 + $0xd8] sm:$0xf]
    %v338 = vld [vmem:[#allocation5 + $0xdc] sm:$0xf]
    %v339 = vld [vmem:[#allocation5 + $0xe0] sm:$0xf]
    %v340 = vld [vmem:[#allocation5 + $0xe4] sm:$0xf]
    %v341 = vld [vmem:[#allocation5 + $0xe8] sm:$0xf]
    %v342 = vld [vmem:[#allocation5 + $0xec] sm:$0xf]
    %v343 = vld [vmem:[#allocation5 + $0xf0] sm:$0xf]
    %v344 = vld [vmem:[#allocation5 + $0xf4] sm:$0xf]
    %v345 = vld [vmem:[#allocation5 + $0xf8] sm:$0xf]
    %v346 = vld [vmem:[#allocation5 + $0xfc] sm:$0xf]
    %v347 = vld [vmem:[#allocation5 + $0x100] sm:$0xf]
    %v348 = vld [vmem:[#allocation5 + $0x104] sm:$0xf]
    %v349 = vld [vmem:[#allocation5 + $0x108] sm:$0xf]
    %v350 = vld [vmem:[#allocation5 + $0x10c] sm:$0xf]
    %v351 = vld [vmem:[#allocation5 + $0x110] sm:$0xf]
    %v352 = vld [vmem:[#allocation5 + $0x114] sm:$0xf]
    %v353 = vld [vmem:[#allocation5 + $0x118] sm:$0xf]
    %v354 = vld [vmem:[#allocation5 + $0x11c] sm:$0xf]
    %v355 = vld [vmem:[#allocation5 + $0x120] sm:$0xf]
    %v356 = vld [vmem:[#allocation5 + $0x124] sm:$0xf]
    %v357 = vld [vmem:[#allocation5 + $0x128] sm:$0xf]
    %v358 = vld [vmem:[#allocation5 + $0x12c] sm:$0xf]
    %v359 = vld [vmem:[#allocation5 + $0x130] sm:$0xf]
    %v360 = vld [vmem:[#allocation5 + $0x134] sm:$0xf]
    %v361 = vld [vmem:[#allocation5 + $0x138] sm:$0xf]
    %v362 = vld [vmem:[#allocation5 + $0x13c] sm:$0xf]
    %v363 = vld [vmem:[#allocation5 + $0x140] sm:$0xf]
    %v364 = vld [vmem:[#allocation5 + $0x144] sm:$0xf]
    %v365 = vld [vmem:[#allocation5 + $0x148] sm:$0xf]
    %v366 = vld [vmem:[#allocation5 + $0x14c] sm:$0xf]
    %v367 = vld [vmem:[#allocation5 + $0x150] sm:$0xf]
    %v368 = vld [vmem:[#allocation5 + $0x154] sm:$0xf]
    %v369 = vld [vmem:[#allocation5 + $0x158] sm:$0xf]
    %v370 = vld [vmem:[#allocation5 + $0x15c] sm:$0xf]
    %v371 = vld [vmem:[#allocation5 + $0x160] sm:$0xf]
    %v372 = vld [vmem:[#allocation5 + $0x164] sm:$0xf]
    %v373 = vld [vmem:[#allocation5 + $0x168] sm:$0xf]
    %v374 = vld [vmem:[#allocation5 + $0x16c] sm:$0xf]
    %v375 = vld [vmem:[#allocation5 + $0x170] sm:$0xf]
    %v376 = vld [vmem:[#allocation5 + $0x174] sm:$0xf]
    %v377 = vld [vmem:[#allocation5 + $0x178] sm:$0xf]
    %v378 = vld [vmem:[#allocation5 + $0x17c] sm:$0xf]
    %v379 = vld [vmem:[#allocation5 + $0x180] sm:$0xf]
    %v380 = vld [vmem:[#allocation5 + $0x184] sm:$0xf]
    %v381 = vld [vmem:[#allocation5 + $0x188] sm:$0xf]
    %v382 = vld [vmem:[#allocation5 + $0x18c] sm:$0xf]
    %v383 = vld [vmem:[#allocation5 + $0x190] sm:$0xf]
    %v384 = vld [vmem:[#allocation5 + $0x194] sm:$0xf]
    %v385 = vld [vmem:[#allocation5 + $0x198] sm:$0xf]
    %v386 = vld [vmem:[#allocation5 + $0x19c] sm:$0xf]
    %v387 = vld [vmem:[#allocation5 + $0x1a0] sm:$0xf]
    %v388 = vld [vmem:[#allocation5 + $0x1a4] sm:$0xf]
    %v389 = vld [vmem:[#allocation5 + $0x1a8] sm:$0xf]
    %v390 = vld [vmem:[#allocation5 + $0x1ac] sm:$0xf]
    %v391 = vld [vmem:[#allocation5 + $0x1b0] sm:$0xf]
    %v392 = vld [vmem:[#allocation5 + $0x1b4] sm:$0xf]
    %v393 = vld [vmem:[#allocation5 + $0x1b8] sm:$0xf]
    %v394 = vld [vmem:[#allocation5 + $0x1bc] sm:$0xf]
    %v395 = vld [vmem:[#allocation5 + $0x1c0] sm:$0xf]
    %v396 = vld [vmem:[#allocation5 + $0x1c4] sm:$0xf]
    %v397 = vld [vmem:[#allocation5 + $0x1c8] sm:$0xf]
    %v398 = vld [vmem:[#allocation5 + $0x1cc] sm:$0xf]
    %v399 = vld [vmem:[#allocation5 + $0x1d0] sm:$0xf]
    %v400 = vld [vmem:[#allocation5 + $0x1d4] sm:$0xf]
    %v401 = vld [vmem:[#allocation5 + $0x1d8] sm:$0xf]
    %v402 = vld [vmem:[#allocation5 + $0x1dc] sm:$0xf]
    %v403 = vld [vmem:[#allocation5 + $0x1e0] sm:$0xf]
    %v404 = vld [vmem:[#allocation5 + $0x1e4] sm:$0xf]
    %v405 = vld [vmem:[#allocation5 + $0x1e8] sm:$0xf]
    %v406 = vld [vmem:[#allocation5 + $0x1ec] sm:$0xf]
    %v407 = vld [vmem:[#allocation5 + $0x1f0] sm:$0xf]
    %v408 = vld [vmem:[#allocation5 + $0x1f4] sm:$0xf]
    %v409 = vld [vmem:[#allocation5 + $0x1f8] sm:$0xf]
    %v410 = vld [vmem:[#allocation5 + $0x1fc] sm:$0xf]
    %v411 = vld [vmem:[#allocation5 + $0x200] sm:$0xf]
    %v412 = vld [vmem:[#allocation5 + $0x204] sm:$0xf]
    %v413 = vld [vmem:[#allocation5 + $0x208] sm:$0xf]
    %v414 = vld [vmem:[#allocation5 + $0x20c] sm:$0xf]
    %v415 = vld [vmem:[#allocation5 + $0x210] sm:$0xf]
    %v416 = vld [vmem:[#allocation5 + $0x214] sm:$0xf]
    %v417 = vld [vmem:[#allocation5 + $0x218] sm:$0xf]
    %v418 = vld [vmem:[#allocation5 + $0x21c] sm:$0xf]
    %v419 = vld [vmem:[#allocation5 + $0x220] sm:$0xf]
    %v420 = vld [vmem:[#allocation5 + $0x224] sm:$0xf]
    %v421 = vld [vmem:[#allocation5 + $0x228] sm:$0xf]
    %v422 = vld [vmem:[#allocation5 + $0x22c] sm:$0xf]
    %v423 = vld [vmem:[#allocation5 + $0x230] sm:$0xf]
    %v424 = vld [vmem:[#allocation5 + $0x234] sm:$0xf]
    %v425 = vld [vmem:[#allocation5 + $0x238] sm:$0xf]
    %v426 = vld [vmem:[#allocation5 + $0x23c] sm:$0xf]
    %v427 = vld [vmem:[#allocation5 + $0x240] sm:$0xf]
    %v428 = vld [vmem:[#allocation5 + $0x244] sm:$0xf]
    %v429 = vld [vmem:[#allocation5 + $0x248] sm:$0xf]
    %v430 = vld [vmem:[#allocation5 + $0x24c] sm:$0xf]
    %v431 = vld [vmem:[#allocation5 + $0x250] sm:$0xf]
    %v432 = vld [vmem:[#allocation5 + $0x254] sm:$0xf]
    %v433 = vld [vmem:[#allocation5 + $0x258] sm:$0xf]
    %v434 = vld [vmem:[#allocation5 + $0x25c] sm:$0xf]
    %v435 = vld [vmem:[#allocation5 + $0x260] sm:$0xf]
    %v436 = vld [vmem:[#allocation5 + $0x264] sm:$0xf]
    %v437 = vld [vmem:[#allocation5 + $0x268] sm:$0xf]
    %v438 = vld [vmem:[#allocation5 + $0x26c] sm:$0xf]
    %v439 = vld [vmem:[#allocation5 + $0x270] sm:$0xf]
    %v440 = vld [vmem:[#allocation5 + $0x274] sm:$0xf]
    %v441 = vld [vmem:[#allocation5 + $0x278] sm:$0xf]
    %v442 = vld [vmem:[#allocation5 + $0x27c] sm:$0xf]
    %v443 = vld [vmem:[#allocation5 + $0x280] sm:$0xf]
    %v444 = vld [vmem:[#allocation5 + $0x284] sm:$0xf]
    %v445 = vld [vmem:[#allocation5 + $0x288] sm:$0xf]
    %v446 = vld [vmem:[#allocation5 + $0x28c] sm:$0xf]
    %v447 = vld [vmem:[#allocation5 + $0x290] sm:$0xf]
    %v448 = vld [vmem:[#allocation5 + $0x294] sm:$0xf]
    %v449 = vld [vmem:[#allocation5 + $0x298] sm:$0xf]
    %v450 = vld [vmem:[#allocation5 + $0x29c] sm:$0xf]
    %v451 = vld [vmem:[#allocation5 + $0x2a0] sm:$0xf]
    %v452 = vld [vmem:[#allocation5 + $0x2a4] sm:$0xf]
    %v453 = vld [vmem:[#allocation5 + $0x2a8] sm:$0xf]
    %v454 = vld [vmem:[#allocation5 + $0x2ac] sm:$0xf]
    %v455 = vld [vmem:[#allocation5 + $0x2b0] sm:$0xf]
    %v456 = vld [vmem:[#allocation5 + $0x2b4] sm:$0xf]
    %v457 = vld [vmem:[#allocation5 + $0x2b8] sm:$0xf]
    %v458 = vld [vmem:[#allocation5 + $0x2bc] sm:$0xf]
    %v459 = vld [vmem:[#allocation5 + $0x2c0] sm:$0xf]
    %v460 = vld [vmem:[#allocation5 + $0x2c4] sm:$0xf]
    %v461 = vld [vmem:[#allocation5 + $0x2c8] sm:$0xf]
    %v462 = vld [vmem:[#allocation5 + $0x2cc] sm:$0xf]
    %v463 = vld [vmem:[#allocation5 + $0x2d0] sm:$0xf]
    %v464 = vld [vmem:[#allocation5 + $0x2d4] sm:$0xf]
    %v465 = vld [vmem:[#allocation5 + $0x2d8] sm:$0xf]
    %v466 = vld [vmem:[#allocation5 + $0x2dc] sm:$0xf]
    %v467 = vld [vmem:[#allocation5 + $0x2e0] sm:$0xf]
    %v468 = vld [vmem:[#allocation5 + $0x2e4] sm:$0xf]
    %v469 = vld [vmem:[#allocation5 + $0x2e8] sm:$0xf]
    %v470 = vld [vmem:[#allocation5 + $0x2ec] sm:$0xf]
    %v471 = vld [vmem:[#allocation5 + $0x2f0] sm:$0xf]
    %v472 = vld [vmem:[#allocation5 + $0x2f4] sm:$0xf]
    %v473 = vld [vmem:[#allocation5 + $0x2f8] sm:$0xf]
    %v474 = vld [vmem:[#allocation5 + $0x2fc] sm:$0xf]
    %v475 = vld [vmem:[#allocation5 + $0x300] sm:$0xf]
    %v476 = vld [vmem:[#allocation5 + $0x304] sm:$0xf]
    %v477 = vld [vmem:[#allocation5 + $0x308] sm:$0xf]
    %v478 = vld [vmem:[#allocation5 + $0x30c] sm:$0xf]
    %v479 = vld [vmem:[#allocation5 + $0x310] sm:$0xf]
    %v480 = vld [vmem:[#allocation5 + $0x314] sm:$0xf]
    %v481 = vld [vmem:[#allocation5 + $0x318] sm:$0xf]
    %v482 = vld [vmem:[#allocation5 + $0x31c] sm:$0xf]
    %v483 = vld [vmem:[#allocation5 + $0x320] sm:$0xf]
    %v484 = vld [vmem:[#allocation5 + $0x324] sm:$0xf]
    %v485 = vld [vmem:[#allocation5 + $0x328] sm:$0xf]
    %v486 = vld [vmem:[#allocation5 + $0x32c] sm:$0xf]
    %v487 = vld [vmem:[#allocation5 + $0x330] sm:$0xf]
    %v488 = vld [vmem:[#allocation5 + $0x334] sm:$0xf]
    %v489 = vld [vmem:[#allocation5 + $0x338] sm:$0xf]
    %v490 = vld [vmem:[#allocation5 + $0x33c] sm:$0xf]
    %v491 = vld [vmem:[#allocation5 + $0x340] sm:$0xf]
    %v492 = vld [vmem:[#allocation5 + $0x344] sm:$0xf]
    %v493 = vld [vmem:[#allocation5 + $0x348] sm:$0xf]
    %v494 = vld [vmem:[#allocation5 + $0x34c] sm:$0xf]
    %v495 = vld [vmem:[#allocation5 + $0x350] sm:$0xf]
    %v496 = vld [vmem:[#allocation5 + $0x354] sm:$0xf]
    %v497 = vld [vmem:[#allocation5 + $0x358] sm:$0xf]
    %v498 = vld [vmem:[#allocation5 + $0x35c] sm:$0xf]
    %v499 = vld [vmem:[#allocation5 + $0x360] sm:$0xf]
    %v500 = vld [vmem:[#allocation5 + $0x364] sm:$0xf]
    %v501 = vld [vmem:[#allocation5 + $0x368] sm:$0xf]
    %v502 = vld [vmem:[#allocation5 + $0x36c] sm:$0xf]
    %v503 = vld [vmem:[#allocation5 + $0x370] sm:$0xf]
    %v504 = vld [vmem:[#allocation5 + $0x374] sm:$0xf]
    %v505 = vld [vmem:[#allocation5 + $0x378] sm:$0xf]
    %v506 = vld [vmem:[#allocation5 + $0x37c] sm:$0xf]
    %v507 = vld [vmem:[#allocation5 + $0x380] sm:$0xf]
    %v508 = vld [vmem:[#allocation5 + $0x384] sm:$0xf]
    %v509 = vld [vmem:[#allocation5 + $0x388] sm:$0xf]
    %v510 = vld [vmem:[#allocation5 + $0x38c] sm:$0xf]
    %v511 = vld [vmem:[#allocation5 + $0x390] sm:$0xf]
    %v512 = vld [vmem:[#allocation5 + $0x394] sm:$0xf]
    %v513 = vld [vmem:[#allocation5 + $0x398] sm:$0xf]
    %v514 = vld [vmem:[#allocation5 + $0x39c] sm:$0xf]
    %v515 = vld [vmem:[#allocation5 + $0x3a0] sm:$0xf]
    %v516 = vld [vmem:[#allocation5 + $0x3a4] sm:$0xf]
    %v517 = vld [vmem:[#allocation5 + $0x3a8] sm:$0xf]
    %v518 = vld [vmem:[#allocation5 + $0x3ac] sm:$0xf]
    %v519 = vld [vmem:[#allocation5 + $0x3b0] sm:$0xf]
    %v520 = vld [vmem:[#allocation5 + $0x3b4] sm:$0xf]
    %v521 = vld [vmem:[#allocation5 + $0x3b8] sm:$0xf]
    %v522 = vld [vmem:[#allocation5 + $0x3bc] sm:$0xf]
    %v523 = vld [vmem:[#allocation5 + $0x3c0] sm:$0xf]
    %v524 = vld [vmem:[#allocation5 + $0x3c4] sm:$0xf]
    %v525 = vld [vmem:[#allocation5 + $0x3c8] sm:$0xf]
    %v526 = vld [vmem:[#allocation5 + $0x3cc] sm:$0xf]
    %v527 = vld [vmem:[#allocation5 + $0x3d0] sm:$0xf]
    %v528 = vld [vmem:[#allocation5 + $0x3d4] sm:$0xf]
    %v529 = vld [vmem:[#allocation5 + $0x3d8] sm:$0xf]
    %v530 = vld [vmem:[#allocation5 + $0x3dc] sm:$0xf]
    %v531 = vld [vmem:[#allocation5 + $0x3e0] sm:$0xf]
    %v532 = vld [vmem:[#allocation5 + $0x3e4] sm:$0xf]
    %v533 = vld [vmem:[#allocation5 + $0x3e8] sm:$0xf]
    %v534 = vld [vmem:[#allocation5 + $0x3ec] sm:$0xf]
    %v535 = vld [vmem:[#allocation5 + $0x3f0] sm:$0xf]
    %v536 = vld [vmem:[#allocation5 + $0x3f4] sm:$0xf]
    %v537 = vld [vmem:[#allocation5 + $0x3f8] sm:$0xf]
    %v538 = vld [vmem:[#allocation5 + $0x3fc] sm:$0xf]
    %v539 = vld [vmem:[#allocation8] sm:$0xf]
    %v540 = vld [vmem:[#allocation8 + $0x4] sm:$0xf]
    %v541 = vld [vmem:[#allocation8 + $0x8] sm:$0xf]
    %v542 = vld [vmem:[#allocation8 + $0xc] sm:$0xf]
    %v543 = vld [vmem:[#allocation11] sm:$0x1]
    %v545 = vlaneseq
    %v546 = vshrl.u32 %v545, 7
    %v547 = vsub.s32 0, %v546
    %v548 = vrot.slane %v543, %v547
    %v806 = vunpack.c.l.b16 %v283
    %v807 = vunpack.c.l.b16 %v284
    %v808 = vunpack.c.l.b16 %v285
    %v809 = vunpack.c.l.b16 %v286
    %v810 = vunpack.c.l.b16 %v287
    %v811 = vunpack.c.l.b16 %v288
    %v812 = vunpack.c.l.b16 %v289
    %v813 = vunpack.c.l.b16 %v290
    %v814 = vunpack.c.l.b16 %v291
    %v815 = vunpack.c.l.b16 %v292
    %v816 = vunpack.c.l.b16 %v293
    %v817 = vunpack.c.l.b16 %v294
    %v818 = vunpack.c.l.b16 %v295
    %v819 = vunpack.c.l.b16 %v296
    %v820 = vunpack.c.l.b16 %v297
    %v821 = vunpack.c.l.b16 %v298
    %v822 = vunpack.c.l.b16 %v299
    %v823 = vunpack.c.l.b16 %v300
    %v824 = vunpack.c.l.b16 %v301
    %v825 = vunpack.c.l.b16 %v302
    %v826 = vunpack.c.l.b16 %v303
    %v827 = vunpack.c.l.b16 %v304
    %v828 = vunpack.c.l.b16 %v305
    %v829 = vunpack.c.l.b16 %v306
    %v830 = vunpack.c.l.b16 %v307
    %v831 = vunpack.c.l.b16 %v308
    %v832 = vunpack.c.l.b16 %v309
    %v833 = vunpack.c.l.b16 %v310
    %v834 = vunpack.c.l.b16 %v311
    %v835 = vunpack.c.l.b16 %v312
    %v836 = vunpack.c.l.b16 %v313
    %v837 = vunpack.c.l.b16 %v314
    %v838 = vunpack.c.l.b16 %v315
    %v839 = vunpack.c.l.b16 %v316
    %v840 = vunpack.c.l.b16 %v317
    %v841 = vunpack.c.l.b16 %v318
    %v842 = vunpack.c.l.b16 %v319
    %v843 = vunpack.c.l.b16 %v320
    %v844 = vunpack.c.l.b16 %v321
    %v845 = vunpack.c.l.b16 %v322
    %v846 = vunpack.c.l.b16 %v323
    %v847 = vunpack.c.l.b16 %v324
    %v848 = vunpack.c.l.b16 %v325
    %v849 = vunpack.c.l.b16 %v326
    %v850 = vunpack.c.l.b16 %v327
    %v851 = vunpack.c.l.b16 %v328
    %v852 = vunpack.c.l.b16 %v329
    %v853 = vunpack.c.l.b16 %v330
    %v854 = vunpack.c.l.b16 %v331
    %v855 = vunpack.c.l.b16 %v332
    %v856 = vunpack.c.l.b16 %v333
    %v857 = vunpack.c.l.b16 %v334
    %v858 = vunpack.c.l.b16 %v335
    %v859 = vunpack.c.l.b16 %v336
    %v860 = vunpack.c.l.b16 %v337
    %v861 = vunpack.c.l.b16 %v338
    %v862 = vunpack.c.l.b16 %v339
    %v863 = vunpack.c.l.b16 %v340
    %v864 = vunpack.c.l.b16 %v341
    %v865 = vunpack.c.l.b16 %v342
    %v866 = vunpack.c.l.b16 %v343
    %v867 = vunpack.c.l.b16 %v344
    %v868 = vunpack.c.l.b16 %v345
    %v869 = vunpack.c.l.b16 %v346
    %v870 = vunpack.c.l.b16 %v347
    %v871 = vunpack.c.l.b16 %v348
    %v872 = vunpack.c.l.b16 %v349
    %v873 = vunpack.c.l.b16 %v350
    %v874 = vunpack.c.l.b16 %v351
    %v875 = vunpack.c.l.b16 %v352
    %v876 = vunpack.c.l.b16 %v353
    %v877 = vunpack.c.l.b16 %v354
    %v878 = vunpack.c.l.b16 %v355
    %v879 = vunpack.c.l.b16 %v356
    %v880 = vunpack.c.l.b16 %v357
    %v881 = vunpack.c.l.b16 %v358
    %v882 = vunpack.c.l.b16 %v359
    %v883 = vunpack.c.l.b16 %v360
    %v884 = vunpack.c.l.b16 %v361
    %v885 = vunpack.c.l.b16 %v362
    %v886 = vunpack.c.l.b16 %v363
    %v887 = vunpack.c.l.b16 %v364
    %v888 = vunpack.c.l.b16 %v365
    %v889 = vunpack.c.l.b16 %v366
    %v890 = vunpack.c.l.b16 %v367
    %v891 = vunpack.c.l.b16 %v368
    %v892 = vunpack.c.l.b16 %v369
    %v893 = vunpack.c.l.b16 %v370
    %v894 = vunpack.c.l.b16 %v371
    %v895 = vunpack.c.l.b16 %v372
    %v896 = vunpack.c.l.b16 %v373
    %v897 = vunpack.c.l.b16 %v374
    %v898 = vunpack.c.l.b16 %v375
    %v899 = vunpack.c.l.b16 %v376
    %v900 = vunpack.c.l.b16 %v377
    %v901 = vunpack.c.l.b16 %v378
    %v902 = vunpack.c.l.b16 %v379
    %v903 = vunpack.c.l.b16 %v380
    %v904 = vunpack.c.l.b16 %v381
    %v905 = vunpack.c.l.b16 %v382
    %v906 = vunpack.c.l.b16 %v383
    %v907 = vunpack.c.l.b16 %v384
    %v908 = vunpack.c.l.b16 %v385
    %v909 = vunpack.c.l.b16 %v386
    %v910 = vunpack.c.l.b16 %v387
    %v911 = vunpack.c.l.b16 %v388
    %v912 = vunpack.c.l.b16 %v389
    %v913 = vunpack.c.l.b16 %v390
    %v914 = vunpack.c.l.b16 %v391
    %v915 = vunpack.c.l.b16 %v392
    %v916 = vunpack.c.l.b16 %v393
    %v917 = vunpack.c.l.b16 %v394
    %v918 = vunpack.c.l.b16 %v395
    %v919 = vunpack.c.l.b16 %v396
    %v920 = vunpack.c.l.b16 %v397
    %v921 = vunpack.c.l.b16 %v398
    %v922 = vunpack.c.l.b16 %v399
    %v923 = vunpack.c.l.b16 %v400
    %v924 = vunpack.c.l.b16 %v401
    %v925 = vunpack.c.l.b16 %v402
    %v926 = vunpack.c.l.b16 %v403
    %v927 = vunpack.c.l.b16 %v404
    %v928 = vunpack.c.l.b16 %v405
    %v929 = vunpack.c.l.b16 %v406
    %v930 = vunpack.c.l.b16 %v407
    %v931 = vunpack.c.l.b16 %v408
    %v932 = vunpack.c.l.b16 %v409
    %v933 = vunpack.c.l.b16 %v410
    %v934 = vunpack.c.l.b16 %v411
    %v935 = vunpack.c.l.b16 %v412
    %v936 = vunpack.c.l.b16 %v413
    %v937 = vunpack.c.l.b16 %v414
    %v938 = vunpack.c.l.b16 %v415
    %v939 = vunpack.c.l.b16 %v416
    %v940 = vunpack.c.l.b16 %v417
    %v941 = vunpack.c.l.b16 %v418
    %v942 = vunpack.c.l.b16 %v419
    %v943 = vunpack.c.l.b16 %v420
    %v944 = vunpack.c.l.b16 %v421
    %v945 = vunpack.c.l.b16 %v422
    %v946 = vunpack.c.l.b16 %v423
    %v947 = vunpack.c.l.b16 %v424
    %v948 = vunpack.c.l.b16 %v425
    %v949 = vunpack.c.l.b16 %v426
    %v950 = vunpack.c.l.b16 %v427
    %v951 = vunpack.c.l.b16 %v428
    %v952 = vunpack.c.l.b16 %v429
    %v953 = vunpack.c.l.b16 %v430
    %v954 = vunpack.c.l.b16 %v431
    %v955 = vunpack.c.l.b16 %v432
    %v956 = vunpack.c.l.b16 %v433
    %v957 = vunpack.c.l.b16 %v434
    %v958 = vunpack.c.l.b16 %v435
    %v959 = vunpack.c.l.b16 %v436
    %v960 = vunpack.c.l.b16 %v437
    %v961 = vunpack.c.l.b16 %v438
    %v962 = vunpack.c.l.b16 %v439
    %v963 = vunpack.c.l.b16 %v440
    %v964 = vunpack.c.l.b16 %v441
    %v965 = vunpack.c.l.b16 %v442
    %v966 = vunpack.c.l.b16 %v443
    %v967 = vunpack.c.l.b16 %v444
    %v968 = vunpack.c.l.b16 %v445
    %v969 = vunpack.c.l.b16 %v446
    %v970 = vunpack.c.l.b16 %v447
    %v971 = vunpack.c.l.b16 %v448
    %v972 = vunpack.c.l.b16 %v449
    %v973 = vunpack.c.l.b16 %v450
    %v974 = vunpack.c.l.b16 %v451
    %v975 = vunpack.c.l.b16 %v452
    %v976 = vunpack.c.l.b16 %v453
    %v977 = vunpack.c.l.b16 %v454
    %v978 = vunpack.c.l.b16 %v455
    %v979 = vunpack.c.l.b16 %v456
    %v980 = vunpack.c.l.b16 %v457
    %v981 = vunpack.c.l.b16 %v458
    %v982 = vunpack.c.l.b16 %v459
    %v983 = vunpack.c.l.b16 %v460
    %v984 = vunpack.c.l.b16 %v461
    %v985 = vunpack.c.l.b16 %v462
    %v986 = vunpack.c.l.b16 %v463
    %v987 = vunpack.c.l.b16 %v464
    %v988 = vunpack.c.l.b16 %v465
    %v989 = vunpack.c.l.b16 %v466
    %v990 = vunpack.c.l.b16 %v467
    %v991 = vunpack.c.l.b16 %v468
    %v992 = vunpack.c.l.b16 %v469
    %v993 = vunpack.c.l.b16 %v470
    %v994 = vunpack.c.l.b16 %v471
    %v995 = vunpack.c.l.b16 %v472
    %v996 = vunpack.c.l.b16 %v473
    %v997 = vunpack.c.l.b16 %v474
    %v998 = vunpack.c.l.b16 %v475
    %v999 = vunpack.c.l.b16 %v476
    %v1000 = vunpack.c.l.b16 %v477
    %v1001 = vunpack.c.l.b16 %v478
    %v1002 = vunpack.c.l.b16 %v479
    %v1003 = vunpack.c.l.b16 %v480
    %v1004 = vunpack.c.l.b16 %v481
    %v1005 = vunpack.c.l.b16 %v482
    %v1006 = vunpack.c.l.b16 %v483
    %v1007 = vunpack.c.l.b16 %v484
    %v1008 = vunpack.c.l.b16 %v485
    %v1009 = vunpack.c.l.b16 %v486
    %v1010 = vunpack.c.l.b16 %v487
    %v1011 = vunpack.c.l.b16 %v488
    %v1012 = vunpack.c.l.b16 %v489
    %v1013 = vunpack.c.l.b16 %v490
    %v1014 = vunpack.c.l.b16 %v491
    %v1015 = vunpack.c.l.b16 %v492
    %v1016 = vunpack.c.l.b16 %v493
    %v1017 = vunpack.c.l.b16 %v494
    %v1018 = vunpack.c.l.b16 %v495
    %v1019 = vunpack.c.l.b16 %v496
    %v1020 = vunpack.c.l.b16 %v497
    %v1021 = vunpack.c.l.b16 %v498
    %v1022 = vunpack.c.l.b16 %v499
    %v1023 = vunpack.c.l.b16 %v500
    %v1024 = vunpack.c.l.b16 %v501
    %v1025 = vunpack.c.l.b16 %v502
    %v1026 = vunpack.c.l.b16 %v503
    %v1027 = vunpack.c.l.b16 %v504
    %v1028 = vunpack.c.l.b16 %v505
    %v1029 = vunpack.c.l.b16 %v506
    %v1030 = vunpack.c.l.b16 %v507
    %v1031 = vunpack.c.l.b16 %v508
    %v1032 = vunpack.c.l.b16 %v509
    %v1033 = vunpack.c.l.b16 %v510
    %v1034 = vunpack.c.l.b16 %v511
    %v1035 = vunpack.c.l.b16 %v512
    %v1036 = vunpack.c.l.b16 %v513
    %v1037 = vunpack.c.l.b16 %v514
    %v1038 = vunpack.c.l.b16 %v515
    %v1039 = vunpack.c.l.b16 %v516
    %v1040 = vunpack.c.l.b16 %v517
    %v1041 = vunpack.c.l.b16 %v518
    %v1042 = vunpack.c.l.b16 %v519
    %v1043 = vunpack.c.l.b16 %v520
    %v1044 = vunpack.c.l.b16 %v521
    %v1045 = vunpack.c.l.b16 %v522
    %v1046 = vunpack.c.l.b16 %v523
    %v1047 = vunpack.c.l.b16 %v524
    %v1048 = vunpack.c.l.b16 %v525
    %v1049 = vunpack.c.l.b16 %v526
    %v1050 = vunpack.c.l.b16 %v527
    %v1051 = vunpack.c.l.b16 %v528
    %v1052 = vunpack.c.l.b16 %v529
    %v1053 = vunpack.c.l.b16 %v530
    %v1054 = vunpack.c.l.b16 %v531
    %v1055 = vunpack.c.l.b16 %v532
    %v1056 = vunpack.c.l.b16 %v533
    %v1057 = vunpack.c.l.b16 %v534
    %v1058 = vunpack.c.l.b16 %v535
    %v1059 = vunpack.c.l.b16 %v536
    %v1060 = vunpack.c.l.b16 %v537
    %v1061 = vunpack.c.l.b16 %v538
    %v1062 = vpack.c.b16 %v807, %v806
    %v1063 = vpack.c.b16 %v809, %v808
    %v1064 = vpack.c.b16 %v811, %v810
    %v1065 = vpack.c.b16 %v813, %v812
    %v1066 = vpack.c.b16 %v815, %v814
    %v1067 = vpack.c.b16 %v817, %v816
    %v1068 = vpack.c.b16 %v819, %v818
    %v1069 = vpack.c.b16 %v821, %v820
    %v1070 = vpack.c.b16 %v823, %v822
    %v1071 = vpack.c.b16 %v825, %v824
    %v1072 = vpack.c.b16 %v827, %v826
    %v1073 = vpack.c.b16 %v829, %v828
    %v1074 = vpack.c.b16 %v831, %v830
    %v1075 = vpack.c.b16 %v833, %v832
    %v1076 = vpack.c.b16 %v835, %v834
    %v1077 = vpack.c.b16 %v837, %v836
    %v1078 = vpack.c.b16 %v839, %v838
    %v1079 = vpack.c.b16 %v841, %v840
    %v1080 = vpack.c.b16 %v843, %v842
    %v1081 = vpack.c.b16 %v845, %v844
    %v1082 = vpack.c.b16 %v847, %v846
    %v1083 = vpack.c.b16 %v849, %v848
    %v1084 = vpack.c.b16 %v851, %v850
    %v1085 = vpack.c.b16 %v853, %v852
    %v1086 = vpack.c.b16 %v855, %v854
    %v1087 = vpack.c.b16 %v857, %v856
    %v1088 = vpack.c.b16 %v859, %v858
    %v1089 = vpack.c.b16 %v861, %v860
    %v1090 = vpack.c.b16 %v863, %v862
    %v1091 = vpack.c.b16 %v865, %v864
    %v1092 = vpack.c.b16 %v867, %v866
    %v1093 = vpack.c.b16 %v869, %v868
    %v1094 = vpack.c.b16 %v871, %v870
    %v1095 = vpack.c.b16 %v873, %v872
    %v1096 = vpack.c.b16 %v875, %v874
    %v1097 = vpack.c.b16 %v877, %v876
    %v1098 = vpack.c.b16 %v879, %v878
    %v1099 = vpack.c.b16 %v881, %v880
    %v1100 = vpack.c.b16 %v883, %v882
    %v1101 = vpack.c.b16 %v885, %v884
    %v1102 = vpack.c.b16 %v887, %v886
    %v1103 = vpack.c.b16 %v889, %v888
    %v1104 = vpack.c.b16 %v891, %v890
    %v1105 = vpack.c.b16 %v893, %v892
    %v1106 = vpack.c.b16 %v895, %v894
    %v1107 = vpack.c.b16 %v897, %v896
    %v1108 = vpack.c.b16 %v899, %v898
    %v1109 = vpack.c.b16 %v901, %v900
    %v1110 = vpack.c.b16 %v903, %v902
    %v1111 = vpack.c.b16 %v905, %v904
    %v1112 = vpack.c.b16 %v907, %v906
    %v1113 = vpack.c.b16 %v909, %v908
    %v1114 = vpack.c.b16 %v911, %v910
    %v1115 = vpack.c.b16 %v913, %v912
    %v1116 = vpack.c.b16 %v915, %v914
    %v1117 = vpack.c.b16 %v917, %v916
    %v1118 = vpack.c.b16 %v919, %v918
    %v1119 = vpack.c.b16 %v921, %v920
    %v1120 = vpack.c.b16 %v923, %v922
    %v1121 = vpack.c.b16 %v925, %v924
    %v1122 = vpack.c.b16 %v927, %v926
    %v1123 = vpack.c.b16 %v929, %v928
    %v1124 = vpack.c.b16 %v931, %v930
    %v1125 = vpack.c.b16 %v933, %v932
    %v1126 = vpack.c.b16 %v935, %v934
    %v1127 = vpack.c.b16 %v937, %v936
    %v1128 = vpack.c.b16 %v939, %v938
    %v1129 = vpack.c.b16 %v941, %v940
    %v1130 = vpack.c.b16 %v943, %v942
    %v1131 = vpack.c.b16 %v945, %v944
    %v1132 = vpack.c.b16 %v947, %v946
    %v1133 = vpack.c.b16 %v949, %v948
    %v1134 = vpack.c.b16 %v951, %v950
    %v1135 = vpack.c.b16 %v953, %v952
    %v1136 = vpack.c.b16 %v955, %v954
    %v1137 = vpack.c.b16 %v957, %v956
    %v1138 = vpack.c.b16 %v959, %v958
    %v1139 = vpack.c.b16 %v961, %v960
    %v1140 = vpack.c.b16 %v963, %v962
    %v1141 = vpack.c.b16 %v965, %v964
    %v1142 = vpack.c.b16 %v967, %v966
    %v1143 = vpack.c.b16 %v969, %v968
    %v1144 = vpack.c.b16 %v971, %v970
    %v1145 = vpack.c.b16 %v973, %v972
    %v1146 = vpack.c.b16 %v975, %v974
    %v1147 = vpack.c.b16 %v977, %v976
    %v1148 = vpack.c.b16 %v979, %v978
    %v1149 = vpack.c.b16 %v981, %v980
    %v1150 = vpack.c.b16 %v983, %v982
    %v1151 = vpack.c.b16 %v985, %v984
    %v1152 = vpack.c.b16 %v987, %v986
    %v1153 = vpack.c.b16 %v989, %v988
    %v1154 = vpack.c.b16 %v991, %v990
    %v1155 = vpack.c.b16 %v993, %v992
    %v1156 = vpack.c.b16 %v995, %v994
    %v1157 = vpack.c.b16 %v997, %v996
    %v1158 = vpack.c.b16 %v999, %v998
    %v1159 = vpack.c.b16 %v1001, %v1000
    %v1160 = vpack.c.b16 %v1003, %v1002
    %v1161 = vpack.c.b16 %v1005, %v1004
    %v1162 = vpack.c.b16 %v1007, %v1006
    %v1163 = vpack.c.b16 %v1009, %v1008
    %v1164 = vpack.c.b16 %v1011, %v1010
    %v1165 = vpack.c.b16 %v1013, %v1012
    %v1166 = vpack.c.b16 %v1015, %v1014
    %v1167 = vpack.c.b16 %v1017, %v1016
    %v1168 = vpack.c.b16 %v1019, %v1018
    %v1169 = vpack.c.b16 %v1021, %v1020
    %v1170 = vpack.c.b16 %v1023, %v1022
    %v1171 = vpack.c.b16 %v1025, %v1024
    %v1172 = vpack.c.b16 %v1027, %v1026
    %v1173 = vpack.c.b16 %v1029, %v1028
    %v1174 = vpack.c.b16 %v1031, %v1030
    %v1175 = vpack.c.b16 %v1033, %v1032
    %v1176 = vpack.c.b16 %v1035, %v1034
    %v1177 = vpack.c.b16 %v1037, %v1036
    %v1178 = vpack.c.b16 %v1039, %v1038
    %v1179 = vpack.c.b16 %v1041, %v1040
    %v1180 = vpack.c.b16 %v1043, %v1042
    %v1181 = vpack.c.b16 %v1045, %v1044
    %v1182 = vpack.c.b16 %v1047, %v1046
    %v1183 = vpack.c.b16 %v1049, %v1048
    %v1184 = vpack.c.b16 %v1051, %v1050
    %v1185 = vpack.c.b16 %v1053, %v1052
    %v1186 = vpack.c.b16 %v1055, %v1054
    %v1187 = vpack.c.b16 %v1057, %v1056
    %v1188 = vpack.c.b16 %v1059, %v1058
    %v1189 = vpack.c.b16 %v1061, %v1060
    %v1194 = vunpack.c.l.b16 %v539
    %v1195 = vunpack.c.l.b16 %v540
    %v1196 = vunpack.c.l.b16 %v541
    %v1197 = vunpack.c.l.b16 %v542
    %v1198 = vpack.c.b16 %v1195, %v1194
    %v1199 = vpack.c.b16 %v1197, %v1196
    %v1203 = vsel %vm169, %v1062, 0
    %v1206 = vsel %vm169, %v1063, 0
    %v1209 = vsel %vm169, %v1064, 0
    %v1212 = vsel %vm169, %v1065, 0
    %v1215 = vsel %vm169, %v1066, 0
    %v1218 = vsel %vm169, %v1067, 0
    %v1221 = vsel %vm169, %v1068, 0
    %v1224 = vsel %vm169, %v1069, 0
    %v1227 = vsel %vm169, %v1070, 0
    %v1230 = vsel %vm169, %v1071, 0
    %v1233 = vsel %vm169, %v1072, 0
    %v1236 = vsel %vm169, %v1073, 0
    %v1239 = vsel %vm169, %v1074, 0
    %v1242 = vsel %vm169, %v1075, 0
    %v1245 = vsel %vm169, %v1076, 0
    %v1248 = vsel %vm169, %v1077, 0
    %v1251 = vsel %vm169, %v1078, 0
    %v1254 = vsel %vm169, %v1079, 0
    %v1257 = vsel %vm169, %v1080, 0
    %v1260 = vsel %vm169, %v1081, 0
    %v1263 = vsel %vm169, %v1082, 0
    %v1266 = vsel %vm169, %v1083, 0
    %v1269 = vsel %vm169, %v1084, 0
    %v1272 = vsel %vm169, %v1085, 0
    %v1275 = vsel %vm169, %v1086, 0
    %v1278 = vsel %vm169, %v1087, 0
    %v1281 = vsel %vm169, %v1088, 0
    %v1284 = vsel %vm169, %v1089, 0
    %v1287 = vsel %vm169, %v1090, 0
    %v1290 = vsel %vm169, %v1091, 0
    %v1293 = vsel %vm169, %v1092, 0
    %v1296 = vsel %vm169, %v1093, 0
    %v1299 = vsel %vm169, %v1094, 0
    %v1302 = vsel %vm169, %v1095, 0
    %v1305 = vsel %vm169, %v1096, 0
    %v1308 = vsel %vm169, %v1097, 0
    %v1311 = vsel %vm169, %v1098, 0
    %v1314 = vsel %vm169, %v1099, 0
    %v1317 = vsel %vm169, %v1100, 0
    %v1320 = vsel %vm169, %v1101, 0
    %v1323 = vsel %vm169, %v1102, 0
    %v1326 = vsel %vm169, %v1103, 0
    %v1329 = vsel %vm169, %v1104, 0
    %v1332 = vsel %vm169, %v1105, 0
    %v1335 = vsel %vm169, %v1106, 0
    %v1338 = vsel %vm169, %v1107, 0
    %v1341 = vsel %vm169, %v1108, 0
    %v1344 = vsel %vm169, %v1109, 0
    %v1347 = vsel %vm169, %v1110, 0
    %v1350 = vsel %vm169, %v1111, 0
    %v1353 = vsel %vm169, %v1112, 0
    %v1356 = vsel %vm169, %v1113, 0
    %v1359 = vsel %vm169, %v1114, 0
    %v1362 = vsel %vm169, %v1115, 0
    %v1365 = vsel %vm169, %v1116, 0
    %v1368 = vsel %vm169, %v1117, 0
    %v1371 = vsel %vm169, %v1118, 0
    %v1374 = vsel %vm169, %v1119, 0
    %v1377 = vsel %vm169, %v1120, 0
    %v1380 = vsel %vm169, %v1121, 0
    %v1383 = vsel %vm169, %v1122, 0
    %v1386 = vsel %vm169, %v1123, 0
    %v1389 = vsel %vm169, %v1124, 0
    %v1392 = vsel %vm169, %v1125, 0
    %v1395 = vsel %vm169, %v1126, 0
    %v1398 = vsel %vm169, %v1127, 0
    %v1401 = vsel %vm169, %v1128, 0
    %v1404 = vsel %vm169, %v1129, 0
    %v1407 = vsel %vm169, %v1130, 0
    %v1410 = vsel %vm169, %v1131, 0
    %v1413 = vsel %vm169, %v1132, 0
    %v1416 = vsel %vm169, %v1133, 0
    %v1419 = vsel %vm169, %v1134, 0
    %v1422 = vsel %vm169, %v1135, 0
    %v1425 = vsel %vm169, %v1136, 0
    %v1428 = vsel %vm169, %v1137, 0
    %v1431 = vsel %vm169, %v1138, 0
    %v1434 = vsel %vm169, %v1139, 0
    %v1437 = vsel %vm169, %v1140, 0
    %v1440 = vsel %vm169, %v1141, 0
    %v1443 = vsel %vm169, %v1142, 0
    %v1446 = vsel %vm169, %v1143, 0
    %v1449 = vsel %vm169, %v1144, 0
    %v1452 = vsel %vm169, %v1145, 0
    %v1455 = vsel %vm169, %v1146, 0
    %v1458 = vsel %vm169, %v1147, 0
    %v1461 = vsel %vm169, %v1148, 0
    %v1464 = vsel %vm169, %v1149, 0
    %v1467 = vsel %vm169, %v1150, 0
    %v1470 = vsel %vm169, %v1151, 0
    %v1473 = vsel %vm169, %v1152, 0
    %v1476 = vsel %vm169, %v1153, 0
    %v1479 = vsel %vm169, %v1154, 0
    %v1482 = vsel %vm169, %v1155, 0
    %v1485 = vsel %vm169, %v1156, 0
    %v1488 = vsel %vm169, %v1157, 0
    %v1491 = vsel %vm169, %v1158, 0
    %v1494 = vsel %vm169, %v1159, 0
    %v1497 = vsel %vm169, %v1160, 0
    %v1500 = vsel %vm169, %v1161, 0
    %v1503 = vsel %vm169, %v1162, 0
    %v1506 = vsel %vm169, %v1163, 0
    %v1509 = vsel %vm169, %v1164, 0
    %v1512 = vsel %vm169, %v1165, 0
    %v1515 = vsel %vm169, %v1166, 0
    %v1518 = vsel %vm169, %v1167, 0
    %v1521 = vsel %vm169, %v1168, 0
    %v1524 = vsel %vm169, %v1169, 0
    %v1527 = vsel %vm169, %v1170, 0
    %v1530 = vsel %vm169, %v1171, 0
    %v1533 = vsel %vm169, %v1172, 0
    %v1536 = vsel %vm169, %v1173, 0
    %v1539 = vsel %vm169, %v1174, 0
    %v1542 = vsel %vm169, %v1175, 0
    %v1545 = vsel %vm169, %v1176, 0
    %v1548 = vsel %vm169, %v1177, 0
    %v1551 = vsel %vm169, %v1178, 0
    %v1554 = vsel %vm169, %v1179, 0
    %v1557 = vsel %vm169, %v1180, 0
    %v1560 = vsel %vm169, %v1181, 0
    %v1563 = vsel %vm169, %v1182, 0
    %v1566 = vsel %vm169, %v1183, 0
    %v1569 = vsel %vm169, %v1184, 0
    %v1572 = vsel %vm169, %v1185, 0
    %v1575 = vsel %vm169, %v1186, 0
    %v1578 = vsel %vm169, %v1187, 0
    %v1581 = vsel %vm169, %v1188, 0
    %v1584 = vsel %vm169, %v1189, 0
    %1586 = vmatprep.subr.bf16.mxu0 0
    %1587 = vmatpush1.bf16.msra.mxu0 %v1198
    %1588 = vmatprep.subr.bf16.mxu0 0
    %1589 = vmatpush1.bf16.msra.mxu0 %v1199
    %1590 = vmatprep.subr.bf16.mxu0 0
    %1591 = vmatpush1.bf16.msra.mxu0 0
    %1592 = vmatprep.subr.bf16.mxu0 0
    %1593 = vmatpush1.bf16.msra.mxu0 0
    %1594 = vmatprep.subr.bf16.mxu0 0
    %1595 = vmatpush1.bf16.msra.mxu0 0
    %1596 = vmatprep.subr.bf16.mxu0 0
    %1597 = vmatpush1.bf16.msra.mxu0 0
    %1598 = vmatprep.subr.bf16.mxu0 0
    %1599 = vmatpush1.bf16.msra.mxu0 0
    %1600 = vmatprep.subr.bf16.mxu0 0
    %1601 = vmatpush1.bf16.msra.mxu0 0
    %1602 = vmatprep.subr.bf16.mxu0 0
    %1603 = vmatpush1.bf16.msra.mxu0 0
    %1604 = vmatprep.subr.bf16.mxu0 0
    %1605 = vmatpush1.bf16.msra.mxu0 0
    %1606 = vmatprep.subr.bf16.mxu0 0
    %1607 = vmatpush1.bf16.msra.mxu0 0
    %1608 = vmatprep.subr.bf16.mxu0 0
    %1609 = vmatpush1.bf16.msra.mxu0 0
    %1610 = vmatprep.subr.bf16.mxu0 0
    %1611 = vmatpush1.bf16.msra.mxu0 0
    %1612 = vmatprep.subr.bf16.mxu0 0
    %1613 = vmatpush1.bf16.msra.mxu0 0
    %1614 = vmatprep.subr.bf16.mxu0 0
    %1615 = vmatpush1.bf16.msra.mxu0 0
    %1616 = vmatprep.subr.bf16.mxu0 0
    %1617 = vmatpush1.bf16.msra.mxu0 0
    %1618 = vmatprep.mubr.bf16.mxu0 0
    %1619 = vmatmul.mubr.bf16.gmra.mrb[0].mxu0 %v1203
    %v1620 = vpop.f32.mrb[0].mxu0
    %v1621 = vadd.f32 %v548, %v1620
    %v1622 = vpop.f32.mrb[0].mxu0
    %v1623 = vpop.f32.mrb[0].mxu0
    %v1624 = vadd.f32 %v548, %v1623
    %v1625 = vpop.f32.mrb[0].mxu0
    %1626 = vmatprep.mubr.bf16.mxu0 0
    %1627 = vmatmul.mubr.bf16.gmra.mrb[0].mxu0 %v1206
    %v1628 = vpop.f32.mrb[0].mxu0
    %v1629 = vadd.f32 %v548, %v1628
    %v1630 = vpop.f32.mrb[0].mxu0
    %v1631 = vpop.f32.mrb[0].mxu0
    %v1632 = vadd.f32 %v548, %v1631
    %v1633 = vpop.f32.mrb[0].mxu0
    %1634 = vmatprep.mubr.bf16.mxu0 0
    %1635 = vmatmul.mubr.bf16.gmra.mrb[0].mxu0 %v1209
    %v1636 = vpop.f32.mrb[0].mxu0
    %v1637 = vadd.f32 %v548, %v1636
    %v1638 = vpop.f32.mrb[0].mxu0
    %v1639 = vpop.f32.mrb[0].mxu0
    %v1640 = vadd.f32 %v548, %v1639
    %v1641 = vpop.f32.mrb[0].mxu0
    %1642 = vmatprep.mubr.bf16.mxu0 0
    %1643 = vmatmul.mubr.bf16.gmra.mrb[0].mxu0 %v1212
    %v1644 = vpop.f32.mrb[0].mxu0
    %v1645 = vadd.f32 %v548, %v1644
    %v1646 = vpop.f32.mrb[0].mxu0
    %v1647 = vpop.f32.mrb[0].mxu0
    %v1648 = vadd.f32 %v548, %v1647
    %v1649 = vpop.f32.mrb[0].mxu0
    %1650 = vmatprep.mubr.bf16.mxu0 0
    %1651 = vmatmul.mubr.bf16.gmra.mrb[0].mxu0 %v1215
    %v1652 = vpop.f32.mrb[0].mxu0
    %v1653 = vadd.f32 %v548, %v1652
    %v1654 = vpop.f32.mrb[0].mxu0
    %v1655 = vpop.f32.mrb[0].mxu0
    %v1656 = vadd.f32 %v548, %v1655
    %v1657 = vpop.f32.mrb[0].mxu0
    %1658 = vmatprep.mubr.bf16.mxu0 0
    %1659 = vmatmul.mubr.bf16.gmra.mrb[0].mxu0 %v1218
    %v1660 = vpop.f32.mrb[0].mxu0
    %v1661 = vadd.f32 %v548, %v1660
    %v1662 = vpop.f32.mrb[0].mxu0
    %v1663 = vpop.f32.mrb[0].mxu0
    %v1664 = vadd.f32 %v548, %v1663
    %v1665 = vpop.f32.mrb[0].mxu0
    %1666 = vmatprep.mubr.bf16.mxu0 0
    %1667 = vmatmul.mubr.bf16.gmra.mrb[0].mxu0 %v1221
    %v1668 = vpop.f32.mrb[0].mxu0
    %v1669 = vadd.f32 %v548, %v1668
    %v1670 = vpop.f32.mrb[0].mxu0
    %v1671 = vpop.f32.mrb[0].mxu0
    %v1672 = vadd.f32 %v548, %v1671
    %v1673 = vpop.f32.mrb[0].mxu0
    %1674 = vmatprep.mubr.bf16.mxu0 0
    %1675 = vmatmul.mubr.bf16.gmra.mrb[0].mxu0 %v1224
    %v1676 = vpop.f32.mrb[0].mxu0
    %v1677 = vadd.f32 %v548, %v1676
    %v1678 = vpop.f32.mrb[0].mxu0
    %v1679 = vpop.f32.mrb[0].mxu0
    %v1680 = vadd.f32 %v548, %v1679
    %v1681 = vpop.f32.mrb[0].mxu0
    %1682 = vmatprep.mubr.bf16.mxu0 0
    %1683 = vmatmul.mubr.bf16.gmra.mrb[0].mxu0 %v1227
    %v1684 = vpop.f32.mrb[0].mxu0
    %v1685 = vadd.f32 %v548, %v1684
    %v1686 = vpop.f32.mrb[0].mxu0
    %v1687 = vpop.f32.mrb[0].mxu0
    %v1688 = vadd.f32 %v548, %v1687
    %v1689 = vpop.f32.mrb[0].mxu0
    %1690 = vmatprep.mubr.bf16.mxu0 0
    %1691 = vmatmul.mubr.bf16.gmra.mrb[0].mxu0 %v1230
    %v1692 = vpop.f32.mrb[0].mxu0
    %v1693 = vadd.f32 %v548, %v1692
    %v1694 = vpop.f32.mrb[0].mxu0
    %v1695 = vpop.f32.mrb[0].mxu0
    %v1696 = vadd.f32 %v548, %v1695
    %v1697 = vpop.f32.mrb[0].mxu0
    %1698 = vmatprep.mubr.bf16.mxu0 0
    %1699 = vmatmul.mubr.bf16.gmra.mrb[0].mxu0 %v1233
    %v1700 = vpop.f32.mrb[0].mxu0
    %v1701 = vadd.f32 %v548, %v1700
    %v1702 = vpop.f32.mrb[0].mxu0
    %v1703 = vpop.f32.mrb[0].mxu0
    %v1704 = vadd.f32 %v548, %v1703
    %v1705 = vpop.f32.mrb[0].mxu0
    %1706 = vmatprep.mubr.bf16.mxu0 0
    %1707 = vmatmul.mubr.bf16.gmra.mrb[0].mxu0 %v1236
    %v1708 = vpop.f32.mrb[0].mxu0
    %v1709 = vadd.f32 %v548, %v1708
    %v1710 = vpop.f32.mrb[0].mxu0
    %v1711 = vpop.f32.mrb[0].mxu0
    %v1712 = vadd.f32 %v548, %v1711
    %v1713 = vpop.f32.mrb[0].mxu0
    %1714 = vmatprep.mubr.bf16.mxu0 0
    %1715 = vmatmul.mubr.bf16.gmra.mrb[0].mxu0 %v1239
    %v1716 = vpop.f32.mrb[0].mxu0
    %v1717 = vadd.f32 %v548, %v1716
    %v1718 = vpop.f32.mrb[0].mxu0
    %v1719 = vpop.f32.mrb[0].mxu0
    %v1720 = vadd.f32 %v548, %v1719
    %v1721 = vpop.f32.mrb[0].mxu0
    %1722 = vmatprep.mubr.bf16.mxu0 0
    %1723 = vmatmul.mubr.bf16.gmra.mrb[0].mxu0 %v1242
    %v1724 = vpop.f32.mrb[0].mxu0
    %v1725 = vadd.f32 %v548, %v1724
    %v1726 = vpop.f32.mrb[0].mxu0
    %v1727 = vpop.f32.mrb[0].mxu0
    %v1728 = vadd.f32 %v548, %v1727
    %v1729 = vpop.f32.mrb[0].mxu0
    %1730 = vmatprep.mubr.bf16.mxu0 0
    %1731 = vmatmul.mubr.bf16.gmra.mrb[0].mxu0 %v1245
    %v1732 = vpop.f32.mrb[0].mxu0
    %v1733 = vadd.f32 %v548, %v1732
    %v1734 = vpop.f32.mrb[0].mxu0
    %v1735 = vpop.f32.mrb[0].mxu0
    %v1736 = vadd.f32 %v548, %v1735
    %v1737 = vpop.f32.mrb[0].mxu0
    %1738 = vmatprep.mubr.bf16.mxu0 0
    %1739 = vmatmul.mubr.bf16.gmra.mrb[0].mxu0 %v1248
    %v1740 = vpop.f32.mrb[0].mxu0
    %v1741 = vadd.f32 %v548, %v1740
    %v1742 = vpop.f32.mrb[0].mxu0
    %v1743 = vpop.f32.mrb[0].mxu0
    %v1744 = vadd.f32 %v548, %v1743
    %v1745 = vpop.f32.mrb[0].mxu0
    %1746 = vmatprep.mubr.bf16.mxu0 0
    %1747 = vmatmul.mubr.bf16.gmra.mrb[0].mxu0 %v1251
    %v1748 = vpop.f32.mrb[0].mxu0
    %v1749 = vadd.f32 %v548, %v1748
    %v1750 = vpop.f32.mrb[0].mxu0
    %v1751 = vpop.f32.mrb[0].mxu0
    %v1752 = vadd.f32 %v548, %v1751
    %v1753 = vpop.f32.mrb[0].mxu0
    %1754 = vmatprep.mubr.bf16.mxu0 0
    %1755 = vmatmul.mubr.bf16.gmra.mrb[0].mxu0 %v1254
    %v1756 = vpop.f32.mrb[0].mxu0
    %v1757 = vadd.f32 %v548, %v1756
    %v1758 = vpop.f32.mrb[0].mxu0
    %v1759 = vpop.f32.mrb[0].mxu0
    %v1760 = vadd.f32 %v548, %v1759
    %v1761 = vpop.f32.mrb[0].mxu0
    %1762 = vmatprep.mubr.bf16.mxu0 0
    %1763 = vmatmul.mubr.bf16.gmra.mrb[0].mxu0 %v1257
    %v1764 = vpop.f32.mrb[0].mxu0
    %v1765 = vadd.f32 %v548, %v1764
    %v1766 = vpop.f32.mrb[0].mxu0
    %v1767 = vpop.f32.mrb[0].mxu0
    %v1768 = vadd.f32 %v548, %v1767
    %v1769 = vpop.f32.mrb[0].mxu0
    %1770 = vmatprep.mubr.bf16.mxu0 0
    %1771 = vmatmul.mubr.bf16.gmra.mrb[0].mxu0 %v1260
    %v1772 = vpop.f32.mrb[0].mxu0
    %v1773 = vadd.f32 %v548, %v1772
    %v1774 = vpop.f32.mrb[0].mxu0
    %v1775 = vpop.f32.mrb[0].mxu0
    %v1776 = vadd.f32 %v548, %v1775
    %v1777 = vpop.f32.mrb[0].mxu0
    %1778 = vmatprep.mubr.bf16.mxu0 0
    %1779 = vmatmul.mubr.bf16.gmra.mrb[0].mxu0 %v1263
    %v1780 = vpop.f32.mrb[0].mxu0
    %v1781 = vadd.f32 %v548, %v1780
    %v1782 = vpop.f32.mrb[0].mxu0
    %v1783 = vpop.f32.mrb[0].mxu0
    %v1784 = vadd.f32 %v548, %v1783
    %v1785 = vpop.f32.mrb[0].mxu0
    %1786 = vmatprep.mubr.bf16.mxu0 0
    %1787 = vmatmul.mubr.bf16.gmra.mrb[0].mxu0 %v1266
    %v1788 = vpop.f32.mrb[0].mxu0
    %v1789 = vadd.f32 %v548, %v1788
    %v1790 = vpop.f32.mrb[0].mxu0
    %v1791 = vpop.f32.mrb[0].mxu0
    %v1792 = vadd.f32 %v548, %v1791
    %v1793 = vpop.f32.mrb[0].mxu0
    %1794 = vmatprep.mubr.bf16.mxu0 0
    %1795 = vmatmul.mubr.bf16.gmra.mrb[0].mxu0 %v1269
    %v1796 = vpop.f32.mrb[0].mxu0
    %v1797 = vadd.f32 %v548, %v1796
    %v1798 = vpop.f32.mrb[0].mxu0
    %v1799 = vpop.f32.mrb[0].mxu0
    %v1800 = vadd.f32 %v548, %v1799
    %v1801 = vpop.f32.mrb[0].mxu0
    %1802 = vmatprep.mubr.bf16.mxu0 0
    %1803 = vmatmul.mubr.bf16.gmra.mrb[0].mxu0 %v1272
    %v1804 = vpop.f32.mrb[0].mxu0
    %v1805 = vadd.f32 %v548, %v1804
    %v1806 = vpop.f32.mrb[0].mxu0
    %v1807 = vpop.f32.mrb[0].mxu0
    %v1808 = vadd.f32 %v548, %v1807
    %v1809 = vpop.f32.mrb[0].mxu0
    %1810 = vmatprep.mubr.bf16.mxu0 0
    %1811 = vmatmul.mubr.bf16.gmra.mrb[0].mxu0 %v1275
    %v1812 = vpop.f32.mrb[0].mxu0
    %v1813 = vadd.f32 %v548, %v1812
    %v1814 = vpop.f32.mrb[0].mxu0
    %v1815 = vpop.f32.mrb[0].mxu0
    %v1816 = vadd.f32 %v548, %v1815
    %v1817 = vpop.f32.mrb[0].mxu0
    %1818 = vmatprep.mubr.bf16.mxu0 0
    %1819 = vmatmul.mubr.bf16.gmra.mrb[0].mxu0 %v1278
    %v1820 = vpop.f32.mrb[0].mxu0
    %v1821 = vadd.f32 %v548, %v1820
    %v1822 = vpop.f32.mrb[0].mxu0
    %v1823 = vpop.f32.mrb[0].mxu0
    %v1824 = vadd.f32 %v548, %v1823
    %v1825 = vpop.f32.mrb[0].mxu0
    %1826 = vmatprep.mubr.bf16.mxu0 0
    %1827 = vmatmul.mubr.bf16.gmra.mrb[0].mxu0 %v1281
    %v1828 = vpop.f32.mrb[0].mxu0
    %v1829 = vadd.f32 %v548, %v1828
    %v1830 = vpop.f32.mrb[0].mxu0
    %v1831 = vpop.f32.mrb[0].mxu0
    %v1832 = vadd.f32 %v548, %v1831
    %v1833 = vpop.f32.mrb[0].mxu0
    %1834 = vmatprep.mubr.bf16.mxu0 0
    %1835 = vmatmul.mubr.bf16.gmra.mrb[0].mxu0 %v1284
    %v1836 = vpop.f32.mrb[0].mxu0
    %v1837 = vadd.f32 %v548, %v1836
    %v1838 = vpop.f32.mrb[0].mxu0
    %v1839 = vpop.f32.mrb[0].mxu0
    %v1840 = vadd.f32 %v548, %v1839
    %v1841 = vpop.f32.mrb[0].mxu0
    %1842 = vmatprep.mubr.bf16.mxu0 0
    %1843 = vmatmul.mubr.bf16.gmra.mrb[0].mxu0 %v1287
    %v1844 = vpop.f32.mrb[0].mxu0
    %v1845 = vadd.f32 %v548, %v1844
    %v1846 = vpop.f32.mrb[0].mxu0
    %v1847 = vpop.f32.mrb[0].mxu0
    %v1848 = vadd.f32 %v548, %v1847
    %v1849 = vpop.f32.mrb[0].mxu0
    %1850 = vmatprep.mubr.bf16.mxu0 0
    %1851 = vmatmul.mubr.bf16.gmra.mrb[0].mxu0 %v1290
    %v1852 = vpop.f32.mrb[0].mxu0
    %v1853 = vadd.f32 %v548, %v1852
    %v1854 = vpop.f32.mrb[0].mxu0
    %v1855 = vpop.f32.mrb[0].mxu0
    %v1856 = vadd.f32 %v548, %v1855
    %v1857 = vpop.f32.mrb[0].mxu0
    %1858 = vmatprep.mubr.bf16.mxu0 0
    %1859 = vmatmul.mubr.bf16.gmra.mrb[0].mxu0 %v1293
    %v1860 = vpop.f32.mrb[0].mxu0
    %v1861 = vadd.f32 %v548, %v1860
    %v1862 = vpop.f32.mrb[0].mxu0
    %v1863 = vpop.f32.mrb[0].mxu0
    %v1864 = vadd.f32 %v548, %v1863
    %v1865 = vpop.f32.mrb[0].mxu0
    %1866 = vmatprep.mubr.bf16.mxu0 0
    %1867 = vmatmul.mubr.bf16.gmra.mrb[0].mxu0 %v1296
    %v1868 = vpop.f32.mrb[0].mxu0
    %v1869 = vadd.f32 %v548, %v1868
    %v1870 = vpop.f32.mrb[0].mxu0
    %v1871 = vpop.f32.mrb[0].mxu0
    %v1872 = vadd.f32 %v548, %v1871
    %v1873 = vpop.f32.mrb[0].mxu0
    %1874 = vmatprep.mubr.bf16.mxu0 0
    %1875 = vmatmul.mubr.bf16.gmra.mrb[0].mxu0 %v1299
    %v1876 = vpop.f32.mrb[0].mxu0
    %v1877 = vadd.f32 %v548, %v1876
    %v1878 = vpop.f32.mrb[0].mxu0
    %v1879 = vpop.f32.mrb[0].mxu0
    %v1880 = vadd.f32 %v548, %v1879
    %v1881 = vpop.f32.mrb[0].mxu0
    %1882 = vmatprep.mubr.bf16.mxu0 0
    %1883 = vmatmul.mubr.bf16.gmra.mrb[0].mxu0 %v1302
    %v1884 = vpop.f32.mrb[0].mxu0
    %v1885 = vadd.f32 %v548, %v1884
    %v1886 = vpop.f32.mrb[0].mxu0
    %v1887 = vpop.f32.mrb[0].mxu0
    %v1888 = vadd.f32 %v548, %v1887
    %v1889 = vpop.f32.mrb[0].mxu0
    %1890 = vmatprep.mubr.bf16.mxu0 0
    %1891 = vmatmul.mubr.bf16.gmra.mrb[0].mxu0 %v1305
    %v1892 = vpop.f32.mrb[0].mxu0
    %v1893 = vadd.f32 %v548, %v1892
    %v1894 = vpop.f32.mrb[0].mxu0
    %v1895 = vpop.f32.mrb[0].mxu0
    %v1896 = vadd.f32 %v548, %v1895
    %v1897 = vpop.f32.mrb[0].mxu0
    %1898 = vmatprep.mubr.bf16.mxu0 0
    %1899 = vmatmul.mubr.bf16.gmra.mrb[0].mxu0 %v1308
    %v1900 = vpop.f32.mrb[0].mxu0
    %v1901 = vadd.f32 %v548, %v1900
    %v1902 = vpop.f32.mrb[0].mxu0
    %v1903 = vpop.f32.mrb[0].mxu0
    %v1904 = vadd.f32 %v548, %v1903
    %v1905 = vpop.f32.mrb[0].mxu0
    %1906 = vmatprep.mubr.bf16.mxu0 0
    %1907 = vmatmul.mubr.bf16.gmra.mrb[0].mxu0 %v1311
    %v1908 = vpop.f32.mrb[0].mxu0
    %v1909 = vadd.f32 %v548, %v1908
    %v1910 = vpop.f32.mrb[0].mxu0
    %v1911 = vpop.f32.mrb[0].mxu0
    %v1912 = vadd.f32 %v548, %v1911
    %v1913 = vpop.f32.mrb[0].mxu0
    %1914 = vmatprep.mubr.bf16.mxu0 0
    %1915 = vmatmul.mubr.bf16.gmra.mrb[0].mxu0 %v1314
    %v1916 = vpop.f32.mrb[0].mxu0
    %v1917 = vadd.f32 %v548, %v1916
    %v1918 = vpop.f32.mrb[0].mxu0
    %v1919 = vpop.f32.mrb[0].mxu0
    %v1920 = vadd.f32 %v548, %v1919
    %v1921 = vpop.f32.mrb[0].mxu0
    %1922 = vmatprep.mubr.bf16.mxu0 0
    %1923 = vmatmul.mubr.bf16.gmra.mrb[0].mxu0 %v1317
    %v1924 = vpop.f32.mrb[0].mxu0
    %v1925 = vadd.f32 %v548, %v1924
    %v1926 = vpop.f32.mrb[0].mxu0
    %v1927 = vpop.f32.mrb[0].mxu0
    %v1928 = vadd.f32 %v548, %v1927
    %v1929 = vpop.f32.mrb[0].mxu0
    %1930 = vmatprep.mubr.bf16.mxu0 0
    %1931 = vmatmul.mubr.bf16.gmra.mrb[0].mxu0 %v1320
    %v1932 = vpop.f32.mrb[0].mxu0
    %v1933 = vadd.f32 %v548, %v1932
    %v1934 = vpop.f32.mrb[0].mxu0
    %v1935 = vpop.f32.mrb[0].mxu0
    %v1936 = vadd.f32 %v548, %v1935
    %v1937 = vpop.f32.mrb[0].mxu0
    %1938 = vmatprep.mubr.bf16.mxu0 0
    %1939 = vmatmul.mubr.bf16.gmra.mrb[0].mxu0 %v1323
    %v1940 = vpop.f32.mrb[0].mxu0
    %v1941 = vadd.f32 %v548, %v1940
    %v1942 = vpop.f32.mrb[0].mxu0
    %v1943 = vpop.f32.mrb[0].mxu0
    %v1944 = vadd.f32 %v548, %v1943
    %v1945 = vpop.f32.mrb[0].mxu0
    %1946 = vmatprep.mubr.bf16.mxu0 0
    %1947 = vmatmul.mubr.bf16.gmra.mrb[0].mxu0 %v1326
    %v1948 = vpop.f32.mrb[0].mxu0
    %v1949 = vadd.f32 %v548, %v1948
    %v1950 = vpop.f32.mrb[0].mxu0
    %v1951 = vpop.f32.mrb[0].mxu0
    %v1952 = vadd.f32 %v548, %v1951
    %v1953 = vpop.f32.mrb[0].mxu0
    %1954 = vmatprep.mubr.bf16.mxu0 0
    %1955 = vmatmul.mubr.bf16.gmra.mrb[0].mxu0 %v1329
    %v1956 = vpop.f32.mrb[0].mxu0
    %v1957 = vadd.f32 %v548, %v1956
    %v1958 = vpop.f32.mrb[0].mxu0
    %v1959 = vpop.f32.mrb[0].mxu0
    %v1960 = vadd.f32 %v548, %v1959
    %v1961 = vpop.f32.mrb[0].mxu0
    %1962 = vmatprep.mubr.bf16.mxu0 0
    %1963 = vmatmul.mubr.bf16.gmra.mrb[0].mxu0 %v1332
    %v1964 = vpop.f32.mrb[0].mxu0
    %v1965 = vadd.f32 %v548, %v1964
    %v1966 = vpop.f32.mrb[0].mxu0
    %v1967 = vpop.f32.mrb[0].mxu0
    %v1968 = vadd.f32 %v548, %v1967
    %v1969 = vpop.f32.mrb[0].mxu0
    %1970 = vmatprep.mubr.bf16.mxu0 0
    %1971 = vmatmul.mubr.bf16.gmra.mrb[0].mxu0 %v1335
    %v1972 = vpop.f32.mrb[0].mxu0
    %v1973 = vadd.f32 %v548, %v1972
    %v1974 = vpop.f32.mrb[0].mxu0
    %v1975 = vpop.f32.mrb[0].mxu0
    %v1976 = vadd.f32 %v548, %v1975
    %v1977 = vpop.f32.mrb[0].mxu0
    %1978 = vmatprep.mubr.bf16.mxu0 0
    %1979 = vmatmul.mubr.bf16.gmra.mrb[0].mxu0 %v1338
    %v1980 = vpop.f32.mrb[0].mxu0
    %v1981 = vadd.f32 %v548, %v1980
    %v1982 = vpop.f32.mrb[0].mxu0
    %v1983 = vpop.f32.mrb[0].mxu0
    %v1984 = vadd.f32 %v548, %v1983
    %v1985 = vpop.f32.mrb[0].mxu0
    %1986 = vmatprep.mubr.bf16.mxu0 0
    %1987 = vmatmul.mubr.bf16.gmra.mrb[0].mxu0 %v1341
    %v1988 = vpop.f32.mrb[0].mxu0
    %v1989 = vadd.f32 %v548, %v1988
    %v1990 = vpop.f32.mrb[0].mxu0
    %v1991 = vpop.f32.mrb[0].mxu0
    %v1992 = vadd.f32 %v548, %v1991
    %v1993 = vpop.f32.mrb[0].mxu0
    %1994 = vmatprep.mubr.bf16.mxu0 0
    %1995 = vmatmul.mubr.bf16.gmra.mrb[0].mxu0 %v1344
    %v1996 = vpop.f32.mrb[0].mxu0
    %v1997 = vadd.f32 %v548, %v1996
    %v1998 = vpop.f32.mrb[0].mxu0
    %v1999 = vpop.f32.mrb[0].mxu0
    %v2000 = vadd.f32 %v548, %v1999
    %v2001 = vpop.f32.mrb[0].mxu0
    %2002 = vmatprep.mubr.bf16.mxu0 0
    %2003 = vmatmul.mubr.bf16.gmra.mrb[0].mxu0 %v1347
    %v2004 = vpop.f32.mrb[0].mxu0
    %v2005 = vadd.f32 %v548, %v2004
    %v2006 = vpop.f32.mrb[0].mxu0
    %v2007 = vpop.f32.mrb[0].mxu0
    %v2008 = vadd.f32 %v548, %v2007
    %v2009 = vpop.f32.mrb[0].mxu0
    %2010 = vmatprep.mubr.bf16.mxu0 0
    %2011 = vmatmul.mubr.bf16.gmra.mrb[0].mxu0 %v1350
    %v2012 = vpop.f32.mrb[0].mxu0
    %v2013 = vadd.f32 %v548, %v2012
    %v2014 = vpop.f32.mrb[0].mxu0
    %v2015 = vpop.f32.mrb[0].mxu0
    %v2016 = vadd.f32 %v548, %v2015
    %v2017 = vpop.f32.mrb[0].mxu0
    %2018 = vmatprep.mubr.bf16.mxu0 0
    %2019 = vmatmul.mubr.bf16.gmra.mrb[0].mxu0 %v1353
    %v2020 = vpop.f32.mrb[0].mxu0
    %v2021 = vadd.f32 %v548, %v2020
    %v2022 = vpop.f32.mrb[0].mxu0
    %v2023 = vpop.f32.mrb[0].mxu0
    %v2024 = vadd.f32 %v548, %v2023
    %v2025 = vpop.f32.mrb[0].mxu0
    %2026 = vmatprep.mubr.bf16.mxu0 0
    %2027 = vmatmul.mubr.bf16.gmra.mrb[0].mxu0 %v1356
    %v2028 = vpop.f32.mrb[0].mxu0
    %v2029 = vadd.f32 %v548, %v2028
    %v2030 = vpop.f32.mrb[0].mxu0
    %v2031 = vpop.f32.mrb[0].mxu0
    %v2032 = vadd.f32 %v548, %v2031
    %v2033 = vpop.f32.mrb[0].mxu0
    %2034 = vmatprep.mubr.bf16.mxu0 0
    %2035 = vmatmul.mubr.bf16.gmra.mrb[0].mxu0 %v1359
    %v2036 = vpop.f32.mrb[0].mxu0
    %v2037 = vadd.f32 %v548, %v2036
    %v2038 = vpop.f32.mrb[0].mxu0
    %v2039 = vpop.f32.mrb[0].mxu0
    %v2040 = vadd.f32 %v548, %v2039
    %v2041 = vpop.f32.mrb[0].mxu0
    %2042 = vmatprep.mubr.bf16.mxu0 0
    %2043 = vmatmul.mubr.bf16.gmra.mrb[0].mxu0 %v1362
    %v2044 = vpop.f32.mrb[0].mxu0
    %v2045 = vadd.f32 %v548, %v2044
    %v2046 = vpop.f32.mrb[0].mxu0
    %v2047 = vpop.f32.mrb[0].mxu0
    %v2048 = vadd.f32 %v548, %v2047
    %v2049 = vpop.f32.mrb[0].mxu0
    %2050 = vmatprep.mubr.bf16.mxu0 0
    %2051 = vmatmul.mubr.bf16.gmra.mrb[0].mxu0 %v1365
    %v2052 = vpop.f32.mrb[0].mxu0
    %v2053 = vadd.f32 %v548, %v2052
    %v2054 = vpop.f32.mrb[0].mxu0
    %v2055 = vpop.f32.mrb[0].mxu0
    %v2056 = vadd.f32 %v548, %v2055
    %v2057 = vpop.f32.mrb[0].mxu0
    %2058 = vmatprep.mubr.bf16.mxu0 0
    %2059 = vmatmul.mubr.bf16.gmra.mrb[0].mxu0 %v1368
    %v2060 = vpop.f32.mrb[0].mxu0
    %v2061 = vadd.f32 %v548, %v2060
    %v2062 = vpop.f32.mrb[0].mxu0
    %v2063 = vpop.f32.mrb[0].mxu0
    %v2064 = vadd.f32 %v548, %v2063
    %v2065 = vpop.f32.mrb[0].mxu0
    %2066 = vmatprep.mubr.bf16.mxu0 0
    %2067 = vmatmul.mubr.bf16.gmra.mrb[0].mxu0 %v1371
    %v2068 = vpop.f32.mrb[0].mxu0
    %v2069 = vadd.f32 %v548, %v2068
    %v2070 = vpop.f32.mrb[0].mxu0
    %v2071 = vpop.f32.mrb[0].mxu0
    %v2072 = vadd.f32 %v548, %v2071
    %v2073 = vpop.f32.mrb[0].mxu0
    %2074 = vmatprep.mubr.bf16.mxu0 0
    %2075 = vmatmul.mubr.bf16.gmra.mrb[0].mxu0 %v1374
    %v2076 = vpop.f32.mrb[0].mxu0
    %v2077 = vadd.f32 %v548, %v2076
    %v2078 = vpop.f32.mrb[0].mxu0
    %v2079 = vpop.f32.mrb[0].mxu0
    %v2080 = vadd.f32 %v548, %v2079
    %v2081 = vpop.f32.mrb[0].mxu0
    %2082 = vmatprep.mubr.bf16.mxu0 0
    %2083 = vmatmul.mubr.bf16.gmra.mrb[0].mxu0 %v1377
    %v2084 = vpop.f32.mrb[0].mxu0
    %v2085 = vadd.f32 %v548, %v2084
    %v2086 = vpop.f32.mrb[0].mxu0
    %v2087 = vpop.f32.mrb[0].mxu0
    %v2088 = vadd.f32 %v548, %v2087
    %v2089 = vpop.f32.mrb[0].mxu0
    %2090 = vmatprep.mubr.bf16.mxu0 0
    %2091 = vmatmul.mubr.bf16.gmra.mrb[0].mxu0 %v1380
    %v2092 = vpop.f32.mrb[0].mxu0
    %v2093 = vadd.f32 %v548, %v2092
    %v2094 = vpop.f32.mrb[0].mxu0
    %v2095 = vpop.f32.mrb[0].mxu0
    %v2096 = vadd.f32 %v548, %v2095
    %v2097 = vpop.f32.mrb[0].mxu0
    %2098 = vmatprep.mubr.bf16.mxu0 0
    %2099 = vmatmul.mubr.bf16.gmra.mrb[0].mxu0 %v1383
    %v2100 = vpop.f32.mrb[0].mxu0
    %v2101 = vadd.f32 %v548, %v2100
    %v2102 = vpop.f32.mrb[0].mxu0
    %v2103 = vpop.f32.mrb[0].mxu0
    %v2104 = vadd.f32 %v548, %v2103
    %v2105 = vpop.f32.mrb[0].mxu0
    %2106 = vmatprep.mubr.bf16.mxu0 0
    %2107 = vmatmul.mubr.bf16.gmra.mrb[0].mxu0 %v1386
    %v2108 = vpop.f32.mrb[0].mxu0
    %v2109 = vadd.f32 %v548, %v2108
    %v2110 = vpop.f32.mrb[0].mxu0
    %v2111 = vpop.f32.mrb[0].mxu0
    %v2112 = vadd.f32 %v548, %v2111
    %v2113 = vpop.f32.mrb[0].mxu0
    %2114 = vmatprep.mubr.bf16.mxu0 0
    %2115 = vmatmul.mubr.bf16.gmra.mrb[0].mxu0 %v1389
    %v2116 = vpop.f32.mrb[0].mxu0
    %v2117 = vadd.f32 %v548, %v2116
    %v2118 = vpop.f32.mrb[0].mxu0
    %v2119 = vpop.f32.mrb[0].mxu0
    %v2120 = vadd.f32 %v548, %v2119
    %v2121 = vpop.f32.mrb[0].mxu0
    %2122 = vmatprep.mubr.bf16.mxu0 0
    %2123 = vmatmul.mubr.bf16.gmra.mrb[0].mxu0 %v1392
    %v2124 = vpop.f32.mrb[0].mxu0
    %v2125 = vadd.f32 %v548, %v2124
    %v2126 = vpop.f32.mrb[0].mxu0
    %v2127 = vpop.f32.mrb[0].mxu0
    %v2128 = vadd.f32 %v548, %v2127
    %v2129 = vpop.f32.mrb[0].mxu0
    %2130 = vmatprep.mubr.bf16.mxu0 0
    %2131 = vmatmul.mubr.bf16.gmra.mrb[0].mxu0 %v1395
    %v2132 = vpop.f32.mrb[0].mxu0
    %v2133 = vadd.f32 %v548, %v2132
    %v2134 = vpop.f32.mrb[0].mxu0
    %v2135 = vpop.f32.mrb[0].mxu0
    %v2136 = vadd.f32 %v548, %v2135
    %v2137 = vpop.f32.mrb[0].mxu0
    %2138 = vmatprep.mubr.bf16.mxu0 0
    %2139 = vmatmul.mubr.bf16.gmra.mrb[0].mxu0 %v1398
    %v2140 = vpop.f32.mrb[0].mxu0
    %v2141 = vadd.f32 %v548, %v2140
    %v2142 = vpop.f32.mrb[0].mxu0
    %v2143 = vpop.f32.mrb[0].mxu0
    %v2144 = vadd.f32 %v548, %v2143
    %v2145 = vpop.f32.mrb[0].mxu0
    %2146 = vmatprep.mubr.bf16.mxu0 0
    %2147 = vmatmul.mubr.bf16.gmra.mrb[0].mxu0 %v1401
    %v2148 = vpop.f32.mrb[0].mxu0
    %v2149 = vadd.f32 %v548, %v2148
    %v2150 = vpop.f32.mrb[0].mxu0
    %v2151 = vpop.f32.mrb[0].mxu0
    %v2152 = vadd.f32 %v548, %v2151
    %v2153 = vpop.f32.mrb[0].mxu0
    %2154 = vmatprep.mubr.bf16.mxu0 0
    %2155 = vmatmul.mubr.bf16.gmra.mrb[0].mxu0 %v1404
    %v2156 = vpop.f32.mrb[0].mxu0
    %v2157 = vadd.f32 %v548, %v2156
    %v2158 = vpop.f32.mrb[0].mxu0
    %v2159 = vpop.f32.mrb[0].mxu0
    %v2160 = vadd.f32 %v548, %v2159
    %v2161 = vpop.f32.mrb[0].mxu0
    %2162 = vmatprep.mubr.bf16.mxu0 0
    %2163 = vmatmul.mubr.bf16.gmra.mrb[0].mxu0 %v1407
    %v2164 = vpop.f32.mrb[0].mxu0
    %v2165 = vadd.f32 %v548, %v2164
    %v2166 = vpop.f32.mrb[0].mxu0
    %v2167 = vpop.f32.mrb[0].mxu0
    %v2168 = vadd.f32 %v548, %v2167
    %v2169 = vpop.f32.mrb[0].mxu0
    %2170 = vmatprep.mubr.bf16.mxu0 0
    %2171 = vmatmul.mubr.bf16.gmra.mrb[0].mxu0 %v1410
    %v2172 = vpop.f32.mrb[0].mxu0
    %v2173 = vadd.f32 %v548, %v2172
    %v2174 = vpop.f32.mrb[0].mxu0
    %v2175 = vpop.f32.mrb[0].mxu0
    %v2176 = vadd.f32 %v548, %v2175
    %v2177 = vpop.f32.mrb[0].mxu0
    %2178 = vmatprep.mubr.bf16.mxu0 0
    %2179 = vmatmul.mubr.bf16.gmra.mrb[0].mxu0 %v1413
    %v2180 = vpop.f32.mrb[0].mxu0
    %v2181 = vadd.f32 %v548, %v2180
    %v2182 = vpop.f32.mrb[0].mxu0
    %v2183 = vpop.f32.mrb[0].mxu0
    %v2184 = vadd.f32 %v548, %v2183
    %v2185 = vpop.f32.mrb[0].mxu0
    %2186 = vmatprep.mubr.bf16.mxu0 0
    %2187 = vmatmul.mubr.bf16.gmra.mrb[0].mxu0 %v1416
    %v2188 = vpop.f32.mrb[0].mxu0
    %v2189 = vadd.f32 %v548, %v2188
    %v2190 = vpop.f32.mrb[0].mxu0
    %v2191 = vpop.f32.mrb[0].mxu0
    %v2192 = vadd.f32 %v548, %v2191
    %v2193 = vpop.f32.mrb[0].mxu0
    %2194 = vmatprep.mubr.bf16.mxu0 0
    %2195 = vmatmul.mubr.bf16.gmra.mrb[0].mxu0 %v1419
    %v2196 = vpop.f32.mrb[0].mxu0
    %v2197 = vadd.f32 %v548, %v2196
    %v2198 = vpop.f32.mrb[0].mxu0
    %v2199 = vpop.f32.mrb[0].mxu0
    %v2200 = vadd.f32 %v548, %v2199
    %v2201 = vpop.f32.mrb[0].mxu0
    %2202 = vmatprep.mubr.bf16.mxu0 0
    %2203 = vmatmul.mubr.bf16.gmra.mrb[0].mxu0 %v1422
    %v2204 = vpop.f32.mrb[0].mxu0
    %v2205 = vadd.f32 %v548, %v2204
    %v2206 = vpop.f32.mrb[0].mxu0
    %v2207 = vpop.f32.mrb[0].mxu0
    %v2208 = vadd.f32 %v548, %v2207
    %v2209 = vpop.f32.mrb[0].mxu0
    %2210 = vmatprep.mubr.bf16.mxu0 0
    %2211 = vmatmul.mubr.bf16.gmra.mrb[0].mxu0 %v1425
    %v2212 = vpop.f32.mrb[0].mxu0
    %v2213 = vadd.f32 %v548, %v2212
    %v2214 = vpop.f32.mrb[0].mxu0
    %v2215 = vpop.f32.mrb[0].mxu0
    %v2216 = vadd.f32 %v548, %v2215
    %v2217 = vpop.f32.mrb[0].mxu0
    %2218 = vmatprep.mubr.bf16.mxu0 0
    %2219 = vmatmul.mubr.bf16.gmra.mrb[0].mxu0 %v1428
    %v2220 = vpop.f32.mrb[0].mxu0
    %v2221 = vadd.f32 %v548, %v2220
    %v2222 = vpop.f32.mrb[0].mxu0
    %v2223 = vpop.f32.mrb[0].mxu0
    %v2224 = vadd.f32 %v548, %v2223
    %v2225 = vpop.f32.mrb[0].mxu0
    %2226 = vmatprep.mubr.bf16.mxu0 0
    %2227 = vmatmul.mubr.bf16.gmra.mrb[0].mxu0 %v1431
    %v2228 = vpop.f32.mrb[0].mxu0
    %v2229 = vadd.f32 %v548, %v2228
    %v2230 = vpop.f32.mrb[0].mxu0
    %v2231 = vpop.f32.mrb[0].mxu0
    %v2232 = vadd.f32 %v548, %v2231
    %v2233 = vpop.f32.mrb[0].mxu0
    %2234 = vmatprep.mubr.bf16.mxu0 0
    %2235 = vmatmul.mubr.bf16.gmra.mrb[0].mxu0 %v1434
    %v2236 = vpop.f32.mrb[0].mxu0
    %v2237 = vadd.f32 %v548, %v2236
    %v2238 = vpop.f32.mrb[0].mxu0
    %v2239 = vpop.f32.mrb[0].mxu0
    %v2240 = vadd.f32 %v548, %v2239
    %v2241 = vpop.f32.mrb[0].mxu0
    %2242 = vmatprep.mubr.bf16.mxu0 0
    %2243 = vmatmul.mubr.bf16.gmra.mrb[0].mxu0 %v1437
    %v2244 = vpop.f32.mrb[0].mxu0
    %v2245 = vadd.f32 %v548, %v2244
    %v2246 = vpop.f32.mrb[0].mxu0
    %v2247 = vpop.f32.mrb[0].mxu0
    %v2248 = vadd.f32 %v548, %v2247
    %v2249 = vpop.f32.mrb[0].mxu0
    %2250 = vmatprep.mubr.bf16.mxu0 0
    %2251 = vmatmul.mubr.bf16.gmra.mrb[0].mxu0 %v1440
    %v2252 = vpop.f32.mrb[0].mxu0
    %v2253 = vadd.f32 %v548, %v2252
    %v2254 = vpop.f32.mrb[0].mxu0
    %v2255 = vpop.f32.mrb[0].mxu0
    %v2256 = vadd.f32 %v548, %v2255
    %v2257 = vpop.f32.mrb[0].mxu0
    %2258 = vmatprep.mubr.bf16.mxu0 0
    %2259 = vmatmul.mubr.bf16.gmra.mrb[0].mxu0 %v1443
    %v2260 = vpop.f32.mrb[0].mxu0
    %v2261 = vadd.f32 %v548, %v2260
    %v2262 = vpop.f32.mrb[0].mxu0
    %v2263 = vpop.f32.mrb[0].mxu0
    %v2264 = vadd.f32 %v548, %v2263
    %v2265 = vpop.f32.mrb[0].mxu0
    %2266 = vmatprep.mubr.bf16.mxu0 0
    %2267 = vmatmul.mubr.bf16.gmra.mrb[0].mxu0 %v1446
    %v2268 = vpop.f32.mrb[0].mxu0
    %v2269 = vadd.f32 %v548, %v2268
    %v2270 = vpop.f32.mrb[0].mxu0
    %v2271 = vpop.f32.mrb[0].mxu0
    %v2272 = vadd.f32 %v548, %v2271
    %v2273 = vpop.f32.mrb[0].mxu0
    %2274 = vmatprep.mubr.bf16.mxu0 0
    %2275 = vmatmul.mubr.bf16.gmra.mrb[0].mxu0 %v1449
    %v2276 = vpop.f32.mrb[0].mxu0
    %v2277 = vadd.f32 %v548, %v2276
    %v2278 = vpop.f32.mrb[0].mxu0
    %v2279 = vpop.f32.mrb[0].mxu0
    %v2280 = vadd.f32 %v548, %v2279
    %v2281 = vpop.f32.mrb[0].mxu0
    %2282 = vmatprep.mubr.bf16.mxu0 0
    %2283 = vmatmul.mubr.bf16.gmra.mrb[0].mxu0 %v1452
    %v2284 = vpop.f32.mrb[0].mxu0
    %v2285 = vadd.f32 %v548, %v2284
    %v2286 = vpop.f32.mrb[0].mxu0
    %v2287 = vpop.f32.mrb[0].mxu0
    %v2288 = vadd.f32 %v548, %v2287
    %v2289 = vpop.f32.mrb[0].mxu0
    %2290 = vmatprep.mubr.bf16.mxu0 0
    %2291 = vmatmul.mubr.bf16.gmra.mrb[0].mxu0 %v1455
    %v2292 = vpop.f32.mrb[0].mxu0
    %v2293 = vadd.f32 %v548, %v2292
    %v2294 = vpop.f32.mrb[0].mxu0
    %v2295 = vpop.f32.mrb[0].mxu0
    %v2296 = vadd.f32 %v548, %v2295
    %v2297 = vpop.f32.mrb[0].mxu0
    %2298 = vmatprep.mubr.bf16.mxu0 0
    %2299 = vmatmul.mubr.bf16.gmra.mrb[0].mxu0 %v1458
    %v2300 = vpop.f32.mrb[0].mxu0
    %v2301 = vadd.f32 %v548, %v2300
    %v2302 = vpop.f32.mrb[0].mxu0
    %v2303 = vpop.f32.mrb[0].mxu0
    %v2304 = vadd.f32 %v548, %v2303
    %v2305 = vpop.f32.mrb[0].mxu0
    %2306 = vmatprep.mubr.bf16.mxu0 0
    %2307 = vmatmul.mubr.bf16.gmra.mrb[0].mxu0 %v1461
    %v2308 = vpop.f32.mrb[0].mxu0
    %v2309 = vadd.f32 %v548, %v2308
    %v2310 = vpop.f32.mrb[0].mxu0
    %v2311 = vpop.f32.mrb[0].mxu0
    %v2312 = vadd.f32 %v548, %v2311
    %v2313 = vpop.f32.mrb[0].mxu0
    %2314 = vmatprep.mubr.bf16.mxu0 0
    %2315 = vmatmul.mubr.bf16.gmra.mrb[0].mxu0 %v1464
    %v2316 = vpop.f32.mrb[0].mxu0
    %v2317 = vadd.f32 %v548, %v2316
    %v2318 = vpop.f32.mrb[0].mxu0
    %v2319 = vpop.f32.mrb[0].mxu0
    %v2320 = vadd.f32 %v548, %v2319
    %v2321 = vpop.f32.mrb[0].mxu0
    %2322 = vmatprep.mubr.bf16.mxu0 0
    %2323 = vmatmul.mubr.bf16.gmra.mrb[0].mxu0 %v1467
    %v2324 = vpop.f32.mrb[0].mxu0
    %v2325 = vadd.f32 %v548, %v2324
    %v2326 = vpop.f32.mrb[0].mxu0
    %v2327 = vpop.f32.mrb[0].mxu0
    %v2328 = vadd.f32 %v548, %v2327
    %v2329 = vpop.f32.mrb[0].mxu0
    %2330 = vmatprep.mubr.bf16.mxu0 0
    %2331 = vmatmul.mubr.bf16.gmra.mrb[0].mxu0 %v1470
    %v2332 = vpop.f32.mrb[0].mxu0
    %v2333 = vadd.f32 %v548, %v2332
    %v2334 = vpop.f32.mrb[0].mxu0
    %v2335 = vpop.f32.mrb[0].mxu0
    %v2336 = vadd.f32 %v548, %v2335
    %v2337 = vpop.f32.mrb[0].mxu0
    %2338 = vmatprep.mubr.bf16.mxu0 0
    %2339 = vmatmul.mubr.bf16.gmra.mrb[0].mxu0 %v1473
    %v2340 = vpop.f32.mrb[0].mxu0
    %v2341 = vadd.f32 %v548, %v2340
    %v2342 = vpop.f32.mrb[0].mxu0
    %v2343 = vpop.f32.mrb[0].mxu0
    %v2344 = vadd.f32 %v548, %v2343
    %v2345 = vpop.f32.mrb[0].mxu0
    %2346 = vmatprep.mubr.bf16.mxu0 0
    %2347 = vmatmul.mubr.bf16.gmra.mrb[0].mxu0 %v1476
    %v2348 = vpop.f32.mrb[0].mxu0
    %v2349 = vadd.f32 %v548, %v2348
    %v2350 = vpop.f32.mrb[0].mxu0
    %v2351 = vpop.f32.mrb[0].mxu0
    %v2352 = vadd.f32 %v548, %v2351
    %v2353 = vpop.f32.mrb[0].mxu0
    %2354 = vmatprep.mubr.bf16.mxu0 0
    %2355 = vmatmul.mubr.bf16.gmra.mrb[0].mxu0 %v1479
    %v2356 = vpop.f32.mrb[0].mxu0
    %v2357 = vadd.f32 %v548, %v2356
    %v2358 = vpop.f32.mrb[0].mxu0
    %v2359 = vpop.f32.mrb[0].mxu0
    %v2360 = vadd.f32 %v548, %v2359
    %v2361 = vpop.f32.mrb[0].mxu0
    %2362 = vmatprep.mubr.bf16.mxu0 0
    %2363 = vmatmul.mubr.bf16.gmra.mrb[0].mxu0 %v1482
    %v2364 = vpop.f32.mrb[0].mxu0
    %v2365 = vadd.f32 %v548, %v2364
    %v2366 = vpop.f32.mrb[0].mxu0
    %v2367 = vpop.f32.mrb[0].mxu0
    %v2368 = vadd.f32 %v548, %v2367
    %v2369 = vpop.f32.mrb[0].mxu0
    %2370 = vmatprep.mubr.bf16.mxu0 0
    %2371 = vmatmul.mubr.bf16.gmra.mrb[0].mxu0 %v1485
    %v2372 = vpop.f32.mrb[0].mxu0
    %v2373 = vadd.f32 %v548, %v2372
    %v2374 = vpop.f32.mrb[0].mxu0
    %v2375 = vpop.f32.mrb[0].mxu0
    %v2376 = vadd.f32 %v548, %v2375
    %v2377 = vpop.f32.mrb[0].mxu0
    %2378 = vmatprep.mubr.bf16.mxu0 0
    %2379 = vmatmul.mubr.bf16.gmra.mrb[0].mxu0 %v1488
    %v2380 = vpop.f32.mrb[0].mxu0
    %v2381 = vadd.f32 %v548, %v2380
    %v2382 = vpop.f32.mrb[0].mxu0
    %v2383 = vpop.f32.mrb[0].mxu0
    %v2384 = vadd.f32 %v548, %v2383
    %v2385 = vpop.f32.mrb[0].mxu0
    %2386 = vmatprep.mubr.bf16.mxu0 0
    %2387 = vmatmul.mubr.bf16.gmra.mrb[0].mxu0 %v1491
    %v2388 = vpop.f32.mrb[0].mxu0
    %v2389 = vadd.f32 %v548, %v2388
    %v2390 = vpop.f32.mrb[0].mxu0
    %v2391 = vpop.f32.mrb[0].mxu0
    %v2392 = vadd.f32 %v548, %v2391
    %v2393 = vpop.f32.mrb[0].mxu0
    %2394 = vmatprep.mubr.bf16.mxu0 0
    %2395 = vmatmul.mubr.bf16.gmra.mrb[0].mxu0 %v1494
    %v2396 = vpop.f32.mrb[0].mxu0
    %v2397 = vadd.f32 %v548, %v2396
    %v2398 = vpop.f32.mrb[0].mxu0
    %v2399 = vpop.f32.mrb[0].mxu0
    %v2400 = vadd.f32 %v548, %v2399
    %v2401 = vpop.f32.mrb[0].mxu0
    %2402 = vmatprep.mubr.bf16.mxu0 0
    %2403 = vmatmul.mubr.bf16.gmra.mrb[0].mxu0 %v1497
    %v2404 = vpop.f32.mrb[0].mxu0
    %v2405 = vadd.f32 %v548, %v2404
    %v2406 = vpop.f32.mrb[0].mxu0
    %v2407 = vpop.f32.mrb[0].mxu0
    %v2408 = vadd.f32 %v548, %v2407
    %v2409 = vpop.f32.mrb[0].mxu0
    %2410 = vmatprep.mubr.bf16.mxu0 0
    %2411 = vmatmul.mubr.bf16.gmra.mrb[0].mxu0 %v1500
    %v2412 = vpop.f32.mrb[0].mxu0
    %v2413 = vadd.f32 %v548, %v2412
    %v2414 = vpop.f32.mrb[0].mxu0
    %v2415 = vpop.f32.mrb[0].mxu0
    %v2416 = vadd.f32 %v548, %v2415
    %v2417 = vpop.f32.mrb[0].mxu0
    %2418 = vmatprep.mubr.bf16.mxu0 0
    %2419 = vmatmul.mubr.bf16.gmra.mrb[0].mxu0 %v1503
    %v2420 = vpop.f32.mrb[0].mxu0
    %v2421 = vadd.f32 %v548, %v2420
    %v2422 = vpop.f32.mrb[0].mxu0
    %v2423 = vpop.f32.mrb[0].mxu0
    %v2424 = vadd.f32 %v548, %v2423
    %v2425 = vpop.f32.mrb[0].mxu0
    %2426 = vmatprep.mubr.bf16.mxu0 0
    %2427 = vmatmul.mubr.bf16.gmra.mrb[0].mxu0 %v1506
    %v2428 = vpop.f32.mrb[0].mxu0
    %v2429 = vadd.f32 %v548, %v2428
    %v2430 = vpop.f32.mrb[0].mxu0
    %v2431 = vpop.f32.mrb[0].mxu0
    %v2432 = vadd.f32 %v548, %v2431
    %v2433 = vpop.f32.mrb[0].mxu0
    %2434 = vmatprep.mubr.bf16.mxu0 0
    %2435 = vmatmul.mubr.bf16.gmra.mrb[0].mxu0 %v1509
    %v2436 = vpop.f32.mrb[0].mxu0
    %v2437 = vadd.f32 %v548, %v2436
    %v2438 = vpop.f32.mrb[0].mxu0
    %v2439 = vpop.f32.mrb[0].mxu0
    %v2440 = vadd.f32 %v548, %v2439
    %v2441 = vpop.f32.mrb[0].mxu0
    %2442 = vmatprep.mubr.bf16.mxu0 0
    %2443 = vmatmul.mubr.bf16.gmra.mrb[0].mxu0 %v1512
    %v2444 = vpop.f32.mrb[0].mxu0
    %v2445 = vadd.f32 %v548, %v2444
    %v2446 = vpop.f32.mrb[0].mxu0
    %v2447 = vpop.f32.mrb[0].mxu0
    %v2448 = vadd.f32 %v548, %v2447
    %v2449 = vpop.f32.mrb[0].mxu0
    %2450 = vmatprep.mubr.bf16.mxu0 0
    %2451 = vmatmul.mubr.bf16.gmra.mrb[0].mxu0 %v1515
    %v2452 = vpop.f32.mrb[0].mxu0
    %v2453 = vadd.f32 %v548, %v2452
    %v2454 = vpop.f32.mrb[0].mxu0
    %v2455 = vpop.f32.mrb[0].mxu0
    %v2456 = vadd.f32 %v548, %v2455
    %v2457 = vpop.f32.mrb[0].mxu0
    %2458 = vmatprep.mubr.bf16.mxu0 0
    %2459 = vmatmul.mubr.bf16.gmra.mrb[0].mxu0 %v1518
    %v2460 = vpop.f32.mrb[0].mxu0
    %v2461 = vadd.f32 %v548, %v2460
    %v2462 = vpop.f32.mrb[0].mxu0
    %v2463 = vpop.f32.mrb[0].mxu0
    %v2464 = vadd.f32 %v548, %v2463
    %v2465 = vpop.f32.mrb[0].mxu0
    %2466 = vmatprep.mubr.bf16.mxu0 0
    %2467 = vmatmul.mubr.bf16.gmra.mrb[0].mxu0 %v1521
    %v2468 = vpop.f32.mrb[0].mxu0
    %v2469 = vadd.f32 %v548, %v2468
    %v2470 = vpop.f32.mrb[0].mxu0
    %v2471 = vpop.f32.mrb[0].mxu0
    %v2472 = vadd.f32 %v548, %v2471
    %v2473 = vpop.f32.mrb[0].mxu0
    %2474 = vmatprep.mubr.bf16.mxu0 0
    %2475 = vmatmul.mubr.bf16.gmra.mrb[0].mxu0 %v1524
    %v2476 = vpop.f32.mrb[0].mxu0
    %v2477 = vadd.f32 %v548, %v2476
    %v2478 = vpop.f32.mrb[0].mxu0
    %v2479 = vpop.f32.mrb[0].mxu0
    %v2480 = vadd.f32 %v548, %v2479
    %v2481 = vpop.f32.mrb[0].mxu0
    %2482 = vmatprep.mubr.bf16.mxu0 0
    %2483 = vmatmul.mubr.bf16.gmra.mrb[0].mxu0 %v1527
    %v2484 = vpop.f32.mrb[0].mxu0
    %v2485 = vadd.f32 %v548, %v2484
    %v2486 = vpop.f32.mrb[0].mxu0
    %v2487 = vpop.f32.mrb[0].mxu0
    %v2488 = vadd.f32 %v548, %v2487
    %v2489 = vpop.f32.mrb[0].mxu0
    %2490 = vmatprep.mubr.bf16.mxu0 0
    %2491 = vmatmul.mubr.bf16.gmra.mrb[0].mxu0 %v1530
    %v2492 = vpop.f32.mrb[0].mxu0
    %v2493 = vadd.f32 %v548, %v2492
    %v2494 = vpop.f32.mrb[0].mxu0
    %v2495 = vpop.f32.mrb[0].mxu0
    %v2496 = vadd.f32 %v548, %v2495
    %v2497 = vpop.f32.mrb[0].mxu0
    %2498 = vmatprep.mubr.bf16.mxu0 0
    %2499 = vmatmul.mubr.bf16.gmra.mrb[0].mxu0 %v1533
    %v2500 = vpop.f32.mrb[0].mxu0
    %v2501 = vadd.f32 %v548, %v2500
    %v2502 = vpop.f32.mrb[0].mxu0
    %v2503 = vpop.f32.mrb[0].mxu0
    %v2504 = vadd.f32 %v548, %v2503
    %v2505 = vpop.f32.mrb[0].mxu0
    %2506 = vmatprep.mubr.bf16.mxu0 0
    %2507 = vmatmul.mubr.bf16.gmra.mrb[0].mxu0 %v1536
    %v2508 = vpop.f32.mrb[0].mxu0
    %v2509 = vadd.f32 %v548, %v2508
    %v2510 = vpop.f32.mrb[0].mxu0
    %v2511 = vpop.f32.mrb[0].mxu0
    %v2512 = vadd.f32 %v548, %v2511
    %v2513 = vpop.f32.mrb[0].mxu0
    %2514 = vmatprep.mubr.bf16.mxu0 0
    %2515 = vmatmul.mubr.bf16.gmra.mrb[0].mxu0 %v1539
    %v2516 = vpop.f32.mrb[0].mxu0
    %v2517 = vadd.f32 %v548, %v2516
    %v2518 = vpop.f32.mrb[0].mxu0
    %v2519 = vpop.f32.mrb[0].mxu0
    %v2520 = vadd.f32 %v548, %v2519
    %v2521 = vpop.f32.mrb[0].mxu0
    %2522 = vmatprep.mubr.bf16.mxu0 0
    %2523 = vmatmul.mubr.bf16.gmra.mrb[0].mxu0 %v1542
    %v2524 = vpop.f32.mrb[0].mxu0
    %v2525 = vadd.f32 %v548, %v2524
    %v2526 = vpop.f32.mrb[0].mxu0
    %v2527 = vpop.f32.mrb[0].mxu0
    %v2528 = vadd.f32 %v548, %v2527
    %v2529 = vpop.f32.mrb[0].mxu0
    %2530 = vmatprep.mubr.bf16.mxu0 0
    %2531 = vmatmul.mubr.bf16.gmra.mrb[0].mxu0 %v1545
    %v2532 = vpop.f32.mrb[0].mxu0
    %v2533 = vadd.f32 %v548, %v2532
    %v2534 = vpop.f32.mrb[0].mxu0
    %v2535 = vpop.f32.mrb[0].mxu0
    %v2536 = vadd.f32 %v548, %v2535
    %v2537 = vpop.f32.mrb[0].mxu0
    %2538 = vmatprep.mubr.bf16.mxu0 0
    %2539 = vmatmul.mubr.bf16.gmra.mrb[0].mxu0 %v1548
    %v2540 = vpop.f32.mrb[0].mxu0
    %v2541 = vadd.f32 %v548, %v2540
    %v2542 = vpop.f32.mrb[0].mxu0
    %v2543 = vpop.f32.mrb[0].mxu0
    %v2544 = vadd.f32 %v548, %v2543
    %v2545 = vpop.f32.mrb[0].mxu0
    %2546 = vmatprep.mubr.bf16.mxu0 0
    %2547 = vmatmul.mubr.bf16.gmra.mrb[0].mxu0 %v1551
    %v2548 = vpop.f32.mrb[0].mxu0
    %v2549 = vadd.f32 %v548, %v2548
    %v2550 = vpop.f32.mrb[0].mxu0
    %v2551 = vpop.f32.mrb[0].mxu0
    %v2552 = vadd.f32 %v548, %v2551
    %v2553 = vpop.f32.mrb[0].mxu0
    %2554 = vmatprep.mubr.bf16.mxu0 0
    %2555 = vmatmul.mubr.bf16.gmra.mrb[0].mxu0 %v1554
    %v2556 = vpop.f32.mrb[0].mxu0
    %v2557 = vadd.f32 %v548, %v2556
    %v2558 = vpop.f32.mrb[0].mxu0
    %v2559 = vpop.f32.mrb[0].mxu0
    %v2560 = vadd.f32 %v548, %v2559
    %v2561 = vpop.f32.mrb[0].mxu0
    %2562 = vmatprep.mubr.bf16.mxu0 0
    %2563 = vmatmul.mubr.bf16.gmra.mrb[0].mxu0 %v1557
    %v2564 = vpop.f32.mrb[0].mxu0
    %v2565 = vadd.f32 %v548, %v2564
    %v2566 = vpop.f32.mrb[0].mxu0
    %v2567 = vpop.f32.mrb[0].mxu0
    %v2568 = vadd.f32 %v548, %v2567
    %v2569 = vpop.f32.mrb[0].mxu0
    %2570 = vmatprep.mubr.bf16.mxu0 0
    %2571 = vmatmul.mubr.bf16.gmra.mrb[0].mxu0 %v1560
    %v2572 = vpop.f32.mrb[0].mxu0
    %v2573 = vadd.f32 %v548, %v2572
    %v2574 = vpop.f32.mrb[0].mxu0
    %v2575 = vpop.f32.mrb[0].mxu0
    %v2576 = vadd.f32 %v548, %v2575
    %v2577 = vpop.f32.mrb[0].mxu0
    %2578 = vmatprep.mubr.bf16.mxu0 0
    %2579 = vmatmul.mubr.bf16.gmra.mrb[0].mxu0 %v1563
    %v2580 = vpop.f32.mrb[0].mxu0
    %v2581 = vadd.f32 %v548, %v2580
    %v2582 = vpop.f32.mrb[0].mxu0
    %v2583 = vpop.f32.mrb[0].mxu0
    %v2584 = vadd.f32 %v548, %v2583
    %v2585 = vpop.f32.mrb[0].mxu0
    %2586 = vmatprep.mubr.bf16.mxu0 0
    %2587 = vmatmul.mubr.bf16.gmra.mrb[0].mxu0 %v1566
    %v2588 = vpop.f32.mrb[0].mxu0
    %v2589 = vadd.f32 %v548, %v2588
    %v2590 = vpop.f32.mrb[0].mxu0
    %v2591 = vpop.f32.mrb[0].mxu0
    %v2592 = vadd.f32 %v548, %v2591
    %v2593 = vpop.f32.mrb[0].mxu0
    %2594 = vmatprep.mubr.bf16.mxu0 0
    %2595 = vmatmul.mubr.bf16.gmra.mrb[0].mxu0 %v1569
    %v2596 = vpop.f32.mrb[0].mxu0
    %v2597 = vadd.f32 %v548, %v2596
    %v2598 = vpop.f32.mrb[0].mxu0
    %v2599 = vpop.f32.mrb[0].mxu0
    %v2600 = vadd.f32 %v548, %v2599
    %v2601 = vpop.f32.mrb[0].mxu0
    %2602 = vmatprep.mubr.bf16.mxu0 0
    %2603 = vmatmul.mubr.bf16.gmra.mrb[0].mxu0 %v1572
    %v2604 = vpop.f32.mrb[0].mxu0
    %v2605 = vadd.f32 %v548, %v2604
    %v2606 = vpop.f32.mrb[0].mxu0
    %v2607 = vpop.f32.mrb[0].mxu0
    %v2608 = vadd.f32 %v548, %v2607
    %v2609 = vpop.f32.mrb[0].mxu0
    %2610 = vmatprep.mubr.bf16.mxu0 0
    %2611 = vmatmul.mubr.bf16.gmra.mrb[0].mxu0 %v1575
    %v2612 = vpop.f32.mrb[0].mxu0
    %v2613 = vadd.f32 %v548, %v2612
    %v2614 = vpop.f32.mrb[0].mxu0
    %v2615 = vpop.f32.mrb[0].mxu0
    %v2616 = vadd.f32 %v548, %v2615
    %v2617 = vpop.f32.mrb[0].mxu0
    %2618 = vmatprep.mubr.bf16.mxu0 0
    %2619 = vmatmul.mubr.bf16.gmra.mrb[0].mxu0 %v1578
    %v2620 = vpop.f32.mrb[0].mxu0
    %v2621 = vadd.f32 %v548, %v2620
    %v2622 = vpop.f32.mrb[0].mxu0
    %v2623 = vpop.f32.mrb[0].mxu0
    %v2624 = vadd.f32 %v548, %v2623
    %v2625 = vpop.f32.mrb[0].mxu0
    %2626 = vmatprep.mubr.bf16.mxu0 0
    %2627 = vmatmul.mubr.bf16.gmra.mrb[0].mxu0 %v1581
    %v2628 = vpop.f32.mrb[0].mxu0
    %v2629 = vadd.f32 %v548, %v2628
    %v2630 = vpop.f32.mrb[0].mxu0
    %v2631 = vpop.f32.mrb[0].mxu0
    %v2632 = vadd.f32 %v548, %v2631
    %v2633 = vpop.f32.mrb[0].mxu0
    %2634 = vmatprep.mubr.bf16.mxu0 0
    %2635 = vmatmul.mubr.bf16.gmra.mrb[0].mxu0 %v1584
    %v2636 = vpop.f32.mrb[0].mxu0
    %v2637 = vadd.f32 %v548, %v2636
    %v2638 = vpop.f32.mrb[0].mxu0
    %v2639 = vpop.f32.mrb[0].mxu0
    %v2640 = vadd.f32 %v548, %v2639
    %v2641 = vpop.f32.mrb[0].mxu0
    %2642 = vdwg.mxu0
    %v2643 = vmax.f32 %v1621, 0.0
    %v2644 = vmax.f32 %v1624, 0.0
    %v2645 = vmax.f32 %v1629, 0.0
    %v2646 = vmax.f32 %v1632, 0.0
    %v2647 = vmax.f32 %v1637, 0.0
    %v2648 = vmax.f32 %v1640, 0.0
    %v2649 = vmax.f32 %v1645, 0.0
    %v2650 = vmax.f32 %v1648, 0.0
    %v2651 = vmax.f32 %v1653, 0.0
    %v2652 = vmax.f32 %v1656, 0.0
    %v2653 = vmax.f32 %v1661, 0.0
    %v2654 = vmax.f32 %v1664, 0.0
    %v2655 = vmax.f32 %v1669, 0.0
    %v2656 = vmax.f32 %v1672, 0.0
    %v2657 = vmax.f32 %v1677, 0.0
    %v2658 = vmax.f32 %v1680, 0.0
    %v2659 = vmax.f32 %v1685, 0.0
    %v2660 = vmax.f32 %v1688, 0.0
    %v2661 = vmax.f32 %v1693, 0.0
    %v2662 = vmax.f32 %v1696, 0.0
    %v2663 = vmax.f32 %v1701, 0.0
    %v2664 = vmax.f32 %v1704, 0.0
    %v2665 = vmax.f32 %v1709, 0.0
    %v2666 = vmax.f32 %v1712, 0.0
    %v2667 = vmax.f32 %v1717, 0.0
    %v2668 = vmax.f32 %v1720, 0.0
    %v2669 = vmax.f32 %v1725, 0.0
    %v2670 = vmax.f32 %v1728, 0.0
    %v2671 = vmax.f32 %v1733, 0.0
    %v2672 = vmax.f32 %v1736, 0.0
    %v2673 = vmax.f32 %v1741, 0.0
    %v2674 = vmax.f32 %v1744, 0.0
    %v2675 = vmax.f32 %v1749, 0.0
    %v2676 = vmax.f32 %v1752, 0.0
    %v2677 = vmax.f32 %v1757, 0.0
    %v2678 = vmax.f32 %v1760, 0.0
    %v2679 = vmax.f32 %v1765, 0.0
    %v2680 = vmax.f32 %v1768, 0.0
    %v2681 = vmax.f32 %v1773, 0.0
    %v2682 = vmax.f32 %v1776, 0.0
    %v2683 = vmax.f32 %v1781, 0.0
    %v2684 = vmax.f32 %v1784, 0.0
    %v2685 = vmax.f32 %v1789, 0.0
    %v2686 = vmax.f32 %v1792, 0.0
    %v2687 = vmax.f32 %v1797, 0.0
    %v2688 = vmax.f32 %v1800, 0.0
    %v2689 = vmax.f32 %v1805, 0.0
    %v2690 = vmax.f32 %v1808, 0.0
    %v2691 = vmax.f32 %v1813, 0.0
    %v2692 = vmax.f32 %v1816, 0.0
    %v2693 = vmax.f32 %v1821, 0.0
    %v2694 = vmax.f32 %v1824, 0.0
    %v2695 = vmax.f32 %v1829, 0.0
    %v2696 = vmax.f32 %v1832, 0.0
    %v2697 = vmax.f32 %v1837, 0.0
    %v2698 = vmax.f32 %v1840, 0.0
    %v2699 = vmax.f32 %v1845, 0.0
    %v2700 = vmax.f32 %v1848, 0.0
    %v2701 = vmax.f32 %v1853, 0.0
    %v2702 = vmax.f32 %v1856, 0.0
    %v2703 = vmax.f32 %v1861, 0.0
    %v2704 = vmax.f32 %v1864, 0.0
    %v2705 = vmax.f32 %v1869, 0.0
    %v2706 = vmax.f32 %v1872, 0.0
    %v2707 = vmax.f32 %v1877, 0.0
    %v2708 = vmax.f32 %v1880, 0.0
    %v2709 = vmax.f32 %v1885, 0.0
    %v2710 = vmax.f32 %v1888, 0.0
    %v2711 = vmax.f32 %v1893, 0.0
    %v2712 = vmax.f32 %v1896, 0.0
    %v2713 = vmax.f32 %v1901, 0.0
    %v2714 = vmax.f32 %v1904, 0.0
    %v2715 = vmax.f32 %v1909, 0.0
    %v2716 = vmax.f32 %v1912, 0.0
    %v2717 = vmax.f32 %v1917, 0.0
    %v2718 = vmax.f32 %v1920, 0.0
    %v2719 = vmax.f32 %v1925, 0.0
    %v2720 = vmax.f32 %v1928, 0.0
    %v2721 = vmax.f32 %v1933, 0.0
    %v2722 = vmax.f32 %v1936, 0.0
    %v2723 = vmax.f32 %v1941, 0.0
    %v2724 = vmax.f32 %v1944, 0.0
    %v2725 = vmax.f32 %v1949, 0.0
    %v2726 = vmax.f32 %v1952, 0.0
    %v2727 = vmax.f32 %v1957, 0.0
    %v2728 = vmax.f32 %v1960, 0.0
    %v2729 = vmax.f32 %v1965, 0.0
    %v2730 = vmax.f32 %v1968, 0.0
    %v2731 = vmax.f32 %v1973, 0.0
    %v2732 = vmax.f32 %v1976, 0.0
    %v2733 = vmax.f32 %v1981, 0.0
    %v2734 = vmax.f32 %v1984, 0.0
    %v2735 = vmax.f32 %v1989, 0.0
    %v2736 = vmax.f32 %v1992, 0.0
    %v2737 = vmax.f32 %v1997, 0.0
    %v2738 = vmax.f32 %v2000, 0.0
    %v2739 = vmax.f32 %v2005, 0.0
    %v2740 = vmax.f32 %v2008, 0.0
    %v2741 = vmax.f32 %v2013, 0.0
    %v2742 = vmax.f32 %v2016, 0.0
    %v2743 = vmax.f32 %v2021, 0.0
    %v2744 = vmax.f32 %v2024, 0.0
    %v2745 = vmax.f32 %v2029, 0.0
    %v2746 = vmax.f32 %v2032, 0.0
    %v2747 = vmax.f32 %v2037, 0.0
    %v2748 = vmax.f32 %v2040, 0.0
    %v2749 = vmax.f32 %v2045, 0.0
    %v2750 = vmax.f32 %v2048, 0.0
    %v2751 = vmax.f32 %v2053, 0.0
    %v2752 = vmax.f32 %v2056, 0.0
    %v2753 = vmax.f32 %v2061, 0.0
    %v2754 = vmax.f32 %v2064, 0.0
    %v2755 = vmax.f32 %v2069, 0.0
    %v2756 = vmax.f32 %v2072, 0.0
    %v2757 = vmax.f32 %v2077, 0.0
    %v2758 = vmax.f32 %v2080, 0.0
    %v2759 = vmax.f32 %v2085, 0.0
    %v2760 = vmax.f32 %v2088, 0.0
    %v2761 = vmax.f32 %v2093, 0.0
    %v2762 = vmax.f32 %v2096, 0.0
    %v2763 = vmax.f32 %v2101, 0.0
    %v2764 = vmax.f32 %v2104, 0.0
    %v2765 = vmax.f32 %v2109, 0.0
    %v2766 = vmax.f32 %v2112, 0.0
    %v2767 = vmax.f32 %v2117, 0.0
    %v2768 = vmax.f32 %v2120, 0.0
    %v2769 = vmax.f32 %v2125, 0.0
    %v2770 = vmax.f32 %v2128, 0.0
    %v2771 = vmax.f32 %v2133, 0.0
    %v2772 = vmax.f32 %v2136, 0.0
    %v2773 = vmax.f32 %v2141, 0.0
    %v2774 = vmax.f32 %v2144, 0.0
    %v2775 = vmax.f32 %v2149, 0.0
    %v2776 = vmax.f32 %v2152, 0.0
    %v2777 = vmax.f32 %v2157, 0.0
    %v2778 = vmax.f32 %v2160, 0.0
    %v2779 = vmax.f32 %v2165, 0.0
    %v2780 = vmax.f32 %v2168, 0.0
    %v2781 = vmax.f32 %v2173, 0.0
    %v2782 = vmax.f32 %v2176, 0.0
    %v2783 = vmax.f32 %v2181, 0.0
    %v2784 = vmax.f32 %v2184, 0.0
    %v2785 = vmax.f32 %v2189, 0.0
    %v2786 = vmax.f32 %v2192, 0.0
    %v2787 = vmax.f32 %v2197, 0.0
    %v2788 = vmax.f32 %v2200, 0.0
    %v2789 = vmax.f32 %v2205, 0.0
    %v2790 = vmax.f32 %v2208, 0.0
    %v2791 = vmax.f32 %v2213, 0.0
    %v2792 = vmax.f32 %v2216, 0.0
    %v2793 = vmax.f32 %v2221, 0.0
    %v2794 = vmax.f32 %v2224, 0.0
    %v2795 = vmax.f32 %v2229, 0.0
    %v2796 = vmax.f32 %v2232, 0.0
    %v2797 = vmax.f32 %v2237, 0.0
    %v2798 = vmax.f32 %v2240, 0.0
    %v2799 = vmax.f32 %v2245, 0.0
    %v2800 = vmax.f32 %v2248, 0.0
    %v2801 = vmax.f32 %v2253, 0.0
    %v2802 = vmax.f32 %v2256, 0.0
    %v2803 = vmax.f32 %v2261, 0.0
    %v2804 = vmax.f32 %v2264, 0.0
    %v2805 = vmax.f32 %v2269, 0.0
    %v2806 = vmax.f32 %v2272, 0.0
    %v2807 = vmax.f32 %v2277, 0.0
    %v2808 = vmax.f32 %v2280, 0.0
    %v2809 = vmax.f32 %v2285, 0.0
    %v2810 = vmax.f32 %v2288, 0.0
    %v2811 = vmax.f32 %v2293, 0.0
    %v2812 = vmax.f32 %v2296, 0.0
    %v2813 = vmax.f32 %v2301, 0.0
    %v2814 = vmax.f32 %v2304, 0.0
    %v2815 = vmax.f32 %v2309, 0.0
    %v2816 = vmax.f32 %v2312, 0.0
    %v2817 = vmax.f32 %v2317, 0.0
    %v2818 = vmax.f32 %v2320, 0.0
    %v2819 = vmax.f32 %v2325, 0.0
    %v2820 = vmax.f32 %v2328, 0.0
    %v2821 = vmax.f32 %v2333, 0.0
    %v2822 = vmax.f32 %v2336, 0.0
    %v2823 = vmax.f32 %v2341, 0.0
    %v2824 = vmax.f32 %v2344, 0.0
    %v2825 = vmax.f32 %v2349, 0.0
    %v2826 = vmax.f32 %v2352, 0.0
    %v2827 = vmax.f32 %v2357, 0.0
    %v2828 = vmax.f32 %v2360, 0.0
    %v2829 = vmax.f32 %v2365, 0.0
    %v2830 = vmax.f32 %v2368, 0.0
    %v2831 = vmax.f32 %v2373, 0.0
    %v2832 = vmax.f32 %v2376, 0.0
    %v2833 = vmax.f32 %v2381, 0.0
    %v2834 = vmax.f32 %v2384, 0.0
    %v2835 = vmax.f32 %v2389, 0.0
    %v2836 = vmax.f32 %v2392, 0.0
    %v2837 = vmax.f32 %v2397, 0.0
    %v2838 = vmax.f32 %v2400, 0.0
    %v2839 = vmax.f32 %v2405, 0.0
    %v2840 = vmax.f32 %v2408, 0.0
    %v2841 = vmax.f32 %v2413, 0.0
    %v2842 = vmax.f32 %v2416, 0.0
    %v2843 = vmax.f32 %v2421, 0.0
    %v2844 = vmax.f32 %v2424, 0.0
    %v2845 = vmax.f32 %v2429, 0.0
    %v2846 = vmax.f32 %v2432, 0.0
    %v2847 = vmax.f32 %v2437, 0.0
    %v2848 = vmax.f32 %v2440, 0.0
    %v2849 = vmax.f32 %v2445, 0.0
    %v2850 = vmax.f32 %v2448, 0.0
    %v2851 = vmax.f32 %v2453, 0.0
    %v2852 = vmax.f32 %v2456, 0.0
    %v2853 = vmax.f32 %v2461, 0.0
    %v2854 = vmax.f32 %v2464, 0.0
    %v2855 = vmax.f32 %v2469, 0.0
    %v2856 = vmax.f32 %v2472, 0.0
    %v2857 = vmax.f32 %v2477, 0.0
    %v2858 = vmax.f32 %v2480, 0.0
    %v2859 = vmax.f32 %v2485, 0.0
    %v2860 = vmax.f32 %v2488, 0.0
    %v2861 = vmax.f32 %v2493, 0.0
    %v2862 = vmax.f32 %v2496, 0.0
    %v2863 = vmax.f32 %v2501, 0.0
    %v2864 = vmax.f32 %v2504, 0.0
    %v2865 = vmax.f32 %v2509, 0.0
    %v2866 = vmax.f32 %v2512, 0.0
    %v2867 = vmax.f32 %v2517, 0.0
    %v2868 = vmax.f32 %v2520, 0.0
    %v2869 = vmax.f32 %v2525, 0.0
    %v2870 = vmax.f32 %v2528, 0.0
    %v2871 = vmax.f32 %v2533, 0.0
    %v2872 = vmax.f32 %v2536, 0.0
    %v2873 = vmax.f32 %v2541, 0.0
    %v2874 = vmax.f32 %v2544, 0.0
    %v2875 = vmax.f32 %v2549, 0.0
    %v2876 = vmax.f32 %v2552, 0.0
    %v2877 = vmax.f32 %v2557, 0.0
    %v2878 = vmax.f32 %v2560, 0.0
    %v2879 = vmax.f32 %v2565, 0.0
    %v2880 = vmax.f32 %v2568, 0.0
    %v2881 = vmax.f32 %v2573, 0.0
    %v2882 = vmax.f32 %v2576, 0.0
    %v2883 = vmax.f32 %v2581, 0.0
    %v2884 = vmax.f32 %v2584, 0.0
    %v2885 = vmax.f32 %v2589, 0.0
    %v2886 = vmax.f32 %v2592, 0.0
    %v2887 = vmax.f32 %v2597, 0.0
    %v2888 = vmax.f32 %v2600, 0.0
    %v2889 = vmax.f32 %v2605, 0.0
    %v2890 = vmax.f32 %v2608, 0.0
    %v2891 = vmax.f32 %v2613, 0.0
    %v2892 = vmax.f32 %v2616, 0.0
    %v2893 = vmax.f32 %v2621, 0.0
    %v2894 = vmax.f32 %v2624, 0.0
    %v2895 = vmax.f32 %v2629, 0.0
    %v2896 = vmax.f32 %v2632, 0.0
    %v2897 = vmax.f32 %v2637, 0.0
    %v2898 = vmax.f32 %v2640, 0.0
    %v2899 = vpack.c.bf16 %v2644, %v2643
    %v2900 = vpack.c.bf16 %v2646, %v2645
    %v2901 = vpack.c.bf16 %v2648, %v2647
    %v2902 = vpack.c.bf16 %v2650, %v2649
    %v2903 = vpack.c.bf16 %v2652, %v2651
    %v2904 = vpack.c.bf16 %v2654, %v2653
    %v2905 = vpack.c.bf16 %v2656, %v2655
    %v2906 = vpack.c.bf16 %v2658, %v2657
    %v2907 = vpack.c.bf16 %v2660, %v2659
    %v2908 = vpack.c.bf16 %v2662, %v2661
    %v2909 = vpack.c.bf16 %v2664, %v2663
    %v2910 = vpack.c.bf16 %v2666, %v2665
    %v2911 = vpack.c.bf16 %v2668, %v2667
    %v2912 = vpack.c.bf16 %v2670, %v2669
    %v2913 = vpack.c.bf16 %v2672, %v2671
    %v2914 = vpack.c.bf16 %v2674, %v2673
    %v2915 = vpack.c.bf16 %v2676, %v2675
    %v2916 = vpack.c.bf16 %v2678, %v2677
    %v2917 = vpack.c.bf16 %v2680, %v2679
    %v2918 = vpack.c.bf16 %v2682, %v2681
    %v2919 = vpack.c.bf16 %v2684, %v2683
    %v2920 = vpack.c.bf16 %v2686, %v2685
    %v2921 = vpack.c.bf16 %v2688, %v2687
    %v2922 = vpack.c.bf16 %v2690, %v2689
    %v2923 = vpack.c.bf16 %v2692, %v2691
    %v2924 = vpack.c.bf16 %v2694, %v2693
    %v2925 = vpack.c.bf16 %v2696, %v2695
    %v2926 = vpack.c.bf16 %v2698, %v2697
    %v2927 = vpack.c.bf16 %v2700, %v2699
    %v2928 = vpack.c.bf16 %v2702, %v2701
    %v2929 = vpack.c.bf16 %v2704, %v2703
    %v2930 = vpack.c.bf16 %v2706, %v2705
    %v2931 = vpack.c.bf16 %v2708, %v2707
    %v2932 = vpack.c.bf16 %v2710, %v2709
    %v2933 = vpack.c.bf16 %v2712, %v2711
    %v2934 = vpack.c.bf16 %v2714, %v2713
    %v2935 = vpack.c.bf16 %v2716, %v2715
    %v2936 = vpack.c.bf16 %v2718, %v2717
    %v2937 = vpack.c.bf16 %v2720, %v2719
    %v2938 = vpack.c.bf16 %v2722, %v2721
    %v2939 = vpack.c.bf16 %v2724, %v2723
    %v2940 = vpack.c.bf16 %v2726, %v2725
    %v2941 = vpack.c.bf16 %v2728, %v2727
    %v2942 = vpack.c.bf16 %v2730, %v2729
    %v2943 = vpack.c.bf16 %v2732, %v2731
    %v2944 = vpack.c.bf16 %v2734, %v2733
    %v2945 = vpack.c.bf16 %v2736, %v2735
    %v2946 = vpack.c.bf16 %v2738, %v2737
    %v2947 = vpack.c.bf16 %v2740, %v2739
    %v2948 = vpack.c.bf16 %v2742, %v2741
    %v2949 = vpack.c.bf16 %v2744, %v2743
    %v2950 = vpack.c.bf16 %v2746, %v2745
    %v2951 = vpack.c.bf16 %v2748, %v2747
    %v2952 = vpack.c.bf16 %v2750, %v2749
    %v2953 = vpack.c.bf16 %v2752, %v2751
    %v2954 = vpack.c.bf16 %v2754, %v2753
    %v2955 = vpack.c.bf16 %v2756, %v2755
    %v2956 = vpack.c.bf16 %v2758, %v2757
    %v2957 = vpack.c.bf16 %v2760, %v2759
    %v2958 = vpack.c.bf16 %v2762, %v2761
    %v2959 = vpack.c.bf16 %v2764, %v2763
    %v2960 = vpack.c.bf16 %v2766, %v2765
    %v2961 = vpack.c.bf16 %v2768, %v2767
    %v2962 = vpack.c.bf16 %v2770, %v2769
    %v2963 = vpack.c.bf16 %v2772, %v2771
    %v2964 = vpack.c.bf16 %v2774, %v2773
    %v2965 = vpack.c.bf16 %v2776, %v2775
    %v2966 = vpack.c.bf16 %v2778, %v2777
    %v2967 = vpack.c.bf16 %v2780, %v2779
    %v2968 = vpack.c.bf16 %v2782, %v2781
    %v2969 = vpack.c.bf16 %v2784, %v2783
    %v2970 = vpack.c.bf16 %v2786, %v2785
    %v2971 = vpack.c.bf16 %v2788, %v2787
    %v2972 = vpack.c.bf16 %v2790, %v2789
    %v2973 = vpack.c.bf16 %v2792, %v2791
    %v2974 = vpack.c.bf16 %v2794, %v2793
    %v2975 = vpack.c.bf16 %v2796, %v2795
    %v2976 = vpack.c.bf16 %v2798, %v2797
    %v2977 = vpack.c.bf16 %v2800, %v2799
    %v2978 = vpack.c.bf16 %v2802, %v2801
    %v2979 = vpack.c.bf16 %v2804, %v2803
    %v2980 = vpack.c.bf16 %v2806, %v2805
    %v2981 = vpack.c.bf16 %v2808, %v2807
    %v2982 = vpack.c.bf16 %v2810, %v2809
    %v2983 = vpack.c.bf16 %v2812, %v2811
    %v2984 = vpack.c.bf16 %v2814, %v2813
    %v2985 = vpack.c.bf16 %v2816, %v2815
    %v2986 = vpack.c.bf16 %v2818, %v2817
    %v2987 = vpack.c.bf16 %v2820, %v2819
    %v2988 = vpack.c.bf16 %v2822, %v2821
    %v2989 = vpack.c.bf16 %v2824, %v2823
    %v2990 = vpack.c.bf16 %v2826, %v2825
    %v2991 = vpack.c.bf16 %v2828, %v2827
    %v2992 = vpack.c.bf16 %v2830, %v2829
    %v2993 = vpack.c.bf16 %v2832, %v2831
    %v2994 = vpack.c.bf16 %v2834, %v2833
    %v2995 = vpack.c.bf16 %v2836, %v2835
    %v2996 = vpack.c.bf16 %v2838, %v2837
    %v2997 = vpack.c.bf16 %v2840, %v2839
    %v2998 = vpack.c.bf16 %v2842, %v2841
    %v2999 = vpack.c.bf16 %v2844, %v2843
    %v3000 = vpack.c.bf16 %v2846, %v2845
    %v3001 = vpack.c.bf16 %v2848, %v2847
    %v3002 = vpack.c.bf16 %v2850, %v2849
    %v3003 = vpack.c.bf16 %v2852, %v2851
    %v3004 = vpack.c.bf16 %v2854, %v2853
    %v3005 = vpack.c.bf16 %v2856, %v2855
    %v3006 = vpack.c.bf16 %v2858, %v2857
    %v3007 = vpack.c.bf16 %v2860, %v2859
    %v3008 = vpack.c.bf16 %v2862, %v2861
    %v3009 = vpack.c.bf16 %v2864, %v2863
    %v3010 = vpack.c.bf16 %v2866, %v2865
    %v3011 = vpack.c.bf16 %v2868, %v2867
    %v3012 = vpack.c.bf16 %v2870, %v2869
    %v3013 = vpack.c.bf16 %v2872, %v2871
    %v3014 = vpack.c.bf16 %v2874, %v2873
    %v3015 = vpack.c.bf16 %v2876, %v2875
    %v3016 = vpack.c.bf16 %v2878, %v2877
    %v3017 = vpack.c.bf16 %v2880, %v2879
    %v3018 = vpack.c.bf16 %v2882, %v2881
    %v3019 = vpack.c.bf16 %v2884, %v2883
    %v3020 = vpack.c.bf16 %v2886, %v2885
    %v3021 = vpack.c.bf16 %v2888, %v2887
    %v3022 = vpack.c.bf16 %v2890, %v2889
    %v3023 = vpack.c.bf16 %v2892, %v2891
    %v3024 = vpack.c.bf16 %v2894, %v2893
    %v3025 = vpack.c.bf16 %v2896, %v2895
    %v3026 = vpack.c.bf16 %v2898, %v2897
    %v3027 = vpack.i.b16 %v267, %v267
    %v3028 = vlaneseq
    %v3029 = vshrl.u32 %v3028, 7
    %v3030 = vsub.s32 0, %v3029
    %v3031 = vrot.slane %v3027, %v3030
    %v3033 = vsel %vm169, %v3031, 0
    %v3036 = vsel %vm169, %v2899, 0
    %v3039 = vsel %vm169, %v2900, 0
    %v3042 = vsel %vm169, %v2901, 0
    %v3045 = vsel %vm169, %v2902, 0
    %v3048 = vsel %vm169, %v2903, 0
    %v3051 = vsel %vm169, %v2904, 0
    %v3054 = vsel %vm169, %v2905, 0
    %v3057 = vsel %vm169, %v2906, 0
    %3059 = vmatprep.subr.bf16.mxu0 0
    %3060 = vmatpush1.bf16.xpose.msra.mxu0 %v3036
    %3061 = vmatprep.subr.bf16.mxu0 0
    %3062 = vmatpush1.bf16.xpose.msra.mxu0 %v3039
    %3063 = vmatprep.subr.bf16.mxu0 0
    %3064 = vmatpush1.bf16.xpose.msra.mxu0 %v3042
    %3065 = vmatprep.subr.bf16.mxu0 0
    %3066 = vmatpush1.bf16.xpose.msra.mxu0 %v3045
    %3067 = vmatprep.subr.bf16.mxu0 0
    %3068 = vmatpush1.bf16.xpose.msra.mxu0 %v3048
    %3069 = vmatprep.subr.bf16.mxu0 0
    %3070 = vmatpush1.bf16.xpose.msra.mxu0 %v3051
    %3071 = vmatprep.subr.bf16.mxu0 0
    %3072 = vmatpush1.bf16.xpose.msra.mxu0 %v3054
    %3073 = vmatprep.subr.bf16.mxu0 0
    %3074 = vmatpush1.bf16.xpose.msra.mxu0 %v3057
    %3075 = vmatprep.subr.bf16.mxu0 0
    %3076 = vmatpush1.bf16.xpose.msra.mxu0 0
    %3077 = vmatprep.subr.bf16.mxu0 0
    %3078 = vmatpush1.bf16.xpose.msra.mxu0 0
    %3079 = vmatprep.subr.bf16.mxu0 0
    %3080 = vmatpush1.bf16.xpose.msra.mxu0 0
    %3081 = vmatprep.subr.bf16.mxu0 0
    %3082 = vmatpush1.bf16.xpose.msra.mxu0 0
    %3083 = vmatprep.subr.bf16.mxu0 0
    %3084 = vmatpush1.bf16.xpose.msra.mxu0 0
    %3085 = vmatprep.subr.bf16.mxu0 0
    %3086 = vmatpush1.bf16.xpose.msra.mxu0 0
    %3087 = vmatprep.subr.bf16.mxu0 0
    %3088 = vmatpush1.bf16.xpose.msra.mxu0 0
    %3089 = vmatprep.subr.bf16.mxu0 0
    %3090 = vmatpush1.bf16.xpose.msra.mxu0 0
    %3091 = vmatprep.mubr.bf16.mxu0 0
    %3092 = vmatmul.mubr.bf16.gmra.mrb[0].mxu0 %v3033
    %v3093 = vpop.f32.mrb[0].mxu0
    %v3094 = vadd.f32 0.0, %v3093
    %v3095 = vpop.f32.mrb[0].mxu0
    %v3096 = vpop.f32.mrb[0].mxu0
    %v3097 = vpop.f32.mrb[0].mxu0
    %3098 = vdwg.mxu0
    %v3099 = vpack.i.b16 %v268, %v268
    %v3100 = vlaneseq
    %v3101 = vshrl.u32 %v3100, 7
    %v3102 = vsub.s32 0, %v3101
    %v3103 = vrot.slane %v3099, %v3102
    %v3105 = vsel %vm169, %v3103, 0
    %v3108 = vsel %vm169, %v2907, 0
    %v3111 = vsel %vm169, %v2908, 0
    %v3114 = vsel %vm169, %v2909, 0
    %v3117 = vsel %vm169, %v2910, 0
    %v3120 = vsel %vm169, %v2911, 0
    %v3123 = vsel %vm169, %v2912, 0
    %v3126 = vsel %vm169, %v2913, 0
    %v3129 = vsel %vm169, %v2914, 0
    %3131 = vmatprep.subr.bf16.mxu0 0
    %3132 = vmatpush1.bf16.xpose.msra.mxu0 %v3108
    %3133 = vmatprep.subr.bf16.mxu0 0
    %3134 = vmatpush1.bf16.xpose.msra.mxu0 %v3111
    %3135 = vmatprep.subr.bf16.mxu0 0
    %3136 = vmatpush1.bf16.xpose.msra.mxu0 %v3114
    %3137 = vmatprep.subr.bf16.mxu0 0
    %3138 = vmatpush1.bf16.xpose.msra.mxu0 %v3117
    %3139 = vmatprep.subr.bf16.mxu0 0
    %3140 = vmatpush1.bf16.xpose.msra.mxu0 %v3120
    %3141 = vmatprep.subr.bf16.mxu0 0
    %3142 = vmatpush1.bf16.xpose.msra.mxu0 %v3123
    %3143 = vmatprep.subr.bf16.mxu0 0
    %3144 = vmatpush1.bf16.xpose.msra.mxu0 %v3126
    %3145 = vmatprep.subr.bf16.mxu0 0
    %3146 = vmatpush1.bf16.xpose.msra.mxu0 %v3129
    %3147 = vmatprep.subr.bf16.mxu0 0
    %3148 = vmatpush1.bf16.xpose.msra.mxu0 0
    %3149 = vmatprep.subr.bf16.mxu0 0
    %3150 = vmatpush1.bf16.xpose.msra.mxu0 0
    %3151 = vmatprep.subr.bf16.mxu0 0
    %3152 = vmatpush1.bf16.xpose.msra.mxu0 0
    %3153 = vmatprep.subr.bf16.mxu0 0
    %3154 = vmatpush1.bf16.xpose.msra.mxu0 0
    %3155 = vmatprep.subr.bf16.mxu0 0
    %3156 = vmatpush1.bf16.xpose.msra.mxu0 0
    %3157 = vmatprep.subr.bf16.mxu0 0
    %3158 = vmatpush1.bf16.xpose.msra.mxu0 0
    %3159 = vmatprep.subr.bf16.mxu0 0
    %3160 = vmatpush1.bf16.xpose.msra.mxu0 0
    %3161 = vmatprep.subr.bf16.mxu0 0
    %3162 = vmatpush1.bf16.xpose.msra.mxu0 0
    %3163 = vmatprep.mubr.bf16.mxu0 0
    %3164 = vmatmul.mubr.bf16.gmra.mrb[0].mxu0 %v3105
    %v3165 = vpop.f32.mrb[0].mxu0
    %v3166 = vadd.f32 0.0, %v3165
    %v3167 = vpop.f32.mrb[0].mxu0
    %v3168 = vpop.f32.mrb[0].mxu0
    %v3169 = vpop.f32.mrb[0].mxu0
    %3170 = vdwg.mxu0
    %v3171 = vpack.i.b16 %v269, %v269
    %v3172 = vlaneseq
    %v3173 = vshrl.u32 %v3172, 7
    %v3174 = vsub.s32 0, %v3173
    %v3175 = vrot.slane %v3171, %v3174
    %v3177 = vsel %vm169, %v3175, 0
    %v3180 = vsel %vm169, %v2915, 0
    %v3183 = vsel %vm169, %v2916, 0
    %v3186 = vsel %vm169, %v2917, 0
    %v3189 = vsel %vm169, %v2918, 0
    %v3192 = vsel %vm169, %v2919, 0
    %v3195 = vsel %vm169, %v2920, 0
    %v3198 = vsel %vm169, %v2921, 0
    %v3201 = vsel %vm169, %v2922, 0
    %3203 = vmatprep.subr.bf16.mxu0 0
    %3204 = vmatpush1.bf16.xpose.msra.mxu0 %v3180
    %3205 = vmatprep.subr.bf16.mxu0 0
    %3206 = vmatpush1.bf16.xpose.msra.mxu0 %v3183
    %3207 = vmatprep.subr.bf16.mxu0 0
    %3208 = vmatpush1.bf16.xpose.msra.mxu0 %v3186
    %3209 = vmatprep.subr.bf16.mxu0 0
    %3210 = vmatpush1.bf16.xpose.msra.mxu0 %v3189
    %3211 = vmatprep.subr.bf16.mxu0 0
    %3212 = vmatpush1.bf16.xpose.msra.mxu0 %v3192
    %3213 = vmatprep.subr.bf16.mxu0 0
    %3214 = vmatpush1.bf16.xpose.msra.mxu0 %v3195
    %3215 = vmatprep.subr.bf16.mxu0 0
    %3216 = vmatpush1.bf16.xpose.msra.mxu0 %v3198
    %3217 = vmatprep.subr.bf16.mxu0 0
    %3218 = vmatpush1.bf16.xpose.msra.mxu0 %v3201
    %3219 = vmatprep.subr.bf16.mxu0 0
    %3220 = vmatpush1.bf16.xpose.msra.mxu0 0
    %3221 = vmatprep.subr.bf16.mxu0 0
    %3222 = vmatpush1.bf16.xpose.msra.mxu0 0
    %3223 = vmatprep.subr.bf16.mxu0 0
    %3224 = vmatpush1.bf16.xpose.msra.mxu0 0
    %3225 = vmatprep.subr.bf16.mxu0 0
    %3226 = vmatpush1.bf16.xpose.msra.mxu0 0
    %3227 = vmatprep.subr.bf16.mxu0 0
    %3228 = vmatpush1.bf16.xpose.msra.mxu0 0
    %3229 = vmatprep.subr.bf16.mxu0 0
    %3230 = vmatpush1.bf16.xpose.msra.mxu0 0
    %3231 = vmatprep.subr.bf16.mxu0 0
    %3232 = vmatpush1.bf16.xpose.msra.mxu0 0
    %3233 = vmatprep.subr.bf16.mxu0 0
    %3234 = vmatpush1.bf16.xpose.msra.mxu0 0
    %3235 = vmatprep.mubr.bf16.mxu0 0
    %3236 = vmatmul.mubr.bf16.gmra.mrb[0].mxu0 %v3177
    %v3237 = vpop.f32.mrb[0].mxu0
    %v3238 = vadd.f32 0.0, %v3237
    %v3239 = vpop.f32.mrb[0].mxu0
    %v3240 = vpop.f32.mrb[0].mxu0
    %v3241 = vpop.f32.mrb[0].mxu0
    %3242 = vdwg.mxu0
    %v3243 = vpack.i.b16 %v270, %v270
    %v3244 = vlaneseq
    %v3245 = vshrl.u32 %v3244, 7
    %v3246 = vsub.s32 0, %v3245
    %v3247 = vrot.slane %v3243, %v3246
    %v3249 = vsel %vm169, %v3247, 0
    %v3252 = vsel %vm169, %v2923, 0
    %v3255 = vsel %vm169, %v2924, 0
    %v3258 = vsel %vm169, %v2925, 0
    %v3261 = vsel %vm169, %v2926, 0
    %v3264 = vsel %vm169, %v2927, 0
    %v3267 = vsel %vm169, %v2928, 0
    %v3270 = vsel %vm169, %v2929, 0
    %v3273 = vsel %vm169, %v2930, 0
    %3275 = vmatprep.subr.bf16.mxu0 0
    %3276 = vmatpush1.bf16.xpose.msra.mxu0 %v3252
    %3277 = vmatprep.subr.bf16.mxu0 0
    %3278 = vmatpush1.bf16.xpose.msra.mxu0 %v3255
    %3279 = vmatprep.subr.bf16.mxu0 0
    %3280 = vmatpush1.bf16.xpose.msra.mxu0 %v3258
    %3281 = vmatprep.subr.bf16.mxu0 0
    %3282 = vmatpush1.bf16.xpose.msra.mxu0 %v3261
    %3283 = vmatprep.subr.bf16.mxu0 0
    %3284 = vmatpush1.bf16.xpose.msra.mxu0 %v3264
    %3285 = vmatprep.subr.bf16.mxu0 0
    %3286 = vmatpush1.bf16.xpose.msra.mxu0 %v3267
    %3287 = vmatprep.subr.bf16.mxu0 0
    %3288 = vmatpush1.bf16.xpose.msra.mxu0 %v3270
    %3289 = vmatprep.subr.bf16.mxu0 0
    %3290 = vmatpush1.bf16.xpose.msra.mxu0 %v3273
    %3291 = vmatprep.subr.bf16.mxu0 0
    %3292 = vmatpush1.bf16.xpose.msra.mxu0 0
    %3293 = vmatprep.subr.bf16.mxu0 0
    %3294 = vmatpush1.bf16.xpose.msra.mxu0 0
    %3295 = vmatprep.subr.bf16.mxu0 0
    %3296 = vmatpush1.bf16.xpose.msra.mxu0 0
    %3297 = vmatprep.subr.bf16.mxu0 0
    %3298 = vmatpush1.bf16.xpose.msra.mxu0 0
    %3299 = vmatprep.subr.bf16.mxu0 0
    %3300 = vmatpush1.bf16.xpose.msra.mxu0 0
    %3301 = vmatprep.subr.bf16.mxu0 0
    %3302 = vmatpush1.bf16.xpose.msra.mxu0 0
    %3303 = vmatprep.subr.bf16.mxu0 0
    %3304 = vmatpush1.bf16.xpose.msra.mxu0 0
    %3305 = vmatprep.subr.bf16.mxu0 0
    %3306 = vmatpush1.bf16.xpose.msra.mxu0 0
    %3307 = vmatprep.mubr.bf16.mxu0 0
    %3308 = vmatmul.mubr.bf16.gmra.mrb[0].mxu0 %v3249
    %v3309 = vpop.f32.mrb[0].mxu0
    %v3310 = vadd.f32 0.0, %v3309
    %v3311 = vpop.f32.mrb[0].mxu0
    %v3312 = vpop.f32.mrb[0].mxu0
    %v3313 = vpop.f32.mrb[0].mxu0
    %3314 = vdwg.mxu0
    %v3315 = vpack.i.b16 %v271, %v271
    %v3316 = vlaneseq
    %v3317 = vshrl.u32 %v3316, 7
    %v3318 = vsub.s32 0, %v3317
    %v3319 = vrot.slane %v3315, %v3318
    %v3321 = vsel %vm169, %v3319, 0
    %v3324 = vsel %vm169, %v2931, 0
    %v3327 = vsel %vm169, %v2932, 0
    %v3330 = vsel %vm169, %v2933, 0
    %v3333 = vsel %vm169, %v2934, 0
    %v3336 = vsel %vm169, %v2935, 0
    %v3339 = vsel %vm169, %v2936, 0
    %v3342 = vsel %vm169, %v2937, 0
    %v3345 = vsel %vm169, %v2938, 0
    %3347 = vmatprep.subr.bf16.mxu0 0
    %3348 = vmatpush1.bf16.xpose.msra.mxu0 %v3324
    %3349 = vmatprep.subr.bf16.mxu0 0
    %3350 = vmatpush1.bf16.xpose.msra.mxu0 %v3327
    %3351 = vmatprep.subr.bf16.mxu0 0
    %3352 = vmatpush1.bf16.xpose.msra.mxu0 %v3330
    %3353 = vmatprep.subr.bf16.mxu0 0
    %3354 = vmatpush1.bf16.xpose.msra.mxu0 %v3333
    %3355 = vmatprep.subr.bf16.mxu0 0
    %3356 = vmatpush1.bf16.xpose.msra.mxu0 %v3336
    %3357 = vmatprep.subr.bf16.mxu0 0
    %3358 = vmatpush1.bf16.xpose.msra.mxu0 %v3339
    %3359 = vmatprep.subr.bf16.mxu0 0
    %3360 = vmatpush1.bf16.xpose.msra.mxu0 %v3342
    %3361 = vmatprep.subr.bf16.mxu0 0
    %3362 = vmatpush1.bf16.xpose.msra.mxu0 %v3345
    %3363 = vmatprep.subr.bf16.mxu0 0
    %3364 = vmatpush1.bf16.xpose.msra.mxu0 0
    %3365 = vmatprep.subr.bf16.mxu0 0
    %3366 = vmatpush1.bf16.xpose.msra.mxu0 0
    %3367 = vmatprep.subr.bf16.mxu0 0
    %3368 = vmatpush1.bf16.xpose.msra.mxu0 0
    %3369 = vmatprep.subr.bf16.mxu0 0
    %3370 = vmatpush1.bf16.xpose.msra.mxu0 0
    %3371 = vmatprep.subr.bf16.mxu0 0
    %3372 = vmatpush1.bf16.xpose.msra.mxu0 0
    %3373 = vmatprep.subr.bf16.mxu0 0
    %3374 = vmatpush1.bf16.xpose.msra.mxu0 0
    %3375 = vmatprep.subr.bf16.mxu0 0
    %3376 = vmatpush1.bf16.xpose.msra.mxu0 0
    %3377 = vmatprep.subr.bf16.mxu0 0
    %3378 = vmatpush1.bf16.xpose.msra.mxu0 0
    %3379 = vmatprep.mubr.bf16.mxu0 0
    %3380 = vmatmul.mubr.bf16.gmra.mrb[0].mxu0 %v3321
    %v3381 = vpop.f32.mrb[0].mxu0
    %v3382 = vadd.f32 0.0, %v3381
    %v3383 = vpop.f32.mrb[0].mxu0
    %v3384 = vpop.f32.mrb[0].mxu0
    %v3385 = vpop.f32.mrb[0].mxu0
    %3386 = vdwg.mxu0
    %v3387 = vpack.i.b16 %v272, %v272
    %v3388 = vlaneseq
    %v3389 = vshrl.u32 %v3388, 7
    %v3390 = vsub.s32 0, %v3389
    %v3391 = vrot.slane %v3387, %v3390
    %v3393 = vsel %vm169, %v3391, 0
    %v3396 = vsel %vm169, %v2939, 0
    %v3399 = vsel %vm169, %v2940, 0
    %v3402 = vsel %vm169, %v2941, 0
    %v3405 = vsel %vm169, %v2942, 0
    %v3408 = vsel %vm169, %v2943, 0
    %v3411 = vsel %vm169, %v2944, 0
    %v3414 = vsel %vm169, %v2945, 0
    %v3417 = vsel %vm169, %v2946, 0
    %3419 = vmatprep.subr.bf16.mxu0 0
    %3420 = vmatpush1.bf16.xpose.msra.mxu0 %v3396
    %3421 = vmatprep.subr.bf16.mxu0 0
    %3422 = vmatpush1.bf16.xpose.msra.mxu0 %v3399
    %3423 = vmatprep.subr.bf16.mxu0 0
    %3424 = vmatpush1.bf16.xpose.msra.mxu0 %v3402
    %3425 = vmatprep.subr.bf16.mxu0 0
    %3426 = vmatpush1.bf16.xpose.msra.mxu0 %v3405
    %3427 = vmatprep.subr.bf16.mxu0 0
    %3428 = vmatpush1.bf16.xpose.msra.mxu0 %v3408
    %3429 = vmatprep.subr.bf16.mxu0 0
    %3430 = vmatpush1.bf16.xpose.msra.mxu0 %v3411
    %3431 = vmatprep.subr.bf16.mxu0 0
    %3432 = vmatpush1.bf16.xpose.msra.mxu0 %v3414
    %3433 = vmatprep.subr.bf16.mxu0 0
    %3434 = vmatpush1.bf16.xpose.msra.mxu0 %v3417
    %3435 = vmatprep.subr.bf16.mxu0 0
    %3436 = vmatpush1.bf16.xpose.msra.mxu0 0
    %3437 = vmatprep.subr.bf16.mxu0 0
    %3438 = vmatpush1.bf16.xpose.msra.mxu0 0
    %3439 = vmatprep.subr.bf16.mxu0 0
    %3440 = vmatpush1.bf16.xpose.msra.mxu0 0
    %3441 = vmatprep.subr.bf16.mxu0 0
    %3442 = vmatpush1.bf16.xpose.msra.mxu0 0
    %3443 = vmatprep.subr.bf16.mxu0 0
    %3444 = vmatpush1.bf16.xpose.msra.mxu0 0
    %3445 = vmatprep.subr.bf16.mxu0 0
    %3446 = vmatpush1.bf16.xpose.msra.mxu0 0
    %3447 = vmatprep.subr.bf16.mxu0 0
    %3448 = vmatpush1.bf16.xpose.msra.mxu0 0
    %3449 = vmatprep.subr.bf16.mxu0 0
    %3450 = vmatpush1.bf16.xpose.msra.mxu0 0
    %3451 = vmatprep.mubr.bf16.mxu0 0
    %3452 = vmatmul.mubr.bf16.gmra.mrb[0].mxu0 %v3393
    %v3453 = vpop.f32.mrb[0].mxu0
    %v3454 = vadd.f32 0.0, %v3453
    %v3455 = vpop.f32.mrb[0].mxu0
    %v3456 = vpop.f32.mrb[0].mxu0
    %v3457 = vpop.f32.mrb[0].mxu0
    %3458 = vdwg.mxu0
    %v3459 = vpack.i.b16 %v273, %v273
    %v3460 = vlaneseq
    %v3461 = vshrl.u32 %v3460, 7
    %v3462 = vsub.s32 0, %v3461
    %v3463 = vrot.slane %v3459, %v3462
    %v3465 = vsel %vm169, %v3463, 0
    %v3468 = vsel %vm169, %v2947, 0
    %v3471 = vsel %vm169, %v2948, 0
    %v3474 = vsel %vm169, %v2949, 0
    %v3477 = vsel %vm169, %v2950, 0
    %v3480 = vsel %vm169, %v2951, 0
    %v3483 = vsel %vm169, %v2952, 0
    %v3486 = vsel %vm169, %v2953, 0
    %v3489 = vsel %vm169, %v2954, 0
    %3491 = vmatprep.subr.bf16.mxu0 0
    %3492 = vmatpush1.bf16.xpose.msra.mxu0 %v3468
    %3493 = vmatprep.subr.bf16.mxu0 0
    %3494 = vmatpush1.bf16.xpose.msra.mxu0 %v3471
    %3495 = vmatprep.subr.bf16.mxu0 0
    %3496 = vmatpush1.bf16.xpose.msra.mxu0 %v3474
    %3497 = vmatprep.subr.bf16.mxu0 0
    %3498 = vmatpush1.bf16.xpose.msra.mxu0 %v3477
    %3499 = vmatprep.subr.bf16.mxu0 0
    %3500 = vmatpush1.bf16.xpose.msra.mxu0 %v3480
    %3501 = vmatprep.subr.bf16.mxu0 0
    %3502 = vmatpush1.bf16.xpose.msra.mxu0 %v3483
    %3503 = vmatprep.subr.bf16.mxu0 0
    %3504 = vmatpush1.bf16.xpose.msra.mxu0 %v3486
    %3505 = vmatprep.subr.bf16.mxu0 0
    %3506 = vmatpush1.bf16.xpose.msra.mxu0 %v3489
    %3507 = vmatprep.subr.bf16.mxu0 0
    %3508 = vmatpush1.bf16.xpose.msra.mxu0 0
    %3509 = vmatprep.subr.bf16.mxu0 0
    %3510 = vmatpush1.bf16.xpose.msra.mxu0 0
    %3511 = vmatprep.subr.bf16.mxu0 0
    %3512 = vmatpush1.bf16.xpose.msra.mxu0 0
    %3513 = vmatprep.subr.bf16.mxu0 0
    %3514 = vmatpush1.bf16.xpose.msra.mxu0 0
    %3515 = vmatprep.subr.bf16.mxu0 0
    %3516 = vmatpush1.bf16.xpose.msra.mxu0 0
    %3517 = vmatprep.subr.bf16.mxu0 0
    %3518 = vmatpush1.bf16.xpose.msra.mxu0 0
    %3519 = vmatprep.subr.bf16.mxu0 0
    %3520 = vmatpush1.bf16.xpose.msra.mxu0 0
    %3521 = vmatprep.subr.bf16.mxu0 0
    %3522 = vmatpush1.bf16.xpose.msra.mxu0 0
    %3523 = vmatprep.mubr.bf16.mxu0 0
    %3524 = vmatmul.mubr.bf16.gmra.mrb[0].mxu0 %v3465
    %v3525 = vpop.f32.mrb[0].mxu0
    %v3526 = vadd.f32 0.0, %v3525
    %v3527 = vpop.f32.mrb[0].mxu0
    %v3528 = vpop.f32.mrb[0].mxu0
    %v3529 = vpop.f32.mrb[0].mxu0
    %3530 = vdwg.mxu0
    %v3531 = vpack.i.b16 %v274, %v274
    %v3532 = vlaneseq
    %v3533 = vshrl.u32 %v3532, 7
    %v3534 = vsub.s32 0, %v3533
    %v3535 = vrot.slane %v3531, %v3534
    %v3537 = vsel %vm169, %v3535, 0
    %v3540 = vsel %vm169, %v2955, 0
    %v3543 = vsel %vm169, %v2956, 0
    %v3546 = vsel %vm169, %v2957, 0
    %v3549 = vsel %vm169, %v2958, 0
    %v3552 = vsel %vm169, %v2959, 0
    %v3555 = vsel %vm169, %v2960, 0
    %v3558 = vsel %vm169, %v2961, 0
    %v3561 = vsel %vm169, %v2962, 0
    %3563 = vmatprep.subr.bf16.mxu0 0
    %3564 = vmatpush1.bf16.xpose.msra.mxu0 %v3540
    %3565 = vmatprep.subr.bf16.mxu0 0
    %3566 = vmatpush1.bf16.xpose.msra.mxu0 %v3543
    %3567 = vmatprep.subr.bf16.mxu0 0
    %3568 = vmatpush1.bf16.xpose.msra.mxu0 %v3546
    %3569 = vmatprep.subr.bf16.mxu0 0
    %3570 = vmatpush1.bf16.xpose.msra.mxu0 %v3549
    %3571 = vmatprep.subr.bf16.mxu0 0
    %3572 = vmatpush1.bf16.xpose.msra.mxu0 %v3552
    %3573 = vmatprep.subr.bf16.mxu0 0
    %3574 = vmatpush1.bf16.xpose.msra.mxu0 %v3555
    %3575 = vmatprep.subr.bf16.mxu0 0
    %3576 = vmatpush1.bf16.xpose.msra.mxu0 %v3558
    %3577 = vmatprep.subr.bf16.mxu0 0
    %3578 = vmatpush1.bf16.xpose.msra.mxu0 %v3561
    %3579 = vmatprep.subr.bf16.mxu0 0
    %3580 = vmatpush1.bf16.xpose.msra.mxu0 0
    %3581 = vmatprep.subr.bf16.mxu0 0
    %3582 = vmatpush1.bf16.xpose.msra.mxu0 0
    %3583 = vmatprep.subr.bf16.mxu0 0
    %3584 = vmatpush1.bf16.xpose.msra.mxu0 0
    %3585 = vmatprep.subr.bf16.mxu0 0
    %3586 = vmatpush1.bf16.xpose.msra.mxu0 0
    %3587 = vmatprep.subr.bf16.mxu0 0
    %3588 = vmatpush1.bf16.xpose.msra.mxu0 0
    %3589 = vmatprep.subr.bf16.mxu0 0
    %3590 = vmatpush1.bf16.xpose.msra.mxu0 0
    %3591 = vmatprep.subr.bf16.mxu0 0
    %3592 = vmatpush1.bf16.xpose.msra.mxu0 0
    %3593 = vmatprep.subr.bf16.mxu0 0
    %3594 = vmatpush1.bf16.xpose.msra.mxu0 0
    %3595 = vmatprep.mubr.bf16.mxu0 0
    %3596 = vmatmul.mubr.bf16.gmra.mrb[0].mxu0 %v3537
    %v3597 = vpop.f32.mrb[0].mxu0
    %v3598 = vadd.f32 0.0, %v3597
    %v3599 = vpop.f32.mrb[0].mxu0
    %v3600 = vpop.f32.mrb[0].mxu0
    %v3601 = vpop.f32.mrb[0].mxu0
    %3602 = vdwg.mxu0
    %v3603 = vpack.i.b16 %v275, %v275
    %v3604 = vlaneseq
    %v3605 = vshrl.u32 %v3604, 7
    %v3606 = vsub.s32 0, %v3605
    %v3607 = vrot.slane %v3603, %v3606
    %v3609 = vsel %vm169, %v3607, 0
    %v3612 = vsel %vm169, %v2963, 0
    %v3615 = vsel %vm169, %v2964, 0
    %v3618 = vsel %vm169, %v2965, 0
    %v3621 = vsel %vm169, %v2966, 0
    %v3624 = vsel %vm169, %v2967, 0
    %v3627 = vsel %vm169, %v2968, 0
    %v3630 = vsel %vm169, %v2969, 0
    %v3633 = vsel %vm169, %v2970, 0
    %3635 = vmatprep.subr.bf16.mxu0 0
    %3636 = vmatpush1.bf16.xpose.msra.mxu0 %v3612
    %3637 = vmatprep.subr.bf16.mxu0 0
    %3638 = vmatpush1.bf16.xpose.msra.mxu0 %v3615
    %3639 = vmatprep.subr.bf16.mxu0 0
    %3640 = vmatpush1.bf16.xpose.msra.mxu0 %v3618
    %3641 = vmatprep.subr.bf16.mxu0 0
    %3642 = vmatpush1.bf16.xpose.msra.mxu0 %v3621
    %3643 = vmatprep.subr.bf16.mxu0 0
    %3644 = vmatpush1.bf16.xpose.msra.mxu0 %v3624
    %3645 = vmatprep.subr.bf16.mxu0 0
    %3646 = vmatpush1.bf16.xpose.msra.mxu0 %v3627
    %3647 = vmatprep.subr.bf16.mxu0 0
    %3648 = vmatpush1.bf16.xpose.msra.mxu0 %v3630
    %3649 = vmatprep.subr.bf16.mxu0 0
    %3650 = vmatpush1.bf16.xpose.msra.mxu0 %v3633
    %3651 = vmatprep.subr.bf16.mxu0 0
    %3652 = vmatpush1.bf16.xpose.msra.mxu0 0
    %3653 = vmatprep.subr.bf16.mxu0 0
    %3654 = vmatpush1.bf16.xpose.msra.mxu0 0
    %3655 = vmatprep.subr.bf16.mxu0 0
    %3656 = vmatpush1.bf16.xpose.msra.mxu0 0
    %3657 = vmatprep.subr.bf16.mxu0 0
    %3658 = vmatpush1.bf16.xpose.msra.mxu0 0
    %3659 = vmatprep.subr.bf16.mxu0 0
    %3660 = vmatpush1.bf16.xpose.msra.mxu0 0
    %3661 = vmatprep.subr.bf16.mxu0 0
    %3662 = vmatpush1.bf16.xpose.msra.mxu0 0
    %3663 = vmatprep.subr.bf16.mxu0 0
    %3664 = vmatpush1.bf16.xpose.msra.mxu0 0
    %3665 = vmatprep.subr.bf16.mxu0 0
    %3666 = vmatpush1.bf16.xpose.msra.mxu0 0
    %3667 = vmatprep.mubr.bf16.mxu0 0
    %3668 = vmatmul.mubr.bf16.gmra.mrb[0].mxu0 %v3609
    %v3669 = vpop.f32.mrb[0].mxu0
    %v3670 = vadd.f32 0.0, %v3669
    %v3671 = vpop.f32.mrb[0].mxu0
    %v3672 = vpop.f32.mrb[0].mxu0
    %v3673 = vpop.f32.mrb[0].mxu0
    %3674 = vdwg.mxu0
    %v3675 = vpack.i.b16 %v276, %v276
    %v3676 = vlaneseq
    %v3677 = vshrl.u32 %v3676, 7
    %v3678 = vsub.s32 0, %v3677
    %v3679 = vrot.slane %v3675, %v3678
    %v3681 = vsel %vm169, %v3679, 0
    %v3684 = vsel %vm169, %v2971, 0
    %v3687 = vsel %vm169, %v2972, 0
    %v3690 = vsel %vm169, %v2973, 0
    %v3693 = vsel %vm169, %v2974, 0
    %v3696 = vsel %vm169, %v2975, 0
    %v3699 = vsel %vm169, %v2976, 0
    %v3702 = vsel %vm169, %v2977, 0
    %v3705 = vsel %vm169, %v2978, 0
    %3707 = vmatprep.subr.bf16.mxu0 0
    %3708 = vmatpush1.bf16.xpose.msra.mxu0 %v3684
    %3709 = vmatprep.subr.bf16.mxu0 0
    %3710 = vmatpush1.bf16.xpose.msra.mxu0 %v3687
    %3711 = vmatprep.subr.bf16.mxu0 0
    %3712 = vmatpush1.bf16.xpose.msra.mxu0 %v3690
    %3713 = vmatprep.subr.bf16.mxu0 0
    %3714 = vmatpush1.bf16.xpose.msra.mxu0 %v3693
    %3715 = vmatprep.subr.bf16.mxu0 0
    %3716 = vmatpush1.bf16.xpose.msra.mxu0 %v3696
    %3717 = vmatprep.subr.bf16.mxu0 0
    %3718 = vmatpush1.bf16.xpose.msra.mxu0 %v3699
    %3719 = vmatprep.subr.bf16.mxu0 0
    %3720 = vmatpush1.bf16.xpose.msra.mxu0 %v3702
    %3721 = vmatprep.subr.bf16.mxu0 0
    %3722 = vmatpush1.bf16.xpose.msra.mxu0 %v3705
    %3723 = vmatprep.subr.bf16.mxu0 0
    %3724 = vmatpush1.bf16.xpose.msra.mxu0 0
    %3725 = vmatprep.subr.bf16.mxu0 0
    %3726 = vmatpush1.bf16.xpose.msra.mxu0 0
    %3727 = vmatprep.subr.bf16.mxu0 0
    %3728 = vmatpush1.bf16.xpose.msra.mxu0 0
    %3729 = vmatprep.subr.bf16.mxu0 0
    %3730 = vmatpush1.bf16.xpose.msra.mxu0 0
    %3731 = vmatprep.subr.bf16.mxu0 0
    %3732 = vmatpush1.bf16.xpose.msra.mxu0 0
    %3733 = vmatprep.subr.bf16.mxu0 0
    %3734 = vmatpush1.bf16.xpose.msra.mxu0 0
    %3735 = vmatprep.subr.bf16.mxu0 0
    %3736 = vmatpush1.bf16.xpose.msra.mxu0 0
    %3737 = vmatprep.subr.bf16.mxu0 0
    %3738 = vmatpush1.bf16.xpose.msra.mxu0 0
    %3739 = vmatprep.mubr.bf16.mxu0 0
    %3740 = vmatmul.mubr.bf16.gmra.mrb[0].mxu0 %v3681
    %v3741 = vpop.f32.mrb[0].mxu0
    %v3742 = vadd.f32 0.0, %v3741
    %v3743 = vpop.f32.mrb[0].mxu0
    %v3744 = vpop.f32.mrb[0].mxu0
    %v3745 = vpop.f32.mrb[0].mxu0
    %3746 = vdwg.mxu0
    %v3747 = vpack.i.b16 %v277, %v277
    %v3748 = vlaneseq
    %v3749 = vshrl.u32 %v3748, 7
    %v3750 = vsub.s32 0, %v3749
    %v3751 = vrot.slane %v3747, %v3750
    %v3753 = vsel %vm169, %v3751, 0
    %v3756 = vsel %vm169, %v2979, 0
    %v3759 = vsel %vm169, %v2980, 0
    %v3762 = vsel %vm169, %v2981, 0
    %v3765 = vsel %vm169, %v2982, 0
    %v3768 = vsel %vm169, %v2983, 0
    %v3771 = vsel %vm169, %v2984, 0
    %v3774 = vsel %vm169, %v2985, 0
    %v3777 = vsel %vm169, %v2986, 0
    %3779 = vmatprep.subr.bf16.mxu0 0
    %3780 = vmatpush1.bf16.xpose.msra.mxu0 %v3756
    %3781 = vmatprep.subr.bf16.mxu0 0
    %3782 = vmatpush1.bf16.xpose.msra.mxu0 %v3759
    %3783 = vmatprep.subr.bf16.mxu0 0
    %3784 = vmatpush1.bf16.xpose.msra.mxu0 %v3762
    %3785 = vmatprep.subr.bf16.mxu0 0
    %3786 = vmatpush1.bf16.xpose.msra.mxu0 %v3765
    %3787 = vmatprep.subr.bf16.mxu0 0
    %3788 = vmatpush1.bf16.xpose.msra.mxu0 %v3768
    %3789 = vmatprep.subr.bf16.mxu0 0
    %3790 = vmatpush1.bf16.xpose.msra.mxu0 %v3771
    %3791 = vmatprep.subr.bf16.mxu0 0
    %3792 = vmatpush1.bf16.xpose.msra.mxu0 %v3774
    %3793 = vmatprep.subr.bf16.mxu0 0
    %3794 = vmatpush1.bf16.xpose.msra.mxu0 %v3777
    %3795 = vmatprep.subr.bf16.mxu0 0
    %3796 = vmatpush1.bf16.xpose.msra.mxu0 0
    %3797 = vmatprep.subr.bf16.mxu0 0
    %3798 = vmatpush1.bf16.xpose.msra.mxu0 0
    %3799 = vmatprep.subr.bf16.mxu0 0
    %3800 = vmatpush1.bf16.xpose.msra.mxu0 0
    %3801 = vmatprep.subr.bf16.mxu0 0
    %3802 = vmatpush1.bf16.xpose.msra.mxu0 0
    %3803 = vmatprep.subr.bf16.mxu0 0
    %3804 = vmatpush1.bf16.xpose.msra.mxu0 0
    %3805 = vmatprep.subr.bf16.mxu0 0
    %3806 = vmatpush1.bf16.xpose.msra.mxu0 0
    %3807 = vmatprep.subr.bf16.mxu0 0
    %3808 = vmatpush1.bf16.xpose.msra.mxu0 0
    %3809 = vmatprep.subr.bf16.mxu0 0
    %3810 = vmatpush1.bf16.xpose.msra.mxu0 0
    %3811 = vmatprep.mubr.bf16.mxu0 0
    %3812 = vmatmul.mubr.bf16.gmra.mrb[0].mxu0 %v3753
    %v3813 = vpop.f32.mrb[0].mxu0
    %v3814 = vadd.f32 0.0, %v3813
    %v3815 = vpop.f32.mrb[0].mxu0
    %v3816 = vpop.f32.mrb[0].mxu0
    %v3817 = vpop.f32.mrb[0].mxu0
    %3818 = vdwg.mxu0
    %v3819 = vpack.i.b16 %v278, %v278
    %v3820 = vlaneseq
    %v3821 = vshrl.u32 %v3820, 7
    %v3822 = vsub.s32 0, %v3821
    %v3823 = vrot.slane %v3819, %v3822
    %v3825 = vsel %vm169, %v3823, 0
    %v3828 = vsel %vm169, %v2987, 0
    %v3831 = vsel %vm169, %v2988, 0
    %v3834 = vsel %vm169, %v2989, 0
    %v3837 = vsel %vm169, %v2990, 0
    %v3840 = vsel %vm169, %v2991, 0
    %v3843 = vsel %vm169, %v2992, 0
    %v3846 = vsel %vm169, %v2993, 0
    %v3849 = vsel %vm169, %v2994, 0
    %3851 = vmatprep.subr.bf16.mxu0 0
    %3852 = vmatpush1.bf16.xpose.msra.mxu0 %v3828
    %3853 = vmatprep.subr.bf16.mxu0 0
    %3854 = vmatpush1.bf16.xpose.msra.mxu0 %v3831
    %3855 = vmatprep.subr.bf16.mxu0 0
    %3856 = vmatpush1.bf16.xpose.msra.mxu0 %v3834
    %3857 = vmatprep.subr.bf16.mxu0 0
    %3858 = vmatpush1.bf16.xpose.msra.mxu0 %v3837
    %3859 = vmatprep.subr.bf16.mxu0 0
    %3860 = vmatpush1.bf16.xpose.msra.mxu0 %v3840
    %3861 = vmatprep.subr.bf16.mxu0 0
    %3862 = vmatpush1.bf16.xpose.msra.mxu0 %v3843
    %3863 = vmatprep.subr.bf16.mxu0 0
    %3864 = vmatpush1.bf16.xpose.msra.mxu0 %v3846
    %3865 = vmatprep.subr.bf16.mxu0 0
    %3866 = vmatpush1.bf16.xpose.msra.mxu0 %v3849
    %3867 = vmatprep.subr.bf16.mxu0 0
    %3868 = vmatpush1.bf16.xpose.msra.mxu0 0
    %3869 = vmatprep.subr.bf16.mxu0 0
    %3870 = vmatpush1.bf16.xpose.msra.mxu0 0
    %3871 = vmatprep.subr.bf16.mxu0 0
    %3872 = vmatpush1.bf16.xpose.msra.mxu0 0
    %3873 = vmatprep.subr.bf16.mxu0 0
    %3874 = vmatpush1.bf16.xpose.msra.mxu0 0
    %3875 = vmatprep.subr.bf16.mxu0 0
    %3876 = vmatpush1.bf16.xpose.msra.mxu0 0
    %3877 = vmatprep.subr.bf16.mxu0 0
    %3878 = vmatpush1.bf16.xpose.msra.mxu0 0
    %3879 = vmatprep.subr.bf16.mxu0 0
    %3880 = vmatpush1.bf16.xpose.msra.mxu0 0
    %3881 = vmatprep.subr.bf16.mxu0 0
    %3882 = vmatpush1.bf16.xpose.msra.mxu0 0
    %3883 = vmatprep.mubr.bf16.mxu0 0
    %3884 = vmatmul.mubr.bf16.gmra.mrb[0].mxu0 %v3825
    %v3885 = vpop.f32.mrb[0].mxu0
    %v3886 = vadd.f32 0.0, %v3885
    %v3887 = vpop.f32.mrb[0].mxu0
    %v3888 = vpop.f32.mrb[0].mxu0
    %v3889 = vpop.f32.mrb[0].mxu0
    %3890 = vdwg.mxu0
    %v3891 = vpack.i.b16 %v279, %v279
    %v3892 = vlaneseq
    %v3893 = vshrl.u32 %v3892, 7
    %v3894 = vsub.s32 0, %v3893
    %v3895 = vrot.slane %v3891, %v3894
    %v3897 = vsel %vm169, %v3895, 0
    %v3900 = vsel %vm169, %v2995, 0
    %v3903 = vsel %vm169, %v2996, 0
    %v3906 = vsel %vm169, %v2997, 0
    %v3909 = vsel %vm169, %v2998, 0
    %v3912 = vsel %vm169, %v2999, 0
    %v3915 = vsel %vm169, %v3000, 0
    %v3918 = vsel %vm169, %v3001, 0
    %v3921 = vsel %vm169, %v3002, 0
    %3923 = vmatprep.subr.bf16.mxu0 0
    %3924 = vmatpush1.bf16.xpose.msra.mxu0 %v3900
    %3925 = vmatprep.subr.bf16.mxu0 0
    %3926 = vmatpush1.bf16.xpose.msra.mxu0 %v3903
    %3927 = vmatprep.subr.bf16.mxu0 0
    %3928 = vmatpush1.bf16.xpose.msra.mxu0 %v3906
    %3929 = vmatprep.subr.bf16.mxu0 0
    %3930 = vmatpush1.bf16.xpose.msra.mxu0 %v3909
    %3931 = vmatprep.subr.bf16.mxu0 0
    %3932 = vmatpush1.bf16.xpose.msra.mxu0 %v3912
    %3933 = vmatprep.subr.bf16.mxu0 0
    %3934 = vmatpush1.bf16.xpose.msra.mxu0 %v3915
    %3935 = vmatprep.subr.bf16.mxu0 0
    %3936 = vmatpush1.bf16.xpose.msra.mxu0 %v3918
    %3937 = vmatprep.subr.bf16.mxu0 0
    %3938 = vmatpush1.bf16.xpose.msra.mxu0 %v3921
    %3939 = vmatprep.subr.bf16.mxu0 0
    %3940 = vmatpush1.bf16.xpose.msra.mxu0 0
    %3941 = vmatprep.subr.bf16.mxu0 0
    %3942 = vmatpush1.bf16.xpose.msra.mxu0 0
    %3943 = vmatprep.subr.bf16.mxu0 0
    %3944 = vmatpush1.bf16.xpose.msra.mxu0 0
    %3945 = vmatprep.subr.bf16.mxu0 0
    %3946 = vmatpush1.bf16.xpose.msra.mxu0 0
    %3947 = vmatprep.subr.bf16.mxu0 0
    %3948 = vmatpush1.bf16.xpose.msra.mxu0 0
    %3949 = vmatprep.subr.bf16.mxu0 0
    %3950 = vmatpush1.bf16.xpose.msra.mxu0 0
    %3951 = vmatprep.subr.bf16.mxu0 0
    %3952 = vmatpush1.bf16.xpose.msra.mxu0 0
    %3953 = vmatprep.subr.bf16.mxu0 0
    %3954 = vmatpush1.bf16.xpose.msra.mxu0 0
    %3955 = vmatprep.mubr.bf16.mxu0 0
    %3956 = vmatmul.mubr.bf16.gmra.mrb[0].mxu0 %v3897
    %v3957 = vpop.f32.mrb[0].mxu0
    %v3958 = vadd.f32 0.0, %v3957
    %v3959 = vpop.f32.mrb[0].mxu0
    %v3960 = vpop.f32.mrb[0].mxu0
    %v3961 = vpop.f32.mrb[0].mxu0
    %3962 = vdwg.mxu0
    %v3963 = vpack.i.b16 %v280, %v280
    %v3964 = vlaneseq
    %v3965 = vshrl.u32 %v3964, 7
    %v3966 = vsub.s32 0, %v3965
    %v3967 = vrot.slane %v3963, %v3966
    %v3969 = vsel %vm169, %v3967, 0
    %v3972 = vsel %vm169, %v3003, 0
    %v3975 = vsel %vm169, %v3004, 0
    %v3978 = vsel %vm169, %v3005, 0
    %v3981 = vsel %vm169, %v3006, 0
    %v3984 = vsel %vm169, %v3007, 0
    %v3987 = vsel %vm169, %v3008, 0
    %v3990 = vsel %vm169, %v3009, 0
    %v3993 = vsel %vm169, %v3010, 0
    %3995 = vmatprep.subr.bf16.mxu0 0
    %3996 = vmatpush1.bf16.xpose.msra.mxu0 %v3972
    %3997 = vmatprep.subr.bf16.mxu0 0
    %3998 = vmatpush1.bf16.xpose.msra.mxu0 %v3975
    %3999 = vmatprep.subr.bf16.mxu0 0
    %4000 = vmatpush1.bf16.xpose.msra.mxu0 %v3978
    %4001 = vmatprep.subr.bf16.mxu0 0
    %4002 = vmatpush1.bf16.xpose.msra.mxu0 %v3981
    %4003 = vmatprep.subr.bf16.mxu0 0
    %4004 = vmatpush1.bf16.xpose.msra.mxu0 %v3984
    %4005 = vmatprep.subr.bf16.mxu0 0
    %4006 = vmatpush1.bf16.xpose.msra.mxu0 %v3987
    %4007 = vmatprep.subr.bf16.mxu0 0
    %4008 = vmatpush1.bf16.xpose.msra.mxu0 %v3990
    %4009 = vmatprep.subr.bf16.mxu0 0
    %4010 = vmatpush1.bf16.xpose.msra.mxu0 %v3993
    %4011 = vmatprep.subr.bf16.mxu0 0
    %4012 = vmatpush1.bf16.xpose.msra.mxu0 0
    %4013 = vmatprep.subr.bf16.mxu0 0
    %4014 = vmatpush1.bf16.xpose.msra.mxu0 0
    %4015 = vmatprep.subr.bf16.mxu0 0
    %4016 = vmatpush1.bf16.xpose.msra.mxu0 0
    %4017 = vmatprep.subr.bf16.mxu0 0
    %4018 = vmatpush1.bf16.xpose.msra.mxu0 0
    %4019 = vmatprep.subr.bf16.mxu0 0
    %4020 = vmatpush1.bf16.xpose.msra.mxu0 0
    %4021 = vmatprep.subr.bf16.mxu0 0
    %4022 = vmatpush1.bf16.xpose.msra.mxu0 0
    %4023 = vmatprep.subr.bf16.mxu0 0
    %4024 = vmatpush1.bf16.xpose.msra.mxu0 0
    %4025 = vmatprep.subr.bf16.mxu0 0
    %4026 = vmatpush1.bf16.xpose.msra.mxu0 0
    %4027 = vmatprep.mubr.bf16.mxu0 0
    %4028 = vmatmul.mubr.bf16.gmra.mrb[0].mxu0 %v3969
    %v4029 = vpop.f32.mrb[0].mxu0
    %v4030 = vadd.f32 0.0, %v4029
    %v4031 = vpop.f32.mrb[0].mxu0
    %v4032 = vpop.f32.mrb[0].mxu0
    %v4033 = vpop.f32.mrb[0].mxu0
    %4034 = vdwg.mxu0
    %v4035 = vpack.i.b16 %v281, %v281
    %v4036 = vlaneseq
    %v4037 = vshrl.u32 %v4036, 7
    %v4038 = vsub.s32 0, %v4037
    %v4039 = vrot.slane %v4035, %v4038
    %v4041 = vsel %vm169, %v4039, 0
    %v4044 = vsel %vm169, %v3011, 0
    %v4047 = vsel %vm169, %v3012, 0
    %v4050 = vsel %vm169, %v3013, 0
    %v4053 = vsel %vm169, %v3014, 0
    %v4056 = vsel %vm169, %v3015, 0
    %v4059 = vsel %vm169, %v3016, 0
    %v4062 = vsel %vm169, %v3017, 0
    %v4065 = vsel %vm169, %v3018, 0
    %4067 = vmatprep.subr.bf16.mxu0 0
    %4068 = vmatpush1.bf16.xpose.msra.mxu0 %v4044
    %4069 = vmatprep.subr.bf16.mxu0 0
    %4070 = vmatpush1.bf16.xpose.msra.mxu0 %v4047
    %4071 = vmatprep.subr.bf16.mxu0 0
    %4072 = vmatpush1.bf16.xpose.msra.mxu0 %v4050
    %4073 = vmatprep.subr.bf16.mxu0 0
    %4074 = vmatpush1.bf16.xpose.msra.mxu0 %v4053
    %4075 = vmatprep.subr.bf16.mxu0 0
    %4076 = vmatpush1.bf16.xpose.msra.mxu0 %v4056
    %4077 = vmatprep.subr.bf16.mxu0 0
    %4078 = vmatpush1.bf16.xpose.msra.mxu0 %v4059
    %4079 = vmatprep.subr.bf16.mxu0 0
    %4080 = vmatpush1.bf16.xpose.msra.mxu0 %v4062
    %4081 = vmatprep.subr.bf16.mxu0 0
    %4082 = vmatpush1.bf16.xpose.msra.mxu0 %v4065
    %4083 = vmatprep.subr.bf16.mxu0 0
    %4084 = vmatpush1.bf16.xpose.msra.mxu0 0
    %4085 = vmatprep.subr.bf16.mxu0 0
    %4086 = vmatpush1.bf16.xpose.msra.mxu0 0
    %4087 = vmatprep.subr.bf16.mxu0 0
    %4088 = vmatpush1.bf16.xpose.msra.mxu0 0
    %4089 = vmatprep.subr.bf16.mxu0 0
    %4090 = vmatpush1.bf16.xpose.msra.mxu0 0
    %4091 = vmatprep.subr.bf16.mxu0 0
    %4092 = vmatpush1.bf16.xpose.msra.mxu0 0
    %4093 = vmatprep.subr.bf16.mxu0 0
    %4094 = vmatpush1.bf16.xpose.msra.mxu0 0
    %4095 = vmatprep.subr.bf16.mxu0 0
    %4096 = vmatpush1.bf16.xpose.msra.mxu0 0
    %4097 = vmatprep.subr.bf16.mxu0 0
    %4098 = vmatpush1.bf16.xpose.msra.mxu0 0
    %4099 = vmatprep.mubr.bf16.mxu0 0
    %4100 = vmatmul.mubr.bf16.gmra.mrb[0].mxu0 %v4041
    %v4101 = vpop.f32.mrb[0].mxu0
    %v4102 = vadd.f32 0.0, %v4101
    %v4103 = vpop.f32.mrb[0].mxu0
    %v4104 = vpop.f32.mrb[0].mxu0
    %v4105 = vpop.f32.mrb[0].mxu0
    %4106 = vdwg.mxu0
    %v4107 = vpack.i.b16 %v282, %v282
    %v4108 = vlaneseq
    %v4109 = vshrl.u32 %v4108, 7
    %v4110 = vsub.s32 0, %v4109
    %v4111 = vrot.slane %v4107, %v4110
    %v4113 = vsel %vm169, %v4111, 0
    %v4116 = vsel %vm169, %v3019, 0
    %v4119 = vsel %vm169, %v3020, 0
    %v4122 = vsel %vm169, %v3021, 0
    %v4125 = vsel %vm169, %v3022, 0
    %v4128 = vsel %vm169, %v3023, 0
    %v4131 = vsel %vm169, %v3024, 0
    %v4134 = vsel %vm169, %v3025, 0
    %v4137 = vsel %vm169, %v3026, 0
    %4139 = vmatprep.subr.bf16.mxu0 0
    %4140 = vmatpush1.bf16.xpose.msra.mxu0 %v4116
    %4141 = vmatprep.subr.bf16.mxu0 0
    %4142 = vmatpush1.bf16.xpose.msra.mxu0 %v4119
    %4143 = vmatprep.subr.bf16.mxu0 0
    %4144 = vmatpush1.bf16.xpose.msra.mxu0 %v4122
    %4145 = vmatprep.subr.bf16.mxu0 0
    %4146 = vmatpush1.bf16.xpose.msra.mxu0 %v4125
    %4147 = vmatprep.subr.bf16.mxu0 0
    %4148 = vmatpush1.bf16.xpose.msra.mxu0 %v4128
    %4149 = vmatprep.subr.bf16.mxu0 0
    %4150 = vmatpush1.bf16.xpose.msra.mxu0 %v4131
    %4151 = vmatprep.subr.bf16.mxu0 0
    %4152 = vmatpush1.bf16.xpose.msra.mxu0 %v4134
    %4153 = vmatprep.subr.bf16.mxu0 0
    %4154 = vmatpush1.bf16.xpose.msra.mxu0 %v4137
    %4155 = vmatprep.subr.bf16.mxu0 0
    %4156 = vmatpush1.bf16.xpose.msra.mxu0 0
    %4157 = vmatprep.subr.bf16.mxu0 0
    %4158 = vmatpush1.bf16.xpose.msra.mxu0 0
    %4159 = vmatprep.subr.bf16.mxu0 0
    %4160 = vmatpush1.bf16.xpose.msra.mxu0 0
    %4161 = vmatprep.subr.bf16.mxu0 0
    %4162 = vmatpush1.bf16.xpose.msra.mxu0 0
    %4163 = vmatprep.subr.bf16.mxu0 0
    %4164 = vmatpush1.bf16.xpose.msra.mxu0 0
    %4165 = vmatprep.subr.bf16.mxu0 0
    %4166 = vmatpush1.bf16.xpose.msra.mxu0 0
    %4167 = vmatprep.subr.bf16.mxu0 0
    %4168 = vmatpush1.bf16.xpose.msra.mxu0 0
    %4169 = vmatprep.subr.bf16.mxu0 0
    %4170 = vmatpush1.bf16.xpose.msra.mxu0 0
    %4171 = vmatprep.mubr.bf16.mxu0 0
    %4172 = vmatmul.mubr.bf16.gmra.mrb[0].mxu0 %v4113
    %v4173 = vpop.f32.mrb[0].mxu0
    %v4174 = vadd.f32 0.0, %v4173
    %v4175 = vpop.f32.mrb[0].mxu0
    %v4176 = vpop.f32.mrb[0].mxu0
    %v4177 = vpop.f32.mrb[0].mxu0
    %4178 = vdwg.mxu0
    %v4195 = vrot.slane %v3166, 7
    %vm4196 = vcmask 1041409
    %v4197 = vsel %vm4196, %v4195, %v3094
    %v4198 = vrot.slane %v3238, 6
    %vm4199 = vcmask 1042434
    %v4200 = vsel %vm4199, %v4198, %v4197
    %v4201 = vrot.slane %v3310, 5
    %vm4202 = vcmask 1043459
    %v4203 = vsel %vm4202, %v4201, %v4200
    %v4204 = vrot.slane %v3382, 4
    %vm4205 = vcmask 1044484
    %v4206 = vsel %vm4205, %v4204, %v4203
    %v4207 = vrot.slane %v3454, 3
    %vm4208 = vcmask 1045509
    %v4209 = vsel %vm4208, %v4207, %v4206
    %v4210 = vrot.slane %v3526, 2
    %vm4211 = vcmask 1046534
    %v4212 = vsel %vm4211, %v4210, %v4209
    %v4213 = vrot.slane %v3598, 1
    %vm4214 = vcmask 1047559
    %v4215 = vsel %vm4214, %v4213, %v4212
    %v4216 = vrot.slane %v3742, 7
    %v4217 = vsel %vm4196, %v4216, %v3670
    %v4218 = vrot.slane %v3814, 6
    %v4219 = vsel %vm4199, %v4218, %v4217
    %v4220 = vrot.slane %v3886, 5
    %v4221 = vsel %vm4202, %v4220, %v4219
    %v4222 = vrot.slane %v3958, 4
    %v4223 = vsel %vm4205, %v4222, %v4221
    %v4224 = vrot.slane %v4030, 3
    %v4225 = vsel %vm4208, %v4224, %v4223
    %v4226 = vrot.slane %v4102, 2
    %v4227 = vsel %vm4211, %v4226, %v4225
    %v4228 = vrot.slane %v4174, 1
    %v4229 = vsel %vm4214, %v4228, %v4227
    %4232 = vst [vmem:[#allocation16] sm:$0xff] %v4215
    %4233 = vst [vmem:[#allocation16 + $0x8] sm:$0xff] %v4229
    %v4234 = vld [vmem:[#allocation16] sm:$0xff]
    %v4235 = vld [vmem:[#allocation16 + $0x8] sm:$0xff]
    %v4236 = vlaneseq
    %v4237 = vand.u32 %v4236, 127
    %v4238 = vld [vmem:[#allocation13] sm:$0xff]
    %v4239 = vld [vmem:[#allocation13 + $0x8] sm:$0xff]
    %4240 = vset.pattern.permute.xlu0 0
    %4241 = vperm.xlu0 %4240, %v4238
    %v4242 = vpop.permute.xlu0 %4241
    %4243 = vset.pattern.permute.xlu0 0
    %4244 = vperm.xlu0 %4243, %v4239
    %v4245 = vpop.permute.xlu0 %4244
    %vm4246 = vcmp.lt.s32.totalorder %v4237, %v4242
    %vm4247 = vcmp.lt.s32.totalorder %v4237, %v4245
    %v4248 = vsel %vm4246, %v4234, -1e+30
    %v4249 = vsel %vm4247, %v4235, -1e+30
    %v4250 = vld [vmem:[#allocation14] sm:$0xff]
    %v4251 = vld [vmem:[#allocation14 + $0x8] sm:$0xff]
    %v4252 = vadd.f32 %v4248, %v4250
    %v4253 = vadd.f32 %v4249, %v4251
    %4254 = vmax.xlane.f32.xlu0 %v4252
    %v4255 = vpop.xlane.xlu0 %4254
    %4256 = vmax.xlane.f32.xlu0 %v4253
    %v4257 = vpop.xlane.xlu0 %4256
    %vm4258 = vcmp.eq.f32.partialorder %v4252, %v4255
    %vm4259 = vcmp.eq.f32.partialorder %v4253, %v4257
    %v4260 = vsel %vm4258, %v4237, 128
    %v4261 = vsel %vm4259, %v4237, 128
    %v4262 = vand.u32 %v4260, 65535
    %v4263 = vshra.s32 %v4260, 16
    %v4264 = vcvt.s32.f32 %v4262
    %v4265 = vcvt.s32.f32 %v4263
    %4266 = vmin.xlane.f32.xlu0 %v4265
    %v4267 = vpop.xlane.xlu0 %4266
    %vm4268 = vcmp.eq.f32.partialorder %v4265, %v4267
    %v4269 = vsel %vm4268, %v4264, inf
    %4270 = vmin.xlane.f32.xlu0 %v4269
    %v4271 = vpop.xlane.xlu0 %4270
    %v4272 = vcvt.f32.s32 %v4271
    %v4273 = vcvt.f32.s32 %v4267
    %v4274 = vshll.u32 %v4273, 16
    %v4275 = vadd.s32 %v4274, %v4272
    %v4276 = vand.u32 %v4261, 65535
    %v4277 = vshra.s32 %v4261, 16
    %v4278 = vcvt.s32.f32 %v4276
    %v4279 = vcvt.s32.f32 %v4277
    %4280 = vmin.xlane.f32.xlu0 %v4279
    %v4281 = vpop.xlane.xlu0 %4280
    %vm4282 = vcmp.eq.f32.partialorder %v4279, %v4281
    %v4283 = vsel %vm4282, %v4278, inf
    %4284 = vmin.xlane.f32.xlu0 %v4283
    %v4285 = vpop.xlane.xlu0 %4284
    %v4286 = vcvt.f32.s32 %v4285
    %v4287 = vcvt.f32.s32 %v4281
    %v4288 = vshll.u32 %v4287, 16
    %v4289 = vadd.s32 %v4288, %v4286
    %4290 = vst [vmem:[#allocation17] sm:$0xff] %v4275
    %4291 = vst [vmem:[#allocation17 + $0x8] sm:$0xff] %v4289
    // Predicated region
    $region66: #{tpu_custom_call.1} parent=1 // pred_check
      _
    $region67: #{tpu_custom_call.1} parent=1 // pred_check_branch
      %4293 = sbr.rel (0) target = $region69
    $region68: #{tpu_custom_call.1} parent=1 // pred_region
      %s4295 = ssub.s32 256, 256
      %4296 = vsyncadd [#allocation4], %s4295
      %s4297 = sshll.u32 [#allocation16], 4
      %s4298 = int_to_ptr.vmem [resolvable:$true] %s4297
      %4303 = dma.vmem_to_hbm [thread:$0]  %s4298, 256, %s8, [#allocation4], 128, 128, 8
    $region69: #{tpu_custom_call.1} parent=1 // pred_fallthru
      _
    // Predicated region
    $region70: #{tpu_custom_call.1} parent=1 // pred_check
      _
    $region71: #{tpu_custom_call.1} parent=1 // pred_check_branch
      %4305 = sbr.rel (0) target = $region73
    $region72: #{tpu_custom_call.1} parent=1 // pred_region
      %s4307 = ssub.s32 256, 256
      %4308 = vsyncadd [#allocation18], %s4307
      %s4309 = sshll.u32 [#allocation17], 4
      %s4310 = int_to_ptr.vmem [resolvable:$true] %s4309
      %4315 = dma.vmem_to_hbm [thread:$0]  %s4310, 256, %s9, [#allocation18], 128, 128, 8
    $region73: #{tpu_custom_call.1} parent=1 // pred_fallthru
      _
    // Predicated region
    $region74: #{tpu_custom_call.1} parent=1 // pred_check
      _
    $region75: #{tpu_custom_call.1} parent=1 // pred_check_branch
      %4317 = sbr.rel (0) target = $region77
    $region76: #{tpu_custom_call.1} parent=1 // pred_region
      %4318 = dma.done [#allocation4], 256
    $region77: #{tpu_custom_call.1} parent=1 // pred_fallthru
      _
    // Predicated region
    $region78: #{tpu_custom_call.1} parent=1 // pred_check
      _
    $region79: #{tpu_custom_call.1} parent=1 // pred_check_branch
      %4320 = sbr.rel (0) target = $region81
    $region80: #{tpu_custom_call.1} parent=1 // pred_region
      %4321 = dma.done [#allocation18], 256
    $region81: #{tpu_custom_call.1} parent=1 // pred_fallthru
      _
    %4322 = vsyncpa [#allocation3], 1
    %4323 = vsyncpa [#allocation6], 1
    %4324 = vsyncpa [#allocation9], 1
    %4325 = vsyncpa [#allocation12], 1
    %4326 = vsyncpa [#allocation15], 1
    %4327 = vsyncpa [#allocation4], 1
    %4328 = vsyncpa [#allocation18], 1

</llo_original>
